<compile_context>
chip_gen: v7x
topology: tpu7x:2x2x1
jax: 0.10.0
libtpu: 0.0.40
codegen_flags: <defaults>
</compile_context>

<pallas_src>
import math
import jax
import jax.numpy as jnp
from jax.experimental import pallas as pl
from jax.experimental.pallas import tpu as pltpu

# ------------------------- small synthetic config ---------------------------
NLAYERS = 2
B, L = 2, 16
D_MODEL = 32
HEADS = 4
D_K = 8
D_V = 8
D_FF = 64
MAX_REL = 4                 # args.max_relative_pos[0]
USE_NEG_DIST = True         # args.use_neg_dist
R = 2 * MAX_REL + 1 if USE_NEG_DIST else MAX_REL + 1
EPS = 1e-6
NEG_INF = -1e18

BL = B * L
HDK = HEADS * D_K
HDV = HEADS * D_V
HL = HEADS * L
RH = R * HEADS
RHL = R * HEADS * L
RHLP = ((RHL + 127) // 128) * 128      # rel-pos slab lane width, 128-multiple
SCALE = 1.0 / math.sqrt(D_K)

assert D_K == D_V, "shared head-block mask assumes d_k == d_v"


def _ln(x, g, b):
    mu = jnp.mean(x, axis=-1, keepdims=True)
    var = jnp.mean(jnp.square(x - mu), axis=-1, keepdims=True)
    return (x - mu) * jax.lax.rsqrt(var + EPS) * g + b


# ------------------------------ Pallas kernel -------------------------------
def encoder_kernel(x_ref, padbias_ref, ohflat_ref, expE_ref, foldF_ref,
                   expEr_ref, sumh_ref, expandh_ref, headmask_ref,
                   wqkv_ref, bqkv_ref, relkblk_ref, wcomb_ref, wo_ref, bo_ref,
                   lnp_ref, w1_ref, b1_ref, w2_ref, b2_ref, out_ref):
    f32 = jnp.float32
    bf16 = jnp.bfloat16

    h = x_ref[...].astype(f32)                   # (BL, D) running hidden state

    # ---- layer-invariant operands, read once (hoisted out of layer loop) ----
    padbias = padbias_ref[...]                   # (BL, HL)  additive -1e18 mask
    ohflat = ohflat_ref[...]                     # (BL, RHLP) rel-pos onehot slab
    expE = expE_ref[...]                         # (RH, RHLP) bf16 0/1 expand
    foldF = foldF_ref[...]                       # (RHLP, HL) bf16 0/1 fold
    expEr = expEr_ref[...]                       # (HL, RHLP) bf16 0/1 expand
    sumh = sumh_ref[...]                         # (HL, H)    bf16 segment-sum
    expandh = expandh_ref[...]                   # (H, HL)    bf16 re-expand
    headmask = headmask_ref[...]                 # (HL, HDK)  f32 head block mask

    for lyr in range(NLAYERS):                   # static unroll (NLAYERS small)
        wqkv = wqkv_ref[lyr]                     # (D, 3*H*dk)  bf16 (scale folded)
        bqkv = bqkv_ref[lyr]                     # (1, 3*H*dk)  f32
        relkblk = relkblk_ref[lyr]               # (H*dk, R*H)  bf16 blockdiag
        wcomb = wcomb_ref[lyr]                   # (RHLP, H*dv) bf16 onehot x relv
        wo = wo_ref[lyr]                         # (H*dv, D)    bf16
        bo = bo_ref[lyr]                         # (1, D)       f32
        lnp = lnp_ref[lyr]                       # (4, D) = ln1_g,ln1_b,ln2_g,ln2_b
        w1 = w1_ref[lyr]                         # (D, D_FF)    bf16
        b1 = b1_ref[lyr]                         # (1, D_FF)    f32
        w2 = w2_ref[lyr]                         # (D_FF, D)    bf16
        b2 = b2_ref[lyr]                         # (1, D)       f32

        # ---- fused QKV projection (bf16 operands, f32 accumulation) ----
        hb = h.astype(bf16)
        qkv = jnp.dot(hb, wqkv, preferred_element_type=f32) + bqkv   # (BL, 96)
        q2 = qkv[:, :HDK]                        # already softmax-scaled
        k2 = qkv[:, HDK:2 * HDK]
        v2 = qkv[:, 2 * HDK:2 * HDK + HDV]
        q2b = q2.astype(bf16)

        # ---- rel-pos key bias: expand -> mask -> fold (all-head, lane-dense) --
        qE = jnp.dot(q2b, relkblk, preferred_element_type=f32)       # (BL, RH)
        qE_exp = jnp.dot(qE.astype(bf16), expE,
                         preferred_element_type=f32)                 # (BL, RHLP)
        key_bias = jnp.dot((qE_exp * ohflat).astype(bf16), foldF,
                           preferred_element_type=f32)               # (BL, HL)

        # ---- content scores: one block-diagonal matmul per batch element ----
        s_rows, vblk_list = [], []
        for b in range(B):
            r0 = b * L
            kblk = (jnp.concatenate([k2[r0:r0 + L, :]] * HEADS, axis=0)
                    * headmask).astype(bf16)                         # (HL, HDK)
            vblk = (jnp.concatenate([v2[r0:r0 + L, :]] * HEADS, axis=0)
                    * headmask).astype(bf16)                         # (HL, HDV)
            vblk_list.append(vblk)
            s_rows.append(jnp.einsum('ik,jk->ij', q2b[r0:r0 + L, :], kblk,
                                     preferred_element_type=f32))    # (L, HL)
        scores = jnp.concatenate(s_rows, axis=0) + key_bias + padbias  # (BL, HL)

        # ---- whole-slab softmax (MXU segment sums, EUP reciprocal) ----
        m = jnp.max(scores, axis=-1, keepdims=True)    # per-row const: softmax-safe
        e = jnp.exp(scores - m)                                      # (BL, HL)
        denom = jnp.dot(e.astype(bf16), sumh, preferred_element_type=f32)  # (BL, H)
        rec = pl.reciprocal(denom, approx=True)
        rec_exp = jnp.dot(rec.astype(bf16), expandh,
                          preferred_element_type=f32)                # (BL, HL)
        attn = e * rec_exp
        attn16 = attn.astype(bf16)

        # ---- context (content part), block-diagonal V per batch ----
        c_rows = []
        for b in range(B):
            r0 = b * L
            c_rows.append(jnp.dot(attn16[r0:r0 + L, :], vblk_list[b],
                                  preferred_element_type=f32))       # (L, HDV)
        ctx = jnp.concatenate(c_rows, axis=0)                        # (BL, HDV)

        # ---- rel-pos value term: expand -> mask -> combined matmul ----
        attn_exp = jnp.dot(attn16, expEr, preferred_element_type=f32)  # (BL, RHLP)
        ctx = ctx + jnp.dot((attn_exp * ohflat).astype(bf16), wcomb,
                            preferred_element_type=f32)              # (BL, HDV)

        # ---- fused output projection + residual + LayerNorm (f32) ----
        attn_out = jnp.dot(ctx.astype(bf16), wo, preferred_element_type=f32) + bo
        h1 = _ln(attn_out + h, lnp[0:1, :], lnp[1:2, :])

        # ---- position-wise FFN:  W2 relu(W1 LN(h1) + b1) + b2 + h1 ----
        t = jnp.maximum(
            jnp.dot(_ln(h1, lnp[2:3, :], lnp[3:4, :]).astype(bf16), w1,
                    preferred_element_type=f32) + b1, 0.0)
        h = jnp.dot(t.astype(bf16), w2, preferred_element_type=f32) + b2 + h1

        out_ref[lyr] = h.astype(out_ref.dtype)


# ------------------------------ wrapper --------------------------------------
def _pad_last(a, target):
    pad = target - a.shape[-1]
    if pad == 0:
        return a
    return jnp.pad(a, [(0, 0)] * (a.ndim - 1) + [(0, pad)])


def _constants():
    pos = jnp.arange(L)
    dist = jnp.clip(pos[None, :] - pos[:, None], -MAX_REL, MAX_REL)
    idx = dist + MAX_REL if USE_NEG_DIST else jnp.abs(dist)
    oh = jnp.transpose(jax.nn.one_hot(idx, R, dtype=jnp.float32), (2, 0, 1))  # (R,L,L)

    # ohflat[b*L+i, r*HL + h*L + j] = oh[r, i, j]   (shared across b and h)
    oh_il = jnp.transpose(oh, (1, 0, 2))                               # (L, R, L)
    ohflat = jnp.broadcast_to(oh_il[:, :, None, :],
                              (L, R, HEADS, L)).reshape(L, RHL)
    ohflat = _pad_last(jnp.tile(ohflat, (B, 1)), RHLP)                 # (BL, RHLP)

    # 0/1 expansion / fold matrices (exact in bf16)
    expE = _pad_last(jnp.kron(jnp.eye(RH, dtype=jnp.float32),
                              jnp.ones((1, L), jnp.float32)), RHLP)    # (RH, RHLP)
    eye_hl = jnp.eye(HL, dtype=jnp.float32)
    foldF = jnp.pad(jnp.tile(eye_hl, (R, 1)),
                    ((0, RHLP - RHL), (0, 0)))                         # (RHLP, HL)
    expEr = _pad_last(jnp.tile(eye_hl, (1, R)), RHLP)                  # (HL, RHLP)

    sumh = jnp.kron(jnp.eye(HEADS, dtype=jnp.float32),
                    jnp.ones((L, 1), jnp.float32))                     # (HL, H)
    expandh = sumh.T                                                   # (H, HL)
    headmask = jnp.kron(jnp.eye(HEADS, dtype=jnp.float32),
                        jnp.ones((L, D_K), jnp.float32))               # (HL, HDK)

    bf = jnp.bfloat16
    return (ohflat, expE.astype(bf), foldF.astype(bf), expEr.astype(bf),
            sumh.astype(bf), expandh.astype(bf), headmask)


def _pack_params(p):
    bf = jnp.bfloat16
    eyeh = jnp.eye(HEADS, dtype=jnp.float32)
    # softmax scale folded into Wq / bq
    wq = jnp.transpose(p['wq'], (0, 2, 1, 3)).reshape(NLAYERS, D_MODEL, HDK) * SCALE
    wk = jnp.transpose(p['wk'], (0, 2, 1, 3)).reshape(NLAYERS, D_MODEL, HDK)
    wv = jnp.transpose(p['wv'], (0, 2, 1, 3)).reshape(NLAYERS, D_MODEL, HDV)
    wqkv = jnp.concatenate([wq, wk, wv], axis=-1).astype(bf)          # (NL, D, 96)
    bqkv = jnp.concatenate([p['bq'].reshape(NLAYERS, 1, HDK) * SCALE,
                            p['bk'].reshape(NLAYERS, 1, HDK),
                            p['bv'].reshape(NLAYERS, 1, HDV)], axis=-1)
    # block-diagonal relk^T: relkblk[l, h*dk+d, r*H+h'] = relkT[l,d,r]*delta(h,h')
    relkblk = jnp.einsum('ldr,hk->lhdrk', p['relkT'], eyeh).reshape(
        NLAYERS, HDK, RH).astype(bf)
    # combined onehot-fold x relv: wcomb[l, r*HL+h*L+j, h'*dv+v] = relv[l,r,v]*d(h,h')
    wcomb = jnp.einsum('lrv,hg,j->lrhjgv', p['relv'], eyeh,
                       jnp.ones((L,), jnp.float32)).reshape(NLAYERS, RHL, HDV)
    wcomb = jnp.pad(wcomb, ((0, 0), (0, RHLP - RHL), (0, 0))).astype(bf)
    wo = p['wo'].reshape(NLAYERS, HDV, D_MODEL).astype(bf)
    lnp = jnp.concatenate([p['ln1_g'], p['ln1_b'], p['ln2_g'], p['ln2_b']],
                          axis=1)                                     # (NL, 4, D)
    return (wqkv, bqkv, relkblk, wcomb, wo, p['bo'], lnp,
            p['w1'].astype(bf), p['b1'], p['w2'].astype(bf), p['b2'])


@jax.jit
def gnn_encoder_forward(x, lengths, params):
    Bx, Lx, Dx = x.shape
    pad = (jnp.arange(Lx)[None, :] >= lengths[:, None]).astype(jnp.float32)
    padbias = NEG_INF * jnp.tile(jnp.repeat(pad, Lx, axis=0), (1, HEADS))  # (BL, HL)
    consts = _constants()
    packed = _pack_params(params)
    x2 = x.reshape(Bx * Lx, Dx).astype(jnp.float32)

    n_in = 2 + len(consts) + len(packed)
    vmem_spec = lambda: pl.BlockSpec(memory_space=pltpu.MemorySpace.VMEM)

    # Single invocation, no grid: all packed weights + rel-pos tables are
    # DMA'd into VMEM once; the layer loop runs in-kernel.
    out = pl.pallas_call(
        encoder_kernel,
        out_shape=jax.ShapeDtypeStruct((NLAYERS, Bx * Lx, Dx), jnp.float32),
        in_specs=[vmem_spec() for _ in range(n_in)],
        out_specs=vmem_spec(),
        compiler_params=pltpu.CompilerParams(vmem_limit_bytes=32 * 1024 * 1024),
        cost_estimate=pl.CostEstimate(flops=22_000_000, transcendentals=5_000,
                                      bytes_accessed=450_000),
    )(x2, padbias, *consts, *packed)

    layer_outputs = out.reshape(NLAYERS, Bx, Lx, Dx)
    memory_bank = layer_outputs[-1]
    return memory_bank, layer_outputs


# ------------------------- deterministic parameters --------------------------
def init_params(key):
    ks = jax.random.split(key, 14)

    def nrm(k, shape, s=0.08):
        return (s * jax.random.normal(k, shape)).astype(jnp.float32)

    ones = lambda shape: jnp.ones(shape, jnp.float32)
    zeros = lambda shape: jnp.zeros(shape, jnp.float32)
    return {
        'wq': nrm(ks[0], (NLAYERS, HEADS, D_MODEL, D_K)),
        'bq': nrm(ks[1], (NLAYERS, HEADS, D_K), 0.01),
        'wk': nrm(ks[2], (NLAYERS, HEADS, D_MODEL, D_K)),
        'bk': nrm(ks[3], (NLAYERS, HEADS, D_K), 0.01),
        'wv': nrm(ks[4], (NLAYERS, HEADS, D_MODEL, D_V)),
        'bv': nrm(ks[5], (NLAYERS, HEADS, D_V), 0.01),
        'wo': nrm(ks[6], (NLAYERS, HEADS, D_V, D_MODEL)),
        'bo': nrm(ks[7], (NLAYERS, 1, D_MODEL), 0.01),
        'relkT': nrm(ks[8], (NLAYERS, D_K, R)),          # rel-pos key emb^T
        'relv': nrm(ks[9], (NLAYERS, R, D_V)),           # rel-pos value emb
        'ln1_g': ones((NLAYERS, 1, D_MODEL)),
        'ln1_b': zeros((NLAYERS, 1, D_MODEL)),
        'ln2_g': ones((NLAYERS, 1, D_MODEL)),
        'ln2_b': zeros((NLAYERS, 1, D_MODEL)),
        'w1': nrm(ks[10], (NLAYERS, D_MODEL, D_FF)),
        'b1': nrm(ks[11], (NLAYERS, 1, D_FF), 0.01),
        'w2': nrm(ks[12], (NLAYERS, D_FF, D_MODEL)),
        'b2': nrm(ks[13], (NLAYERS, 1, D_MODEL), 0.01),
    }


# ------------------------- pure-JAX reference (check) ------------------------
def _softmax(x):
    m = jnp.max(x, axis=-1, keepdims=True)
    e = jnp.exp(x - m)
    return e / jnp.sum(e, axis=-1, keepdims=True)


def reference_forward(x, lengths, p):
    Bx, Lx, Dx = x.shape
    pad = jnp.arange(Lx)[None, :] >= lengths[:, None]
    dist = jnp.clip(jnp.arange(Lx)[None, :] - jnp.arange(Lx)[:, None],
                    -MAX_REL, MAX_REL)
    idx = dist + MAX_REL if USE_NEG_DIST else jnp.abs(dist)
    h = x.astype(jnp.float32)
    outs = []
    for l in range(NLAYERS):
        relk = p['relkT'][l].T
        relv = p['relv'][l]
        rk = relk[idx]                                    # (L, L, d_k)
        rv = relv[idx]                                    # (L, L, d_v)
        q = jnp.einsum('bld,hdk->bhlk', h, p['wq'][l]) + p['bq'][l][None, :, None, :]
        k = jnp.einsum('bld,hdk->bhlk', h, p['wk'][l]) + p['bk'][l][None, :, None, :]
        v = jnp.einsum('bld,hdv->bhlv', h, p['wv'][l]) + p['bv'][l][None, :, None, :]
        q = q / math.sqrt(D_K)
        scores = (jnp.einsum('bhik,bhjk->bhij', q, k)
                  + jnp.einsum('bhik,ijk->bhij', q, rk))
        scores = jnp.where(pad[:, None, None, :], NEG_INF, scores)
        attn = _softmax(scores)
        ctx = (jnp.einsum('bhij,bhjv->bhiv', attn, v)
               + jnp.einsum('bhij,ijv->bhiv', attn, rv))
        a_out = jnp.einsum('bhiv,hvd->bid', ctx, p['wo'][l]) + p['bo'][l][0]
        h1 = _ln(a_out + h, p['ln1_g'][l][0], p['ln1_b'][l][0])
        h_ln2 = _ln(h1, p['ln2_g'][l][0], p['ln2_b'][l][0])
        inter = jax.nn.relu(h_ln2 @ p['w1'][l] + p['b1'][l][0])
        out = inter @ p['w2'][l] + p['b2'][l][0] + h1
        outs.append(out)
        h = out
    return jnp.stack(outs, 0)


if __name__ == "__main__":
    key = jax.random.PRNGKey(0)
    kx, kp = jax.random.split(key)
    x = jax.random.normal(kx, (B, L, D_MODEL), jnp.float32)
    input_len = jnp.array([16, 11], jnp.int32)
    params = init_params(kp)

    memory_bank, layer_outputs = gnn_encoder_forward(x, input_len, params)
    jax.block_until_ready(memory_bank)

    assert memory_bank.shape == (B, L, D_MODEL)
    assert layer_outputs.shape == (NLAYERS, B, L, D_MODEL)

    ref = reference_forward(x, input_len, params)
    # Tolerance covers bf16 MXU operands (f32 accumulation) and the EUP
    # approximate-reciprocal softmax denominator.
    if not jnp.allclose(layer_outputs, ref, atol=2e-2, rtol=2e-2):
        raise SystemExit("kernel/reference mismatch")
    print("KERNEL_OK")
</pallas_src>

<mosaic_0001>
module attributes {stable_mosaic.version = 11 : i64} {
  func.func @encoder_kernel(%arg0: memref<32x32xf32, #tpu.memory_space<vmem>>, %arg1: memref<32x64xf32, #tpu.memory_space<vmem>>, %arg2: memref<32x640xf32, #tpu.memory_space<vmem>>, %arg3: memref<36x640xbf16, #tpu.memory_space<vmem>>, %arg4: memref<640x64xbf16, #tpu.memory_space<vmem>>, %arg5: memref<64x640xbf16, #tpu.memory_space<vmem>>, %arg6: memref<64x4xbf16, #tpu.memory_space<vmem>>, %arg7: memref<4x64xbf16, #tpu.memory_space<vmem>>, %arg8: memref<64x32xf32, #tpu.memory_space<vmem>>, %arg9: memref<2x32x96xbf16, #tpu.memory_space<vmem>>, %arg10: memref<2x1x96xf32, #tpu.memory_space<vmem>>, %arg11: memref<2x32x36xbf16, #tpu.memory_space<vmem>>, %arg12: memref<2x640x32xbf16, #tpu.memory_space<vmem>>, %arg13: memref<2x32x32xbf16, #tpu.memory_space<vmem>>, %arg14: memref<2x1x32xf32, #tpu.memory_space<vmem>>, %arg15: memref<2x4x32xf32, #tpu.memory_space<vmem>>, %arg16: memref<2x32x64xbf16, #tpu.memory_space<vmem>>, %arg17: memref<2x1x64xf32, #tpu.memory_space<vmem>>, %arg18: memref<2x64x32xbf16, #tpu.memory_space<vmem>>, %arg19: memref<2x1x32xf32, #tpu.memory_space<vmem>>, %arg20: memref<2x32x32xf32, #tpu.memory_space<vmem>>) attributes {dimension_semantics = [], scalar_prefetch = 0 : i64, scratch_operands = 0 : i64, tpu.core_type = #tpu.core_type<tc>} {
    %c0 = arith.constant 0 : index
    %c0_0 = arith.constant 0 : index
    %0 = vector.load %arg0[%c0, %c0_0] : memref<32x32xf32, #tpu.memory_space<vmem>>, vector<32x32xf32>
    %c0_1 = arith.constant 0 : index
    %c0_2 = arith.constant 0 : index
    %1 = vector.load %arg1[%c0_1, %c0_2] : memref<32x64xf32, #tpu.memory_space<vmem>>, vector<32x64xf32>
    %c0_3 = arith.constant 0 : index
    %c0_4 = arith.constant 0 : index
    %2 = vector.load %arg2[%c0_3, %c0_4] : memref<32x640xf32, #tpu.memory_space<vmem>>, vector<32x640xf32>
    %c0_5 = arith.constant 0 : index
    %c0_6 = arith.constant 0 : index
    %3 = vector.load %arg3[%c0_5, %c0_6] : memref<36x640xbf16, #tpu.memory_space<vmem>>, vector<36x640xbf16>
    %c0_7 = arith.constant 0 : index
    %c0_8 = arith.constant 0 : index
    %4 = vector.load %arg4[%c0_7, %c0_8] : memref<640x64xbf16, #tpu.memory_space<vmem>>, vector<640x64xbf16>
    %c0_9 = arith.constant 0 : index
    %c0_10 = arith.constant 0 : index
    %5 = vector.load %arg5[%c0_9, %c0_10] : memref<64x640xbf16, #tpu.memory_space<vmem>>, vector<64x640xbf16>
    %c0_11 = arith.constant 0 : index
    %c0_12 = arith.constant 0 : index
    %6 = vector.load %arg6[%c0_11, %c0_12] : memref<64x4xbf16, #tpu.memory_space<vmem>>, vector<64x4xbf16>
    %c0_13 = arith.constant 0 : index
    %c0_14 = arith.constant 0 : index
    %7 = vector.load %arg7[%c0_13, %c0_14] : memref<4x64xbf16, #tpu.memory_space<vmem>>, vector<4x64xbf16>
    %c0_15 = arith.constant 0 : index
    %c0_16 = arith.constant 0 : index
    %8 = vector.load %arg8[%c0_15, %c0_16] : memref<64x32xf32, #tpu.memory_space<vmem>>, vector<64x32xf32>
    %c0_17 = arith.constant 0 : index
    %c0_18 = arith.constant 0 : index
    %c0_19 = arith.constant 0 : index
    %9 = vector.load %arg9[%c0_17, %c0_18, %c0_19] : memref<2x32x96xbf16, #tpu.memory_space<vmem>>, vector<1x32x96xbf16>
    %10 = vector.shape_cast %9 : vector<1x32x96xbf16> to vector<32x96xbf16>
    %c0_20 = arith.constant 0 : index
    %c0_21 = arith.constant 0 : index
    %c0_22 = arith.constant 0 : index
    %11 = vector.load %arg10[%c0_20, %c0_21, %c0_22] : memref<2x1x96xf32, #tpu.memory_space<vmem>>, vector<1x1x96xf32>
    %12 = vector.shape_cast %11 : vector<1x1x96xf32> to vector<1x96xf32>
    %c0_23 = arith.constant 0 : index
    %c0_24 = arith.constant 0 : index
    %c0_25 = arith.constant 0 : index
    %13 = vector.load %arg11[%c0_23, %c0_24, %c0_25] : memref<2x32x36xbf16, #tpu.memory_space<vmem>>, vector<1x32x36xbf16>
    %14 = vector.shape_cast %13 : vector<1x32x36xbf16> to vector<32x36xbf16>
    %c0_26 = arith.constant 0 : index
    %c0_27 = arith.constant 0 : index
    %c0_28 = arith.constant 0 : index
    %15 = vector.load %arg12[%c0_26, %c0_27, %c0_28] : memref<2x640x32xbf16, #tpu.memory_space<vmem>>, vector<1x640x32xbf16>
    %16 = vector.shape_cast %15 : vector<1x640x32xbf16> to vector<640x32xbf16>
    %c0_29 = arith.constant 0 : index
    %c0_30 = arith.constant 0 : index
    %c0_31 = arith.constant 0 : index
    %17 = vector.load %arg13[%c0_29, %c0_30, %c0_31] : memref<2x32x32xbf16, #tpu.memory_space<vmem>>, vector<1x32x32xbf16>
    %18 = vector.shape_cast %17 : vector<1x32x32xbf16> to vector<32x32xbf16>
    %c0_32 = arith.constant 0 : index
    %c0_33 = arith.constant 0 : index
    %c0_34 = arith.constant 0 : index
    %19 = vector.load %arg14[%c0_32, %c0_33, %c0_34] : memref<2x1x32xf32, #tpu.memory_space<vmem>>, vector<1x1x32xf32>
    %20 = vector.shape_cast %19 : vector<1x1x32xf32> to vector<1x32xf32>
    %c0_35 = arith.constant 0 : index
    %c0_36 = arith.constant 0 : index
    %c0_37 = arith.constant 0 : index
    %21 = vector.load %arg15[%c0_35, %c0_36, %c0_37] : memref<2x4x32xf32, #tpu.memory_space<vmem>>, vector<1x4x32xf32>
    %22 = vector.shape_cast %21 : vector<1x4x32xf32> to vector<4x32xf32>
    %c0_38 = arith.constant 0 : index
    %c0_39 = arith.constant 0 : index
    %c0_40 = arith.constant 0 : index
    %23 = vector.load %arg16[%c0_38, %c0_39, %c0_40] : memref<2x32x64xbf16, #tpu.memory_space<vmem>>, vector<1x32x64xbf16>
    %24 = vector.shape_cast %23 : vector<1x32x64xbf16> to vector<32x64xbf16>
    %c0_41 = arith.constant 0 : index
    %c0_42 = arith.constant 0 : index
    %c0_43 = arith.constant 0 : index
    %25 = vector.load %arg17[%c0_41, %c0_42, %c0_43] : memref<2x1x64xf32, #tpu.memory_space<vmem>>, vector<1x1x64xf32>
    %26 = vector.shape_cast %25 : vector<1x1x64xf32> to vector<1x64xf32>
    %c0_44 = arith.constant 0 : index
    %c0_45 = arith.constant 0 : index
    %c0_46 = arith.constant 0 : index
    %27 = vector.load %arg18[%c0_44, %c0_45, %c0_46] : memref<2x64x32xbf16, #tpu.memory_space<vmem>>, vector<1x64x32xbf16>
    %28 = vector.shape_cast %27 : vector<1x64x32xbf16> to vector<64x32xbf16>
    %c0_47 = arith.constant 0 : index
    %c0_48 = arith.constant 0 : index
    %c0_49 = arith.constant 0 : index
    %29 = vector.load %arg19[%c0_47, %c0_48, %c0_49] : memref<2x1x32xf32, #tpu.memory_space<vmem>>, vector<1x1x32xf32>
    %30 = vector.shape_cast %29 : vector<1x1x32xf32> to vector<1x32xf32>
    %31 = arith.truncf %0 : vector<32x32xf32> to vector<32x32xbf16>
    %cst = arith.constant dense<0.000000e+00> : vector<32x96xf32>
    %32 = tpu.matmul %31, %10, %cst {dimension_numbers = #tpu.dot_dimension_numbers<[1], [0], [0], [1], [0, 0, 1, 1], [], []>} : vector<32x32xbf16>, vector<32x96xbf16>, vector<32x96xf32> -> vector<32x96xf32>
    %33 = vector.broadcast %12 : vector<1x96xf32> to vector<32x96xf32>
    %34 = arith.addf %32, %33 : vector<32x96xf32>
    %35 = vector.extract_strided_slice %34 {offsets = [0, 0], sizes = [32, 32], strides = [1, 1]} : vector<32x96xf32> to vector<32x32xf32>
    %36 = vector.extract_strided_slice %34 {offsets = [0, 32], sizes = [32, 32], strides = [1, 1]} : vector<32x96xf32> to vector<32x32xf32>
    %37 = vector.extract_strided_slice %34 {offsets = [0, 64], sizes = [32, 32], strides = [1, 1]} : vector<32x96xf32> to vector<32x32xf32>
    %38 = arith.truncf %35 : vector<32x32xf32> to vector<32x32xbf16>
    %cst_50 = arith.constant dense<0.000000e+00> : vector<32x36xf32>
    %39 = tpu.matmul %38, %14, %cst_50 {dimension_numbers = #tpu.dot_dimension_numbers<[1], [0], [0], [1], [0, 0, 1, 1], [], []>} : vector<32x32xbf16>, vector<32x36xbf16>, vector<32x36xf32> -> vector<32x36xf32>
    %40 = arith.truncf %39 : vector<32x36xf32> to vector<32x36xbf16>
    %cst_51 = arith.constant dense<0.000000e+00> : vector<32x640xf32>
    %41 = tpu.matmul %40, %3, %cst_51 {dimension_numbers = #tpu.dot_dimension_numbers<[1], [0], [0], [1], [0, 0, 1, 1], [], []>} : vector<32x36xbf16>, vector<36x640xbf16>, vector<32x640xf32> -> vector<32x640xf32>
    %42 = arith.mulf %41, %2 : vector<32x640xf32>
    %43 = arith.truncf %42 : vector<32x640xf32> to vector<32x640xbf16>
    %cst_52 = arith.constant dense<0.000000e+00> : vector<32x64xf32>
    %44 = tpu.matmul %43, %4, %cst_52 {dimension_numbers = #tpu.dot_dimension_numbers<[1], [0], [0], [1], [0, 0, 1, 1], [], []>} : vector<32x640xbf16>, vector<640x64xbf16>, vector<32x64xf32> -> vector<32x64xf32>
    %45 = vector.extract_strided_slice %36 {offsets = [0, 0], sizes = [16, 32], strides = [1, 1]} : vector<32x32xf32> to vector<16x32xf32>
    %46 = tpu.concatenate %45, %45, %45, %45 in 0 : vector<16x32xf32>, vector<16x32xf32>, vector<16x32xf32>, vector<16x32xf32> -> vector<64x32xf32>
    %47 = arith.mulf %46, %8 : vector<64x32xf32>
    %48 = arith.truncf %47 : vector<64x32xf32> to vector<64x32xbf16>
    %49 = vector.extract_strided_slice %37 {offsets = [0, 0], sizes = [16, 32], strides = [1, 1]} : vector<32x32xf32> to vector<16x32xf32>
    %50 = tpu.concatenate %49, %49, %49, %49 in 0 : vector<16x32xf32>, vector<16x32xf32>, vector<16x32xf32>, vector<16x32xf32> -> vector<64x32xf32>
    %51 = arith.mulf %50, %8 : vector<64x32xf32>
    %52 = arith.truncf %51 : vector<64x32xf32> to vector<64x32xbf16>
    %53 = vector.extract_strided_slice %38 {offsets = [0, 0], sizes = [16, 32], strides = [1, 1]} : vector<32x32xbf16> to vector<16x32xbf16>
    "tpu.trace_start"() <{level = 10 : i32, message = "ik,jk->ij"}> : () -> ()
    %cst_53 = arith.constant dense<0.000000e+00> : vector<16x64xf32>
    %54 = tpu.matmul %53, %48, %cst_53 {dimension_numbers = #tpu.dot_dimension_numbers<[1], [1], [0], [0], [0, 0, 1, 0], [], []>} : vector<16x32xbf16>, vector<64x32xbf16>, vector<16x64xf32> -> vector<16x64xf32>
    "tpu.trace_stop"() : () -> ()
    %55 = vector.extract_strided_slice %36 {offsets = [16, 0], sizes = [16, 32], strides = [1, 1]} : vector<32x32xf32> to vector<16x32xf32>
    %56 = tpu.concatenate %55, %55, %55, %55 in 0 : vector<16x32xf32>, vector<16x32xf32>, vector<16x32xf32>, vector<16x32xf32> -> vector<64x32xf32>
    %57 = arith.mulf %56, %8 : vector<64x32xf32>
    %58 = arith.truncf %57 : vector<64x32xf32> to vector<64x32xbf16>
    %59 = vector.extract_strided_slice %37 {offsets = [16, 0], sizes = [16, 32], strides = [1, 1]} : vector<32x32xf32> to vector<16x32xf32>
    %60 = tpu.concatenate %59, %59, %59, %59 in 0 : vector<16x32xf32>, vector<16x32xf32>, vector<16x32xf32>, vector<16x32xf32> -> vector<64x32xf32>
    %61 = arith.mulf %60, %8 : vector<64x32xf32>
    %62 = arith.truncf %61 : vector<64x32xf32> to vector<64x32xbf16>
    %63 = vector.extract_strided_slice %38 {offsets = [16, 0], sizes = [16, 32], strides = [1, 1]} : vector<32x32xbf16> to vector<16x32xbf16>
    "tpu.trace_start"() <{level = 10 : i32, message = "ik,jk->ij"}> : () -> ()
    %cst_54 = arith.constant dense<0.000000e+00> : vector<16x64xf32>
    %64 = tpu.matmul %63, %58, %cst_54 {dimension_numbers = #tpu.dot_dimension_numbers<[1], [1], [0], [0], [0, 0, 1, 0], [], []>} : vector<16x32xbf16>, vector<64x32xbf16>, vector<16x64xf32> -> vector<16x64xf32>
    "tpu.trace_stop"() : () -> ()
    %65 = tpu.concatenate %54, %64 in 0 : vector<16x64xf32>, vector<16x64xf32> -> vector<32x64xf32>
    %66 = arith.addf %65, %44 : vector<32x64xf32>
    %67 = arith.addf %66, %1 : vector<32x64xf32>
    %cst_55 = arith.constant dense<0xFF800000> : vector<32xf32>
    %68 = vector.multi_reduction <maximumf>, %67, %cst_55 [1] : vector<32x64xf32> to vector<32xf32>
    %69 = vector.shape_cast %68 : vector<32xf32> to vector<32x1xf32>
    %70 = vector.broadcast %69 : vector<32x1xf32> to vector<32x64xf32>
    %71 = arith.subf %67, %70 : vector<32x64xf32>
    %72 = math.exp %71 : vector<32x64xf32>
    %73 = arith.truncf %72 : vector<32x64xf32> to vector<32x64xbf16>
    %cst_56 = arith.constant dense<0.000000e+00> : vector<32x4xf32>
    %74 = tpu.matmul %73, %6, %cst_56 {dimension_numbers = #tpu.dot_dimension_numbers<[1], [0], [0], [1], [0, 0, 1, 1], [], []>} : vector<32x64xbf16>, vector<64x4xbf16>, vector<32x4xf32> -> vector<32x4xf32>
    %75 = tpu.reciprocal %74 {approx = true} : vector<32x4xf32> -> vector<32x4xf32>
    %76 = arith.truncf %75 : vector<32x4xf32> to vector<32x4xbf16>
    %cst_57 = arith.constant dense<0.000000e+00> : vector<32x64xf32>
    %77 = tpu.matmul %76, %7, %cst_57 {dimension_numbers = #tpu.dot_dimension_numbers<[1], [0], [0], [1], [0, 0, 1, 1], [], []>} : vector<32x4xbf16>, vector<4x64xbf16>, vector<32x64xf32> -> vector<32x64xf32>
    %78 = arith.mulf %72, %77 : vector<32x64xf32>
    %79 = arith.truncf %78 : vector<32x64xf32> to vector<32x64xbf16>
    %80 = vector.extract_strided_slice %79 {offsets = [0, 0], sizes = [16, 64], strides = [1, 1]} : vector<32x64xbf16> to vector<16x64xbf16>
    %cst_58 = arith.constant dense<0.000000e+00> : vector<16x32xf32>
    %81 = tpu.matmul %80, %52, %cst_58 {dimension_numbers = #tpu.dot_dimension_numbers<[1], [0], [0], [1], [0, 0, 1, 1], [], []>} : vector<16x64xbf16>, vector<64x32xbf16>, vector<16x32xf32> -> vector<16x32xf32>
    %82 = vector.extract_strided_slice %79 {offsets = [16, 0], sizes = [16, 64], strides = [1, 1]} : vector<32x64xbf16> to vector<16x64xbf16>
    %cst_59 = arith.constant dense<0.000000e+00> : vector<16x32xf32>
    %83 = tpu.matmul %82, %62, %cst_59 {dimension_numbers = #tpu.dot_dimension_numbers<[1], [0], [0], [1], [0, 0, 1, 1], [], []>} : vector<16x64xbf16>, vector<64x32xbf16>, vector<16x32xf32> -> vector<16x32xf32>
    %84 = tpu.concatenate %81, %83 in 0 : vector<16x32xf32>, vector<16x32xf32> -> vector<32x32xf32>
    %cst_60 = arith.constant dense<0.000000e+00> : vector<32x640xf32>
    %85 = tpu.matmul %79, %5, %cst_60 {dimension_numbers = #tpu.dot_dimension_numbers<[1], [0], [0], [1], [0, 0, 1, 1], [], []>} : vector<32x64xbf16>, vector<64x640xbf16>, vector<32x640xf32> -> vector<32x640xf32>
    %86 = arith.mulf %85, %2 : vector<32x640xf32>
    %87 = arith.truncf %86 : vector<32x640xf32> to vector<32x640xbf16>
    %cst_61 = arith.constant dense<0.000000e+00> : vector<32x32xf32>
    %88 = tpu.matmul %87, %16, %cst_61 {dimension_numbers = #tpu.dot_dimension_numbers<[1], [0], [0], [1], [0, 0, 1, 1], [], []>} : vector<32x640xbf16>, vector<640x32xbf16>, vector<32x32xf32> -> vector<32x32xf32>
    %89 = arith.addf %84, %88 : vector<32x32xf32>
    %90 = arith.truncf %89 : vector<32x32xf32> to vector<32x32xbf16>
    %cst_62 = arith.constant dense<0.000000e+00> : vector<32x32xf32>
    %91 = tpu.matmul %90, %18, %cst_62 {dimension_numbers = #tpu.dot_dimension_numbers<[1], [0], [0], [1], [0, 0, 1, 1], [], []>} : vector<32x32xbf16>, vector<32x32xbf16>, vector<32x32xf32> -> vector<32x32xf32>
    %92 = vector.broadcast %20 : vector<1x32xf32> to vector<32x32xf32>
    %93 = arith.addf %91, %92 : vector<32x32xf32>
    %94 = arith.addf %93, %0 : vector<32x32xf32>
    %95 = vector.extract_strided_slice %22 {offsets = [0, 0], sizes = [1, 32], strides = [1, 1]} : vector<4x32xf32> to vector<1x32xf32>
    %96 = vector.extract_strided_slice %22 {offsets = [1, 0], sizes = [1, 32], strides = [1, 1]} : vector<4x32xf32> to vector<1x32xf32>
    %cst_63 = arith.constant dense<0.000000e+00> : vector<32xf32>
    %97 = vector.multi_reduction <add>, %94, %cst_63 [1] : vector<32x32xf32> to vector<32xf32>
    %98 = vector.shape_cast %97 : vector<32xf32> to vector<32x1xf32>
    %cst_64 = arith.constant 3.200000e+01 : f32
    %99 = vector.broadcast %cst_64 : f32 to vector<32x1xf32>
    %100 = arith.divf %98, %99 : vector<32x1xf32>
    %101 = vector.broadcast %100 : vector<32x1xf32> to vector<32x32xf32>
    %102 = arith.subf %94, %101 : vector<32x32xf32>
    %103 = arith.mulf %102, %102 : vector<32x32xf32>
    %cst_65 = arith.constant dense<0.000000e+00> : vector<32xf32>
    %104 = vector.multi_reduction <add>, %103, %cst_65 [1] : vector<32x32xf32> to vector<32xf32>
    %105 = vector.shape_cast %104 : vector<32xf32> to vector<32x1xf32>
    %cst_66 = arith.constant 3.200000e+01 : f32
    %106 = vector.broadcast %cst_66 : f32 to vector<32x1xf32>
    %107 = arith.divf %105, %106 : vector<32x1xf32>
    %108 = vector.broadcast %100 : vector<32x1xf32> to vector<32x32xf32>
    %109 = arith.subf %94, %108 : vector<32x32xf32>
    %cst_67 = arith.constant 9.99999997E-7 : f32
    %110 = vector.broadcast %cst_67 : f32 to vector<32x1xf32>
    %111 = arith.addf %107, %110 : vector<32x1xf32>
    %112 = math.rsqrt %111 : vector<32x1xf32>
    %113 = vector.broadcast %112 : vector<32x1xf32> to vector<32x32xf32>
    %114 = arith.mulf %109, %113 : vector<32x32xf32>
    %115 = vector.broadcast %95 : vector<1x32xf32> to vector<32x32xf32>
    %116 = arith.mulf %114, %115 : vector<32x32xf32>
    %117 = vector.broadcast %96 : vector<1x32xf32> to vector<32x32xf32>
    %118 = arith.addf %116, %117 : vector<32x32xf32>
    %119 = vector.extract_strided_slice %22 {offsets = [2, 0], sizes = [1, 32], strides = [1, 1]} : vector<4x32xf32> to vector<1x32xf32>
    %120 = vector.extract_strided_slice %22 {offsets = [3, 0], sizes = [1, 32], strides = [1, 1]} : vector<4x32xf32> to vector<1x32xf32>
    %cst_68 = arith.constant dense<0.000000e+00> : vector<32xf32>
    %121 = vector.multi_reduction <add>, %118, %cst_68 [1] : vector<32x32xf32> to vector<32xf32>
    %122 = vector.shape_cast %121 : vector<32xf32> to vector<32x1xf32>
    %cst_69 = arith.constant 3.200000e+01 : f32
    %123 = vector.broadcast %cst_69 : f32 to vector<32x1xf32>
    %124 = arith.divf %122, %123 : vector<32x1xf32>
    %125 = vector.broadcast %124 : vector<32x1xf32> to vector<32x32xf32>
    %126 = arith.subf %118, %125 : vector<32x32xf32>
    %127 = arith.mulf %126, %126 : vector<32x32xf32>
    %cst_70 = arith.constant dense<0.000000e+00> : vector<32xf32>
    %128 = vector.multi_reduction <add>, %127, %cst_70 [1] : vector<32x32xf32> to vector<32xf32>
    %129 = vector.shape_cast %128 : vector<32xf32> to vector<32x1xf32>
    %cst_71 = arith.constant 3.200000e+01 : f32
    %130 = vector.broadcast %cst_71 : f32 to vector<32x1xf32>
    %131 = arith.divf %129, %130 : vector<32x1xf32>
    %132 = vector.broadcast %124 : vector<32x1xf32> to vector<32x32xf32>
    %133 = arith.subf %118, %132 : vector<32x32xf32>
    %cst_72 = arith.constant 9.99999997E-7 : f32
    %134 = vector.broadcast %cst_72 : f32 to vector<32x1xf32>
    %135 = arith.addf %131, %134 : vector<32x1xf32>
    %136 = math.rsqrt %135 : vector<32x1xf32>
    %137 = vector.broadcast %136 : vector<32x1xf32> to vector<32x32xf32>
    %138 = arith.mulf %133, %137 : vector<32x32xf32>
    %139 = vector.broadcast %119 : vector<1x32xf32> to vector<32x32xf32>
    %140 = arith.mulf %138, %139 : vector<32x32xf32>
    %141 = vector.broadcast %120 : vector<1x32xf32> to vector<32x32xf32>
    %142 = arith.addf %140, %141 : vector<32x32xf32>
    %143 = arith.truncf %142 : vector<32x32xf32> to vector<32x32xbf16>
    %cst_73 = arith.constant dense<0.000000e+00> : vector<32x64xf32>
    %144 = tpu.matmul %143, %24, %cst_73 {dimension_numbers = #tpu.dot_dimension_numbers<[1], [0], [0], [1], [0, 0, 1, 1], [], []>} : vector<32x32xbf16>, vector<32x64xbf16>, vector<32x64xf32> -> vector<32x64xf32>
    %145 = vector.broadcast %26 : vector<1x64xf32> to vector<32x64xf32>
    %146 = arith.addf %144, %145 : vector<32x64xf32>
    %cst_74 = arith.constant 0.000000e+00 : f32
    %147 = vector.broadcast %cst_74 : f32 to vector<32x64xf32>
    %148 = arith.maximumf %146, %147 : vector<32x64xf32>
    %149 = arith.truncf %148 : vector<32x64xf32> to vector<32x64xbf16>
    %cst_75 = arith.constant dense<0.000000e+00> : vector<32x32xf32>
    %150 = tpu.matmul %149, %28, %cst_75 {dimension_numbers = #tpu.dot_dimension_numbers<[1], [0], [0], [1], [0, 0, 1, 1], [], []>} : vector<32x64xbf16>, vector<64x32xbf16>, vector<32x32xf32> -> vector<32x32xf32>
    %151 = vector.broadcast %30 : vector<1x32xf32> to vector<32x32xf32>
    %152 = arith.addf %150, %151 : vector<32x32xf32>
    %153 = arith.addf %152, %118 : vector<32x32xf32>
    %c0_76 = arith.constant 0 : index
    %c0_77 = arith.constant 0 : index
    %c0_78 = arith.constant 0 : index
    %154 = vector.load %arg20[%c0_76, %c0_77, %c0_78] : memref<2x32x32xf32, #tpu.memory_space<vmem>>, vector<1x32x32xf32>
    %155 = vector.shape_cast %154 : vector<1x32x32xf32> to vector<32x32xf32>
    %156 = vector.shape_cast %153 : vector<32x32xf32> to vector<1x32x32xf32>
    tpu.vector_store %arg20[%c0_76, %c0_77, %c0_78], %156 {strides = array<i32>} : memref<2x32x32xf32, #tpu.memory_space<vmem>>, vector<1x32x32xf32>,
    %c1 = arith.constant 1 : index
    %c0_79 = arith.constant 0 : index
    %c0_80 = arith.constant 0 : index
    %157 = vector.load %arg9[%c1, %c0_79, %c0_80] : memref<2x32x96xbf16, #tpu.memory_space<vmem>>, vector<1x32x96xbf16>
    %158 = vector.shape_cast %157 : vector<1x32x96xbf16> to vector<32x96xbf16>
    %c1_81 = arith.constant 1 : index
    %c0_82 = arith.constant 0 : index
    %c0_83 = arith.constant 0 : index
    %159 = vector.load %arg10[%c1_81, %c0_82, %c0_83] : memref<2x1x96xf32, #tpu.memory_space<vmem>>, vector<1x1x96xf32>
    %160 = vector.shape_cast %159 : vector<1x1x96xf32> to vector<1x96xf32>
    %c1_84 = arith.constant 1 : index
    %c0_85 = arith.constant 0 : index
    %c0_86 = arith.constant 0 : index
    %161 = vector.load %arg11[%c1_84, %c0_85, %c0_86] : memref<2x32x36xbf16, #tpu.memory_space<vmem>>, vector<1x32x36xbf16>
    %162 = vector.shape_cast %161 : vector<1x32x36xbf16> to vector<32x36xbf16>
    %c1_87 = arith.constant 1 : index
    %c0_88 = arith.constant 0 : index
    %c0_89 = arith.constant 0 : index
    %163 = vector.load %arg12[%c1_87, %c0_88, %c0_89] : memref<2x640x32xbf16, #tpu.memory_space<vmem>>, vector<1x640x32xbf16>
    %164 = vector.shape_cast %163 : vector<1x640x32xbf16> to vector<640x32xbf16>
    %c1_90 = arith.constant 1 : index
    %c0_91 = arith.constant 0 : index
    %c0_92 = arith.constant 0 : index
    %165 = vector.load %arg13[%c1_90, %c0_91, %c0_92] : memref<2x32x32xbf16, #tpu.memory_space<vmem>>, vector<1x32x32xbf16>
    %166 = vector.shape_cast %165 : vector<1x32x32xbf16> to vector<32x32xbf16>
    %c1_93 = arith.constant 1 : index
    %c0_94 = arith.constant 0 : index
    %c0_95 = arith.constant 0 : index
    %167 = vector.load %arg14[%c1_93, %c0_94, %c0_95] : memref<2x1x32xf32, #tpu.memory_space<vmem>>, vector<1x1x32xf32>
    %168 = vector.shape_cast %167 : vector<1x1x32xf32> to vector<1x32xf32>
    %c1_96 = arith.constant 1 : index
    %c0_97 = arith.constant 0 : index
    %c0_98 = arith.constant 0 : index
    %169 = vector.load %arg15[%c1_96, %c0_97, %c0_98] : memref<2x4x32xf32, #tpu.memory_space<vmem>>, vector<1x4x32xf32>
    %170 = vector.shape_cast %169 : vector<1x4x32xf32> to vector<4x32xf32>
    %c1_99 = arith.constant 1 : index
    %c0_100 = arith.constant 0 : index
    %c0_101 = arith.constant 0 : index
    %171 = vector.load %arg16[%c1_99, %c0_100, %c0_101] : memref<2x32x64xbf16, #tpu.memory_space<vmem>>, vector<1x32x64xbf16>
    %172 = vector.shape_cast %171 : vector<1x32x64xbf16> to vector<32x64xbf16>
    %c1_102 = arith.constant 1 : index
    %c0_103 = arith.constant 0 : index
    %c0_104 = arith.constant 0 : index
    %173 = vector.load %arg17[%c1_102, %c0_103, %c0_104] : memref<2x1x64xf32, #tpu.memory_space<vmem>>, vector<1x1x64xf32>
    %174 = vector.shape_cast %173 : vector<1x1x64xf32> to vector<1x64xf32>
    %c1_105 = arith.constant 1 : index
    %c0_106 = arith.constant 0 : index
    %c0_107 = arith.constant 0 : index
    %175 = vector.load %arg18[%c1_105, %c0_106, %c0_107] : memref<2x64x32xbf16, #tpu.memory_space<vmem>>, vector<1x64x32xbf16>
    %176 = vector.shape_cast %175 : vector<1x64x32xbf16> to vector<64x32xbf16>
    %c1_108 = arith.constant 1 : index
    %c0_109 = arith.constant 0 : index
    %c0_110 = arith.constant 0 : index
    %177 = vector.load %arg19[%c1_108, %c0_109, %c0_110] : memref<2x1x32xf32, #tpu.memory_space<vmem>>, vector<1x1x32xf32>
    %178 = vector.shape_cast %177 : vector<1x1x32xf32> to vector<1x32xf32>
    %179 = arith.truncf %153 : vector<32x32xf32> to vector<32x32xbf16>
    %cst_111 = arith.constant dense<0.000000e+00> : vector<32x96xf32>
    %180 = tpu.matmul %179, %158, %cst_111 {dimension_numbers = #tpu.dot_dimension_numbers<[1], [0], [0], [1], [0, 0, 1, 1], [], []>} : vector<32x32xbf16>, vector<32x96xbf16>, vector<32x96xf32> -> vector<32x96xf32>
    %181 = vector.broadcast %160 : vector<1x96xf32> to vector<32x96xf32>
    %182 = arith.addf %180, %181 : vector<32x96xf32>
    %183 = vector.extract_strided_slice %182 {offsets = [0, 0], sizes = [32, 32], strides = [1, 1]} : vector<32x96xf32> to vector<32x32xf32>
    %184 = vector.extract_strided_slice %182 {offsets = [0, 32], sizes = [32, 32], strides = [1, 1]} : vector<32x96xf32> to vector<32x32xf32>
    %185 = vector.extract_strided_slice %182 {offsets = [0, 64], sizes = [32, 32], strides = [1, 1]} : vector<32x96xf32> to vector<32x32xf32>
    %186 = arith.truncf %183 : vector<32x32xf32> to vector<32x32xbf16>
    %cst_112 = arith.constant dense<0.000000e+00> : vector<32x36xf32>
    %187 = tpu.matmul %186, %162, %cst_112 {dimension_numbers = #tpu.dot_dimension_numbers<[1], [0], [0], [1], [0, 0, 1, 1], [], []>} : vector<32x32xbf16>, vector<32x36xbf16>, vector<32x36xf32> -> vector<32x36xf32>
    %188 = arith.truncf %187 : vector<32x36xf32> to vector<32x36xbf16>
    %cst_113 = arith.constant dense<0.000000e+00> : vector<32x640xf32>
    %189 = tpu.matmul %188, %3, %cst_113 {dimension_numbers = #tpu.dot_dimension_numbers<[1], [0], [0], [1], [0, 0, 1, 1], [], []>} : vector<32x36xbf16>, vector<36x640xbf16>, vector<32x640xf32> -> vector<32x640xf32>
    %190 = arith.mulf %189, %2 : vector<32x640xf32>
    %191 = arith.truncf %190 : vector<32x640xf32> to vector<32x640xbf16>
    %cst_114 = arith.constant dense<0.000000e+00> : vector<32x64xf32>
    %192 = tpu.matmul %191, %4, %cst_114 {dimension_numbers = #tpu.dot_dimension_numbers<[1], [0], [0], [1], [0, 0, 1, 1], [], []>} : vector<32x640xbf16>, vector<640x64xbf16>, vector<32x64xf32> -> vector<32x64xf32>
    %193 = vector.extract_strided_slice %184 {offsets = [0, 0], sizes = [16, 32], strides = [1, 1]} : vector<32x32xf32> to vector<16x32xf32>
    %194 = tpu.concatenate %193, %193, %193, %193 in 0 : vector<16x32xf32>, vector<16x32xf32>, vector<16x32xf32>, vector<16x32xf32> -> vector<64x32xf32>
    %195 = arith.mulf %194, %8 : vector<64x32xf32>
    %196 = arith.truncf %195 : vector<64x32xf32> to vector<64x32xbf16>
    %197 = vector.extract_strided_slice %185 {offsets = [0, 0], sizes = [16, 32], strides = [1, 1]} : vector<32x32xf32> to vector<16x32xf32>
    %198 = tpu.concatenate %197, %197, %197, %197 in 0 : vector<16x32xf32>, vector<16x32xf32>, vector<16x32xf32>, vector<16x32xf32> -> vector<64x32xf32>
    %199 = arith.mulf %198, %8 : vector<64x32xf32>
    %200 = arith.truncf %199 : vector<64x32xf32> to vector<64x32xbf16>
    %201 = vector.extract_strided_slice %186 {offsets = [0, 0], sizes = [16, 32], strides = [1, 1]} : vector<32x32xbf16> to vector<16x32xbf16>
    "tpu.trace_start"() <{level = 10 : i32, message = "ik,jk->ij"}> : () -> ()
    %cst_115 = arith.constant dense<0.000000e+00> : vector<16x64xf32>
    %202 = tpu.matmul %201, %196, %cst_115 {dimension_numbers = #tpu.dot_dimension_numbers<[1], [1], [0], [0], [0, 0, 1, 0], [], []>} : vector<16x32xbf16>, vector<64x32xbf16>, vector<16x64xf32> -> vector<16x64xf32>
    "tpu.trace_stop"() : () -> ()
    %203 = vector.extract_strided_slice %184 {offsets = [16, 0], sizes = [16, 32], strides = [1, 1]} : vector<32x32xf32> to vector<16x32xf32>
    %204 = tpu.concatenate %203, %203, %203, %203 in 0 : vector<16x32xf32>, vector<16x32xf32>, vector<16x32xf32>, vector<16x32xf32> -> vector<64x32xf32>
    %205 = arith.mulf %204, %8 : vector<64x32xf32>
    %206 = arith.truncf %205 : vector<64x32xf32> to vector<64x32xbf16>
    %207 = vector.extract_strided_slice %185 {offsets = [16, 0], sizes = [16, 32], strides = [1, 1]} : vector<32x32xf32> to vector<16x32xf32>
    %208 = tpu.concatenate %207, %207, %207, %207 in 0 : vector<16x32xf32>, vector<16x32xf32>, vector<16x32xf32>, vector<16x32xf32> -> vector<64x32xf32>
    %209 = arith.mulf %208, %8 : vector<64x32xf32>
    %210 = arith.truncf %209 : vector<64x32xf32> to vector<64x32xbf16>
    %211 = vector.extract_strided_slice %186 {offsets = [16, 0], sizes = [16, 32], strides = [1, 1]} : vector<32x32xbf16> to vector<16x32xbf16>
    "tpu.trace_start"() <{level = 10 : i32, message = "ik,jk->ij"}> : () -> ()
    %cst_116 = arith.constant dense<0.000000e+00> : vector<16x64xf32>
    %212 = tpu.matmul %211, %206, %cst_116 {dimension_numbers = #tpu.dot_dimension_numbers<[1], [1], [0], [0], [0, 0, 1, 0], [], []>} : vector<16x32xbf16>, vector<64x32xbf16>, vector<16x64xf32> -> vector<16x64xf32>
    "tpu.trace_stop"() : () -> ()
    %213 = tpu.concatenate %202, %212 in 0 : vector<16x64xf32>, vector<16x64xf32> -> vector<32x64xf32>
    %214 = arith.addf %213, %192 : vector<32x64xf32>
    %215 = arith.addf %214, %1 : vector<32x64xf32>
    %cst_117 = arith.constant dense<0xFF800000> : vector<32xf32>
    %216 = vector.multi_reduction <maximumf>, %215, %cst_117 [1] : vector<32x64xf32> to vector<32xf32>
    %217 = vector.shape_cast %216 : vector<32xf32> to vector<32x1xf32>
    %218 = vector.broadcast %217 : vector<32x1xf32> to vector<32x64xf32>
    %219 = arith.subf %215, %218 : vector<32x64xf32>
    %220 = math.exp %219 : vector<32x64xf32>
    %221 = arith.truncf %220 : vector<32x64xf32> to vector<32x64xbf16>
    %cst_118 = arith.constant dense<0.000000e+00> : vector<32x4xf32>
    %222 = tpu.matmul %221, %6, %cst_118 {dimension_numbers = #tpu.dot_dimension_numbers<[1], [0], [0], [1], [0, 0, 1, 1], [], []>} : vector<32x64xbf16>, vector<64x4xbf16>, vector<32x4xf32> -> vector<32x4xf32>
    %223 = tpu.reciprocal %222 {approx = true} : vector<32x4xf32> -> vector<32x4xf32>
    %224 = arith.truncf %223 : vector<32x4xf32> to vector<32x4xbf16>
    %cst_119 = arith.constant dense<0.000000e+00> : vector<32x64xf32>
    %225 = tpu.matmul %224, %7, %cst_119 {dimension_numbers = #tpu.dot_dimension_numbers<[1], [0], [0], [1], [0, 0, 1, 1], [], []>} : vector<32x4xbf16>, vector<4x64xbf16>, vector<32x64xf32> -> vector<32x64xf32>
    %226 = arith.mulf %220, %225 : vector<32x64xf32>
    %227 = arith.truncf %226 : vector<32x64xf32> to vector<32x64xbf16>
    %228 = vector.extract_strided_slice %227 {offsets = [0, 0], sizes = [16, 64], strides = [1, 1]} : vector<32x64xbf16> to vector<16x64xbf16>
    %cst_120 = arith.constant dense<0.000000e+00> : vector<16x32xf32>
    %229 = tpu.matmul %228, %200, %cst_120 {dimension_numbers = #tpu.dot_dimension_numbers<[1], [0], [0], [1], [0, 0, 1, 1], [], []>} : vector<16x64xbf16>, vector<64x32xbf16>, vector<16x32xf32> -> vector<16x32xf32>
    %230 = vector.extract_strided_slice %227 {offsets = [16, 0], sizes = [16, 64], strides = [1, 1]} : vector<32x64xbf16> to vector<16x64xbf16>
    %cst_121 = arith.constant dense<0.000000e+00> : vector<16x32xf32>
    %231 = tpu.matmul %230, %210, %cst_121 {dimension_numbers = #tpu.dot_dimension_numbers<[1], [0], [0], [1], [0, 0, 1, 1], [], []>} : vector<16x64xbf16>, vector<64x32xbf16>, vector<16x32xf32> -> vector<16x32xf32>
    %232 = tpu.concatenate %229, %231 in 0 : vector<16x32xf32>, vector<16x32xf32> -> vector<32x32xf32>
    %cst_122 = arith.constant dense<0.000000e+00> : vector<32x640xf32>
    %233 = tpu.matmul %227, %5, %cst_122 {dimension_numbers = #tpu.dot_dimension_numbers<[1], [0], [0], [1], [0, 0, 1, 1], [], []>} : vector<32x64xbf16>, vector<64x640xbf16>, vector<32x640xf32> -> vector<32x640xf32>
    %234 = arith.mulf %233, %2 : vector<32x640xf32>
    %235 = arith.truncf %234 : vector<32x640xf32> to vector<32x640xbf16>
    %cst_123 = arith.constant dense<0.000000e+00> : vector<32x32xf32>
    %236 = tpu.matmul %235, %164, %cst_123 {dimension_numbers = #tpu.dot_dimension_numbers<[1], [0], [0], [1], [0, 0, 1, 1], [], []>} : vector<32x640xbf16>, vector<640x32xbf16>, vector<32x32xf32> -> vector<32x32xf32>
    %237 = arith.addf %232, %236 : vector<32x32xf32>
    %238 = arith.truncf %237 : vector<32x32xf32> to vector<32x32xbf16>
    %cst_124 = arith.constant dense<0.000000e+00> : vector<32x32xf32>
    %239 = tpu.matmul %238, %166, %cst_124 {dimension_numbers = #tpu.dot_dimension_numbers<[1], [0], [0], [1], [0, 0, 1, 1], [], []>} : vector<32x32xbf16>, vector<32x32xbf16>, vector<32x32xf32> -> vector<32x32xf32>
    %240 = vector.broadcast %168 : vector<1x32xf32> to vector<32x32xf32>
    %241 = arith.addf %239, %240 : vector<32x32xf32>
    %242 = arith.addf %241, %153 : vector<32x32xf32>
    %243 = vector.extract_strided_slice %170 {offsets = [0, 0], sizes = [1, 32], strides = [1, 1]} : vector<4x32xf32> to vector<1x32xf32>
    %244 = vector.extract_strided_slice %170 {offsets = [1, 0], sizes = [1, 32], strides = [1, 1]} : vector<4x32xf32> to vector<1x32xf32>
    %cst_125 = arith.constant dense<0.000000e+00> : vector<32xf32>
    %245 = vector.multi_reduction <add>, %242, %cst_125 [1] : vector<32x32xf32> to vector<32xf32>
    %246 = vector.shape_cast %245 : vector<32xf32> to vector<32x1xf32>
    %cst_126 = arith.constant 3.200000e+01 : f32
    %247 = vector.broadcast %cst_126 : f32 to vector<32x1xf32>
    %248 = arith.divf %246, %247 : vector<32x1xf32>
    %249 = vector.broadcast %248 : vector<32x1xf32> to vector<32x32xf32>
    %250 = arith.subf %242, %249 : vector<32x32xf32>
    %251 = arith.mulf %250, %250 : vector<32x32xf32>
    %cst_127 = arith.constant dense<0.000000e+00> : vector<32xf32>
    %252 = vector.multi_reduction <add>, %251, %cst_127 [1] : vector<32x32xf32> to vector<32xf32>
    %253 = vector.shape_cast %252 : vector<32xf32> to vector<32x1xf32>
    %cst_128 = arith.constant 3.200000e+01 : f32
    %254 = vector.broadcast %cst_128 : f32 to vector<32x1xf32>
    %255 = arith.divf %253, %254 : vector<32x1xf32>
    %256 = vector.broadcast %248 : vector<32x1xf32> to vector<32x32xf32>
    %257 = arith.subf %242, %256 : vector<32x32xf32>
    %cst_129 = arith.constant 9.99999997E-7 : f32
    %258 = vector.broadcast %cst_129 : f32 to vector<32x1xf32>
    %259 = arith.addf %255, %258 : vector<32x1xf32>
    %260 = math.rsqrt %259 : vector<32x1xf32>
    %261 = vector.broadcast %260 : vector<32x1xf32> to vector<32x32xf32>
    %262 = arith.mulf %257, %261 : vector<32x32xf32>
    %263 = vector.broadcast %243 : vector<1x32xf32> to vector<32x32xf32>
    %264 = arith.mulf %262, %263 : vector<32x32xf32>
    %265 = vector.broadcast %244 : vector<1x32xf32> to vector<32x32xf32>
    %266 = arith.addf %264, %265 : vector<32x32xf32>
    %267 = vector.extract_strided_slice %170 {offsets = [2, 0], sizes = [1, 32], strides = [1, 1]} : vector<4x32xf32> to vector<1x32xf32>
    %268 = vector.extract_strided_slice %170 {offsets = [3, 0], sizes = [1, 32], strides = [1, 1]} : vector<4x32xf32> to vector<1x32xf32>
    %cst_130 = arith.constant dense<0.000000e+00> : vector<32xf32>
    %269 = vector.multi_reduction <add>, %266, %cst_130 [1] : vector<32x32xf32> to vector<32xf32>
    %270 = vector.shape_cast %269 : vector<32xf32> to vector<32x1xf32>
    %cst_131 = arith.constant 3.200000e+01 : f32
    %271 = vector.broadcast %cst_131 : f32 to vector<32x1xf32>
    %272 = arith.divf %270, %271 : vector<32x1xf32>
    %273 = vector.broadcast %272 : vector<32x1xf32> to vector<32x32xf32>
    %274 = arith.subf %266, %273 : vector<32x32xf32>
    %275 = arith.mulf %274, %274 : vector<32x32xf32>
    %cst_132 = arith.constant dense<0.000000e+00> : vector<32xf32>
    %276 = vector.multi_reduction <add>, %275, %cst_132 [1] : vector<32x32xf32> to vector<32xf32>
    %277 = vector.shape_cast %276 : vector<32xf32> to vector<32x1xf32>
    %cst_133 = arith.constant 3.200000e+01 : f32
    %278 = vector.broadcast %cst_133 : f32 to vector<32x1xf32>
    %279 = arith.divf %277, %278 : vector<32x1xf32>
    %280 = vector.broadcast %272 : vector<32x1xf32> to vector<32x32xf32>
    %281 = arith.subf %266, %280 : vector<32x32xf32>
    %cst_134 = arith.constant 9.99999997E-7 : f32
    %282 = vector.broadcast %cst_134 : f32 to vector<32x1xf32>
    %283 = arith.addf %279, %282 : vector<32x1xf32>
    %284 = math.rsqrt %283 : vector<32x1xf32>
    %285 = vector.broadcast %284 : vector<32x1xf32> to vector<32x32xf32>
    %286 = arith.mulf %281, %285 : vector<32x32xf32>
    %287 = vector.broadcast %267 : vector<1x32xf32> to vector<32x32xf32>
    %288 = arith.mulf %286, %287 : vector<32x32xf32>
    %289 = vector.broadcast %268 : vector<1x32xf32> to vector<32x32xf32>
    %290 = arith.addf %288, %289 : vector<32x32xf32>
    %291 = arith.truncf %290 : vector<32x32xf32> to vector<32x32xbf16>
    %cst_135 = arith.constant dense<0.000000e+00> : vector<32x64xf32>
    %292 = tpu.matmul %291, %172, %cst_135 {dimension_numbers = #tpu.dot_dimension_numbers<[1], [0], [0], [1], [0, 0, 1, 1], [], []>} : vector<32x32xbf16>, vector<32x64xbf16>, vector<32x64xf32> -> vector<32x64xf32>
    %293 = vector.broadcast %174 : vector<1x64xf32> to vector<32x64xf32>
    %294 = arith.addf %292, %293 : vector<32x64xf32>
    %cst_136 = arith.constant 0.000000e+00 : f32
    %295 = vector.broadcast %cst_136 : f32 to vector<32x64xf32>
    %296 = arith.maximumf %294, %295 : vector<32x64xf32>
    %297 = arith.truncf %296 : vector<32x64xf32> to vector<32x64xbf16>
    %cst_137 = arith.constant dense<0.000000e+00> : vector<32x32xf32>
    %298 = tpu.matmul %297, %176, %cst_137 {dimension_numbers = #tpu.dot_dimension_numbers<[1], [0], [0], [1], [0, 0, 1, 1], [], []>} : vector<32x64xbf16>, vector<64x32xbf16>, vector<32x32xf32> -> vector<32x32xf32>
    %299 = vector.broadcast %178 : vector<1x32xf32> to vector<32x32xf32>
    %300 = arith.addf %298, %299 : vector<32x32xf32>
    %301 = arith.addf %300, %266 : vector<32x32xf32>
    %c1_138 = arith.constant 1 : index
    %c0_139 = arith.constant 0 : index
    %c0_140 = arith.constant 0 : index
    %302 = vector.load %arg20[%c1_138, %c0_139, %c0_140] : memref<2x32x32xf32, #tpu.memory_space<vmem>>, vector<1x32x32xf32>
    %303 = vector.shape_cast %302 : vector<1x32x32xf32> to vector<32x32xf32>
    %304 = vector.shape_cast %301 : vector<32x32xf32> to vector<1x32x32xf32>
    tpu.vector_store %arg20[%c1_138, %c0_139, %c0_140], %304 {strides = array<i32>} : memref<2x32x32xf32, #tpu.memory_space<vmem>>, vector<1x32x32xf32>,
    return
  }
}

</mosaic_0001>

<llo_original>
// kernel: gnn_encoder_forward.1
$region0: #{gnn_encoder_forward.1}
  #allocation0 [shape = 'u32[]', space=smem, size = 0x4, offset = 0x4, fixed_abs, tag = 'smem constant byte address 0x4 - core index']
  #allocation1 [shape = 'u32[144,128]{1,0:T(1,128)}', space=vmem, size = 0x12000, scoped, tag = 'internal scratch']
  %s0 = inlined_call_operand.vmem [shape: f32[32,32], index: 0, kind: input, shape index: {}]
  %s1 = inlined_call_operand.vmem [shape: f32[32,64], index: 1, kind: input, shape index: {}]
  %s2 = inlined_call_operand.vmem [shape: f32[32,640], index: 2, kind: input, shape index: {}]
  %s3 = inlined_call_operand.vmem [shape: bf16[36,640], index: 3, kind: input, shape index: {}]
  %s4 = inlined_call_operand.vmem [shape: bf16[640,64], index: 4, kind: input, shape index: {}]
  %s5 = inlined_call_operand.vmem [shape: bf16[64,640], index: 5, kind: input, shape index: {}]
  %s6 = inlined_call_operand.vmem [shape: bf16[64,4], index: 6, kind: input, shape index: {}]
  %s7 = inlined_call_operand.vmem [shape: bf16[4,64], index: 7, kind: input, shape index: {}]
  %s8 = inlined_call_operand.vmem [shape: f32[64,32], index: 8, kind: input, shape index: {}]
  %s9 = inlined_call_operand.vmem [shape: bf16[2,32,96], index: 9, kind: input, shape index: {}]
  %s10 = inlined_call_operand.vmem [shape: f32[2,1,96], index: 10, kind: input, shape index: {}]
  %s11 = inlined_call_operand.vmem [shape: bf16[2,32,36], index: 11, kind: input, shape index: {}]
  %s12 = inlined_call_operand.vmem [shape: bf16[2,640,32], index: 12, kind: input, shape index: {}]
  %s13 = inlined_call_operand.vmem [shape: bf16[2,32,32], index: 13, kind: input, shape index: {}]
  %s14 = inlined_call_operand.vmem [shape: f32[2,1,32], index: 14, kind: input, shape index: {}]
  %s15 = inlined_call_operand.vmem [shape: f32[2,4,32], index: 15, kind: input, shape index: {}]
  %s16 = inlined_call_operand.vmem [shape: bf16[2,32,64], index: 16, kind: input, shape index: {}]
  %s17 = inlined_call_operand.vmem [shape: f32[2,1,64], index: 17, kind: input, shape index: {}]
  %s18 = inlined_call_operand.vmem [shape: bf16[2,64,32], index: 18, kind: input, shape index: {}]
  %s19 = inlined_call_operand.vmem [shape: f32[2,1,32], index: 19, kind: input, shape index: {}]
  %s20 = inlined_call_operand.vmem [shape: f32[2,32,32], index: 20, kind: output, shape index: {}]
  %s21 = sld [smem:[#allocation0]]
  $region90: #{gnn_encoder_forward.1} parent=0
    _
  %s23 = ssub.s32 1, %s21
  %s24 = scalar_select 0, %s23, %s21
  // Predicated region
  $region2: #{gnn_encoder_forward.1} parent=0 // pred_check
    _
  $region3: #{gnn_encoder_forward.1} parent=0 // pred_check_branch
    %26 = sbr.rel (0) target = $region5
  $region4: #{gnn_encoder_forward.1} parent=0 // pred_region
    _
  $region5: #{gnn_encoder_forward.1} parent=0 // pred_fallthru
    _
  // Predicated region
  $region6: #{gnn_encoder_forward.1} parent=0 // pred_check
    _
  $region7: #{gnn_encoder_forward.1} parent=0 // pred_check_branch
    %28 = sbr.rel (0) target = $region9
  $region8: #{gnn_encoder_forward.1} parent=0 // pred_region
    _
  $region9: #{gnn_encoder_forward.1} parent=0 // pred_fallthru
    _
  // Predicated region
  $region10: #{gnn_encoder_forward.1} parent=0 // pred_check
    _
  $region11: #{gnn_encoder_forward.1} parent=0 // pred_check_branch
    %30 = sbr.rel (0) target = $region13
  $region12: #{gnn_encoder_forward.1} parent=0 // pred_region
    _
  $region13: #{gnn_encoder_forward.1} parent=0 // pred_fallthru
    _
  // Predicated region
  $region14: #{gnn_encoder_forward.1} parent=0 // pred_check
    _
  $region15: #{gnn_encoder_forward.1} parent=0 // pred_check_branch
    %32 = sbr.rel (0) target = $region17
  $region16: #{gnn_encoder_forward.1} parent=0 // pred_region
    _
  $region17: #{gnn_encoder_forward.1} parent=0 // pred_fallthru
    _
  // Predicated region
  $region18: #{gnn_encoder_forward.1} parent=0 // pred_check
    _
  $region19: #{gnn_encoder_forward.1} parent=0 // pred_check_branch
    %34 = sbr.rel (0) target = $region21
  $region20: #{gnn_encoder_forward.1} parent=0 // pred_region
    _
  $region21: #{gnn_encoder_forward.1} parent=0 // pred_fallthru
    _
  // Predicated region
  $region22: #{gnn_encoder_forward.1} parent=0 // pred_check
    _
  $region23: #{gnn_encoder_forward.1} parent=0 // pred_check_branch
    %36 = sbr.rel (0) target = $region25
  $region24: #{gnn_encoder_forward.1} parent=0 // pred_region
    _
  $region25: #{gnn_encoder_forward.1} parent=0 // pred_fallthru
    _
  // Predicated region
  $region26: #{gnn_encoder_forward.1} parent=0 // pred_check
    _
  $region27: #{gnn_encoder_forward.1} parent=0 // pred_check_branch
    %38 = sbr.rel (0) target = $region29
  $region28: #{gnn_encoder_forward.1} parent=0 // pred_region
    _
  $region29: #{gnn_encoder_forward.1} parent=0 // pred_fallthru
    _
  // Predicated region
  $region30: #{gnn_encoder_forward.1} parent=0 // pred_check
    _
  $region31: #{gnn_encoder_forward.1} parent=0 // pred_check_branch
    %40 = sbr.rel (0) target = $region33
  $region32: #{gnn_encoder_forward.1} parent=0 // pred_region
    _
  $region33: #{gnn_encoder_forward.1} parent=0 // pred_fallthru
    _
  // Predicated region
  $region34: #{gnn_encoder_forward.1} parent=0 // pred_check
    _
  $region35: #{gnn_encoder_forward.1} parent=0 // pred_check_branch
    %42 = sbr.rel (0) target = $region37
  $region36: #{gnn_encoder_forward.1} parent=0 // pred_region
    _
  $region37: #{gnn_encoder_forward.1} parent=0 // pred_fallthru
    _
  // Predicated region
  $region38: #{gnn_encoder_forward.1} parent=0 // pred_check
    _
  $region39: #{gnn_encoder_forward.1} parent=0 // pred_check_branch
    %44 = sbr.rel (0) target = $region41
  $region40: #{gnn_encoder_forward.1} parent=0 // pred_region
    _
  $region41: #{gnn_encoder_forward.1} parent=0 // pred_fallthru
    _
  // Predicated region
  $region42: #{gnn_encoder_forward.1} parent=0 // pred_check
    _
  $region43: #{gnn_encoder_forward.1} parent=0 // pred_check_branch
    %46 = sbr.rel (0) target = $region45
  $region44: #{gnn_encoder_forward.1} parent=0 // pred_region
    _
  $region45: #{gnn_encoder_forward.1} parent=0 // pred_fallthru
    _
  // Predicated region
  $region46: #{gnn_encoder_forward.1} parent=0 // pred_check
    _
  $region47: #{gnn_encoder_forward.1} parent=0 // pred_check_branch
    %48 = sbr.rel (0) target = $region49
  $region48: #{gnn_encoder_forward.1} parent=0 // pred_region
    _
  $region49: #{gnn_encoder_forward.1} parent=0 // pred_fallthru
    _
  // Predicated region
  $region50: #{gnn_encoder_forward.1} parent=0 // pred_check
    _
  $region51: #{gnn_encoder_forward.1} parent=0 // pred_check_branch
    %50 = sbr.rel (0) target = $region53
  $region52: #{gnn_encoder_forward.1} parent=0 // pred_region
    _
  $region53: #{gnn_encoder_forward.1} parent=0 // pred_fallthru
    _
  // Predicated region
  $region54: #{gnn_encoder_forward.1} parent=0 // pred_check
    _
  $region55: #{gnn_encoder_forward.1} parent=0 // pred_check_branch
    %52 = sbr.rel (0) target = $region57
  $region56: #{gnn_encoder_forward.1} parent=0 // pred_region
    _
  $region57: #{gnn_encoder_forward.1} parent=0 // pred_fallthru
    _
  // Predicated region
  $region58: #{gnn_encoder_forward.1} parent=0 // pred_check
    _
  $region59: #{gnn_encoder_forward.1} parent=0 // pred_check_branch
    %54 = sbr.rel (0) target = $region61
  $region60: #{gnn_encoder_forward.1} parent=0 // pred_region
    _
  $region61: #{gnn_encoder_forward.1} parent=0 // pred_fallthru
    _
  // Predicated region
  $region62: #{gnn_encoder_forward.1} parent=0 // pred_check
    _
  $region63: #{gnn_encoder_forward.1} parent=0 // pred_check_branch
    %56 = sbr.rel (0) target = $region65
  $region64: #{gnn_encoder_forward.1} parent=0 // pred_region
    _
  $region65: #{gnn_encoder_forward.1} parent=0 // pred_fallthru
    _
  // Predicated region
  $region66: #{gnn_encoder_forward.1} parent=0 // pred_check
    _
  $region67: #{gnn_encoder_forward.1} parent=0 // pred_check_branch
    %58 = sbr.rel (0) target = $region69
  $region68: #{gnn_encoder_forward.1} parent=0 // pred_region
    _
  $region69: #{gnn_encoder_forward.1} parent=0 // pred_fallthru
    _
  // Predicated region
  $region70: #{gnn_encoder_forward.1} parent=0 // pred_check
    _
  $region71: #{gnn_encoder_forward.1} parent=0 // pred_check_branch
    %60 = sbr.rel (0) target = $region73
  $region72: #{gnn_encoder_forward.1} parent=0 // pred_region
    _
  $region73: #{gnn_encoder_forward.1} parent=0 // pred_fallthru
    _
  // Predicated region
  $region74: #{gnn_encoder_forward.1} parent=0 // pred_check
    _
  $region75: #{gnn_encoder_forward.1} parent=0 // pred_check_branch
    %62 = sbr.rel (0) target = $region77
  $region76: #{gnn_encoder_forward.1} parent=0 // pred_region
    _
  $region77: #{gnn_encoder_forward.1} parent=0 // pred_fallthru
    _
  // Predicated region
  $region78: #{gnn_encoder_forward.1} parent=0 // pred_check
    _
  $region79: #{gnn_encoder_forward.1} parent=0 // pred_check_branch
    %64 = sbr.rel (0) target = $region81
  $region80: #{gnn_encoder_forward.1} parent=0 // pred_region
    _
  $region81: #{gnn_encoder_forward.1} parent=0 // pred_fallthru
    _
  %v66 = vld [vmem:[%s0] sm:$0xff]
  %v67 = vld [vmem:[%s0 + $0x8] sm:$0xff]
  %v68 = vld [vmem:[%s0 + $0x10] sm:$0xff]
  %v69 = vld [vmem:[%s0 + $0x18] sm:$0xff]
  %v70 = vld [vmem:[%s1] sm:$0xff]
  %v71 = vld [vmem:[%s1 + $0x8] sm:$0xff]
  %v72 = vld [vmem:[%s1 + $0x10] sm:$0xff]
  %v73 = vld [vmem:[%s1 + $0x18] sm:$0xff]
  %v74 = vld [vmem:[%s2] sm:$0xff]
  %v75 = vld [vmem:[%s2 + $0x8] sm:$0xff]
  %v76 = vld [vmem:[%s2 + $0x10] sm:$0xff]
  %v77 = vld [vmem:[%s2 + $0x18] sm:$0xff]
  %v78 = vld [vmem:[%s2 + $0x20] sm:$0xff]
  %v79 = vld [vmem:[%s2 + $0x28] sm:$0xff]
  %v80 = vld [vmem:[%s2 + $0x30] sm:$0xff]
  %v81 = vld [vmem:[%s2 + $0x38] sm:$0xff]
  %v82 = vld [vmem:[%s2 + $0x40] sm:$0xff]
  %v83 = vld [vmem:[%s2 + $0x48] sm:$0xff]
  %v84 = vld [vmem:[%s2 + $0x50] sm:$0xff]
  %v85 = vld [vmem:[%s2 + $0x58] sm:$0xff]
  %v86 = vld [vmem:[%s2 + $0x60] sm:$0xff]
  %v87 = vld [vmem:[%s2 + $0x68] sm:$0xff]
  %v88 = vld [vmem:[%s2 + $0x70] sm:$0xff]
  %v89 = vld [vmem:[%s2 + $0x78] sm:$0xff]
  %v90 = vld [vmem:[%s2 + $0x80] sm:$0xff]
  %v91 = vld [vmem:[%s2 + $0x88] sm:$0xff]
  %v92 = vld [vmem:[%s2 + $0x90] sm:$0xff]
  %v93 = vld [vmem:[%s2 + $0x98] sm:$0xff]
  %v94 = vld [vmem:[%s3] sm:$0xff]
  %v95 = vld [vmem:[%s3 + $0x8] sm:$0xff]
  %v96 = vld [vmem:[%s3 + $0x10] sm:$0xf]
  %v97 = vld [vmem:[%s3 + $0x14] sm:$0xff]
  %v98 = vld [vmem:[%s3 + $0x1c] sm:$0xff]
  %v99 = vld [vmem:[%s3 + $0x24] sm:$0xf]
  %v100 = vld [vmem:[%s3 + $0x28] sm:$0xff]
  %v101 = vld [vmem:[%s3 + $0x30] sm:$0xff]
  %v102 = vld [vmem:[%s3 + $0x38] sm:$0xf]
  %v103 = vld [vmem:[%s3 + $0x3c] sm:$0xff]
  %v104 = vld [vmem:[%s3 + $0x44] sm:$0xff]
  %v105 = vld [vmem:[%s3 + $0x4c] sm:$0xf]
  %v106 = vld [vmem:[%s3 + $0x50] sm:$0x33]
  %v107 = vld [vmem:[%s3 + $0x58] sm:$0x33]
  %v108 = vld [vmem:[%s3 + $0x60] sm:$0x3]
  %v109 = vld [vmem:[%s4] sm:$0xf]
  %v110 = vld [vmem:[%s4 + $0x4] sm:$0xf]
  %v111 = vld [vmem:[%s4 + $0x8] sm:$0xf]
  %v112 = vld [vmem:[%s4 + $0xc] sm:$0xf]
  %v113 = vld [vmem:[%s4 + $0x10] sm:$0xf]
  %v114 = vld [vmem:[%s4 + $0x14] sm:$0xf]
  %v115 = vld [vmem:[%s4 + $0x18] sm:$0xf]
  %v116 = vld [vmem:[%s4 + $0x1c] sm:$0xf]
  %v117 = vld [vmem:[%s4 + $0x20] sm:$0xf]
  %v118 = vld [vmem:[%s4 + $0x24] sm:$0xf]
  %v119 = vld [vmem:[%s4 + $0x28] sm:$0xf]
  %v120 = vld [vmem:[%s4 + $0x2c] sm:$0xf]
  %v121 = vld [vmem:[%s4 + $0x30] sm:$0xf]
  %v122 = vld [vmem:[%s4 + $0x34] sm:$0xf]
  %v123 = vld [vmem:[%s4 + $0x38] sm:$0xf]
  %v124 = vld [vmem:[%s4 + $0x3c] sm:$0xf]
  %v125 = vld [vmem:[%s4 + $0x40] sm:$0xf]
  %v126 = vld [vmem:[%s4 + $0x44] sm:$0xf]
  %v127 = vld [vmem:[%s4 + $0x48] sm:$0xf]
  %v128 = vld [vmem:[%s4 + $0x4c] sm:$0xf]
  %v129 = vld [vmem:[%s4 + $0x50] sm:$0xf]
  %v130 = vld [vmem:[%s4 + $0x54] sm:$0xf]
  %v131 = vld [vmem:[%s4 + $0x58] sm:$0xf]
  %v132 = vld [vmem:[%s4 + $0x5c] sm:$0xf]
  %v133 = vld [vmem:[%s4 + $0x60] sm:$0xf]
  %v134 = vld [vmem:[%s4 + $0x64] sm:$0xf]
  %v135 = vld [vmem:[%s4 + $0x68] sm:$0xf]
  %v136 = vld [vmem:[%s4 + $0x6c] sm:$0xf]
  %v137 = vld [vmem:[%s4 + $0x70] sm:$0xf]
  %v138 = vld [vmem:[%s4 + $0x74] sm:$0xf]
  %v139 = vld [vmem:[%s4 + $0x78] sm:$0xf]
  %v140 = vld [vmem:[%s4 + $0x7c] sm:$0xf]
  %v141 = vld [vmem:[%s4 + $0x80] sm:$0xf]
  %v142 = vld [vmem:[%s4 + $0x84] sm:$0xf]
  %v143 = vld [vmem:[%s4 + $0x88] sm:$0xf]
  %v144 = vld [vmem:[%s4 + $0x8c] sm:$0xf]
  %v145 = vld [vmem:[%s4 + $0x90] sm:$0xf]
  %v146 = vld [vmem:[%s4 + $0x94] sm:$0xf]
  %v147 = vld [vmem:[%s4 + $0x98] sm:$0xf]
  %v148 = vld [vmem:[%s4 + $0x9c] sm:$0xf]
  %v149 = vld [vmem:[%s4 + $0xa0] sm:$0xf]
  %v150 = vld [vmem:[%s4 + $0xa4] sm:$0xf]
  %v151 = vld [vmem:[%s4 + $0xa8] sm:$0xf]
  %v152 = vld [vmem:[%s4 + $0xac] sm:$0xf]
  %v153 = vld [vmem:[%s4 + $0xb0] sm:$0xf]
  %v154 = vld [vmem:[%s4 + $0xb4] sm:$0xf]
  %v155 = vld [vmem:[%s4 + $0xb8] sm:$0xf]
  %v156 = vld [vmem:[%s4 + $0xbc] sm:$0xf]
  %v157 = vld [vmem:[%s4 + $0xc0] sm:$0xf]
  %v158 = vld [vmem:[%s4 + $0xc4] sm:$0xf]
  %v159 = vld [vmem:[%s4 + $0xc8] sm:$0xf]
  %v160 = vld [vmem:[%s4 + $0xcc] sm:$0xf]
  %v161 = vld [vmem:[%s4 + $0xd0] sm:$0xf]
  %v162 = vld [vmem:[%s4 + $0xd4] sm:$0xf]
  %v163 = vld [vmem:[%s4 + $0xd8] sm:$0xf]
  %v164 = vld [vmem:[%s4 + $0xdc] sm:$0xf]
  %v165 = vld [vmem:[%s4 + $0xe0] sm:$0xf]
  %v166 = vld [vmem:[%s4 + $0xe4] sm:$0xf]
  %v167 = vld [vmem:[%s4 + $0xe8] sm:$0xf]
  %v168 = vld [vmem:[%s4 + $0xec] sm:$0xf]
  %v169 = vld [vmem:[%s4 + $0xf0] sm:$0xf]
  %v170 = vld [vmem:[%s4 + $0xf4] sm:$0xf]
  %v171 = vld [vmem:[%s4 + $0xf8] sm:$0xf]
  %v172 = vld [vmem:[%s4 + $0xfc] sm:$0xf]
  %v173 = vld [vmem:[%s4 + $0x100] sm:$0xf]
  %v174 = vld [vmem:[%s4 + $0x104] sm:$0xf]
  %v175 = vld [vmem:[%s4 + $0x108] sm:$0xf]
  %v176 = vld [vmem:[%s4 + $0x10c] sm:$0xf]
  %v177 = vld [vmem:[%s4 + $0x110] sm:$0xf]
  %v178 = vld [vmem:[%s4 + $0x114] sm:$0xf]
  %v179 = vld [vmem:[%s4 + $0x118] sm:$0xf]
  %v180 = vld [vmem:[%s4 + $0x11c] sm:$0xf]
  %v181 = vld [vmem:[%s4 + $0x120] sm:$0xf]
  %v182 = vld [vmem:[%s4 + $0x124] sm:$0xf]
  %v183 = vld [vmem:[%s4 + $0x128] sm:$0xf]
  %v184 = vld [vmem:[%s4 + $0x12c] sm:$0xf]
  %v185 = vld [vmem:[%s4 + $0x130] sm:$0xf]
  %v186 = vld [vmem:[%s4 + $0x134] sm:$0xf]
  %v187 = vld [vmem:[%s4 + $0x138] sm:$0xf]
  %v188 = vld [vmem:[%s4 + $0x13c] sm:$0xf]
  %v189 = vld [vmem:[%s5] sm:$0xff]
  %v190 = vld [vmem:[%s5 + $0x8] sm:$0xff]
  %v191 = vld [vmem:[%s5 + $0x10] sm:$0xf]
  %v192 = vld [vmem:[%s5 + $0x14] sm:$0xff]
  %v193 = vld [vmem:[%s5 + $0x1c] sm:$0xff]
  %v194 = vld [vmem:[%s5 + $0x24] sm:$0xf]
  %v195 = vld [vmem:[%s5 + $0x28] sm:$0xff]
  %v196 = vld [vmem:[%s5 + $0x30] sm:$0xff]
  %v197 = vld [vmem:[%s5 + $0x38] sm:$0xf]
  %v198 = vld [vmem:[%s5 + $0x3c] sm:$0xff]
  %v199 = vld [vmem:[%s5 + $0x44] sm:$0xff]
  %v200 = vld [vmem:[%s5 + $0x4c] sm:$0xf]
  %v201 = vld [vmem:[%s5 + $0x50] sm:$0xff]
  %v202 = vld [vmem:[%s5 + $0x58] sm:$0xff]
  %v203 = vld [vmem:[%s5 + $0x60] sm:$0xf]
  %v204 = vld [vmem:[%s5 + $0x64] sm:$0xff]
  %v205 = vld [vmem:[%s5 + $0x6c] sm:$0xff]
  %v206 = vld [vmem:[%s5 + $0x74] sm:$0xf]
  %v207 = vld [vmem:[%s5 + $0x78] sm:$0xff]
  %v208 = vld [vmem:[%s5 + $0x80] sm:$0xff]
  %v209 = vld [vmem:[%s5 + $0x88] sm:$0xf]
  %v210 = vld [vmem:[%s5 + $0x8c] sm:$0xff]
  %v211 = vld [vmem:[%s5 + $0x94] sm:$0xff]
  %v212 = vld [vmem:[%s5 + $0x9c] sm:$0xf]
  %v213 = vld [vmem:[%s6] sm:$0xf]
  %v214 = vld [vmem:[%s6 + $0x4] sm:$0xf]
  %v215 = vld [vmem:[%s6 + $0x8] sm:$0xf]
  %v216 = vld [vmem:[%s6 + $0xc] sm:$0xf]
  %v217 = vld [vmem:[%s6 + $0x10] sm:$0xf]
  %v218 = vld [vmem:[%s6 + $0x14] sm:$0xf]
  %v219 = vld [vmem:[%s6 + $0x18] sm:$0xf]
  %v220 = vld [vmem:[%s6 + $0x1c] sm:$0xf]
  %v221 = vld [vmem:[%s7] sm:$0x3]
  %v222 = vld [vmem:[%s8] sm:$0xff]
  %v223 = vld [vmem:[%s8 + $0x8] sm:$0xff]
  %v224 = vld [vmem:[%s8 + $0x10] sm:$0xff]
  %v225 = vld [vmem:[%s8 + $0x18] sm:$0xff]
  %v226 = vld [vmem:[%s8 + $0x20] sm:$0xff]
  %v227 = vld [vmem:[%s8 + $0x28] sm:$0xff]
  %v228 = vld [vmem:[%s8 + $0x30] sm:$0xff]
  %v229 = vld [vmem:[%s8 + $0x38] sm:$0xff]
  %v230 = vld [vmem:[%s9] sm:$0xf]
  %v231 = vld [vmem:[%s9 + $0x4] sm:$0xf]
  %v232 = vld [vmem:[%s9 + $0x8] sm:$0xf]
  %v233 = vld [vmem:[%s9 + $0xc] sm:$0xf]
  %v234 = vld [vmem:[%s10] sm:$0x1]
  %v235 = vld [vmem:[%s11] sm:$0xf]
  %v236 = vld [vmem:[%s11 + $0x4] sm:$0xf]
  %v237 = vld [vmem:[%s11 + $0x8] sm:$0xf]
  %v238 = vld [vmem:[%s11 + $0xc] sm:$0xf]
  %v239 = vld [vmem:[%s12] sm:$0xf]
  %v240 = vld [vmem:[%s12 + $0x4] sm:$0xf]
  %v241 = vld [vmem:[%s12 + $0x8] sm:$0xf]
  %v242 = vld [vmem:[%s12 + $0xc] sm:$0xf]
  %v243 = vld [vmem:[%s12 + $0x10] sm:$0xf]
  %v244 = vld [vmem:[%s12 + $0x14] sm:$0xf]
  %v245 = vld [vmem:[%s12 + $0x18] sm:$0xf]
  %v246 = vld [vmem:[%s12 + $0x1c] sm:$0xf]
  %v247 = vld [vmem:[%s12 + $0x20] sm:$0xf]
  %v248 = vld [vmem:[%s12 + $0x24] sm:$0xf]
  %v249 = vld [vmem:[%s12 + $0x28] sm:$0xf]
  %v250 = vld [vmem:[%s12 + $0x2c] sm:$0xf]
  %v251 = vld [vmem:[%s12 + $0x30] sm:$0xf]
  %v252 = vld [vmem:[%s12 + $0x34] sm:$0xf]
  %v253 = vld [vmem:[%s12 + $0x38] sm:$0xf]
  %v254 = vld [vmem:[%s12 + $0x3c] sm:$0xf]
  %v255 = vld [vmem:[%s12 + $0x40] sm:$0xf]
  %v256 = vld [vmem:[%s12 + $0x44] sm:$0xf]
  %v257 = vld [vmem:[%s12 + $0x48] sm:$0xf]
  %v258 = vld [vmem:[%s12 + $0x4c] sm:$0xf]
  %v259 = vld [vmem:[%s12 + $0x50] sm:$0xf]
  %v260 = vld [vmem:[%s12 + $0x54] sm:$0xf]
  %v261 = vld [vmem:[%s12 + $0x58] sm:$0xf]
  %v262 = vld [vmem:[%s12 + $0x5c] sm:$0xf]
  %v263 = vld [vmem:[%s12 + $0x60] sm:$0xf]
  %v264 = vld [vmem:[%s12 + $0x64] sm:$0xf]
  %v265 = vld [vmem:[%s12 + $0x68] sm:$0xf]
  %v266 = vld [vmem:[%s12 + $0x6c] sm:$0xf]
  %v267 = vld [vmem:[%s12 + $0x70] sm:$0xf]
  %v268 = vld [vmem:[%s12 + $0x74] sm:$0xf]
  %v269 = vld [vmem:[%s12 + $0x78] sm:$0xf]
  %v270 = vld [vmem:[%s12 + $0x7c] sm:$0xf]
  %v271 = vld [vmem:[%s12 + $0x80] sm:$0xf]
  %v272 = vld [vmem:[%s12 + $0x84] sm:$0xf]
  %v273 = vld [vmem:[%s12 + $0x88] sm:$0xf]
  %v274 = vld [vmem:[%s12 + $0x8c] sm:$0xf]
  %v275 = vld [vmem:[%s12 + $0x90] sm:$0xf]
  %v276 = vld [vmem:[%s12 + $0x94] sm:$0xf]
  %v277 = vld [vmem:[%s12 + $0x98] sm:$0xf]
  %v278 = vld [vmem:[%s12 + $0x9c] sm:$0xf]
  %v279 = vld [vmem:[%s12 + $0xa0] sm:$0xf]
  %v280 = vld [vmem:[%s12 + $0xa4] sm:$0xf]
  %v281 = vld [vmem:[%s12 + $0xa8] sm:$0xf]
  %v282 = vld [vmem:[%s12 + $0xac] sm:$0xf]
  %v283 = vld [vmem:[%s12 + $0xb0] sm:$0xf]
  %v284 = vld [vmem:[%s12 + $0xb4] sm:$0xf]
  %v285 = vld [vmem:[%s12 + $0xb8] sm:$0xf]
  %v286 = vld [vmem:[%s12 + $0xbc] sm:$0xf]
  %v287 = vld [vmem:[%s12 + $0xc0] sm:$0xf]
  %v288 = vld [vmem:[%s12 + $0xc4] sm:$0xf]
  %v289 = vld [vmem:[%s12 + $0xc8] sm:$0xf]
  %v290 = vld [vmem:[%s12 + $0xcc] sm:$0xf]
  %v291 = vld [vmem:[%s12 + $0xd0] sm:$0xf]
  %v292 = vld [vmem:[%s12 + $0xd4] sm:$0xf]
  %v293 = vld [vmem:[%s12 + $0xd8] sm:$0xf]
  %v294 = vld [vmem:[%s12 + $0xdc] sm:$0xf]
  %v295 = vld [vmem:[%s12 + $0xe0] sm:$0xf]
  %v296 = vld [vmem:[%s12 + $0xe4] sm:$0xf]
  %v297 = vld [vmem:[%s12 + $0xe8] sm:$0xf]
  %v298 = vld [vmem:[%s12 + $0xec] sm:$0xf]
  %v299 = vld [vmem:[%s12 + $0xf0] sm:$0xf]
  %v300 = vld [vmem:[%s12 + $0xf4] sm:$0xf]
  %v301 = vld [vmem:[%s12 + $0xf8] sm:$0xf]
  %v302 = vld [vmem:[%s12 + $0xfc] sm:$0xf]
  %v303 = vld [vmem:[%s12 + $0x100] sm:$0xf]
  %v304 = vld [vmem:[%s12 + $0x104] sm:$0xf]
  %v305 = vld [vmem:[%s12 + $0x108] sm:$0xf]
  %v306 = vld [vmem:[%s12 + $0x10c] sm:$0xf]
  %v307 = vld [vmem:[%s12 + $0x110] sm:$0xf]
  %v308 = vld [vmem:[%s12 + $0x114] sm:$0xf]
  %v309 = vld [vmem:[%s12 + $0x118] sm:$0xf]
  %v310 = vld [vmem:[%s12 + $0x11c] sm:$0xf]
  %v311 = vld [vmem:[%s12 + $0x120] sm:$0xf]
  %v312 = vld [vmem:[%s12 + $0x124] sm:$0xf]
  %v313 = vld [vmem:[%s12 + $0x128] sm:$0xf]
  %v314 = vld [vmem:[%s12 + $0x12c] sm:$0xf]
  %v315 = vld [vmem:[%s12 + $0x130] sm:$0xf]
  %v316 = vld [vmem:[%s12 + $0x134] sm:$0xf]
  %v317 = vld [vmem:[%s12 + $0x138] sm:$0xf]
  %v318 = vld [vmem:[%s12 + $0x13c] sm:$0xf]
  %v319 = vld [vmem:[%s13] sm:$0xf]
  %v320 = vld [vmem:[%s13 + $0x4] sm:$0xf]
  %v321 = vld [vmem:[%s13 + $0x8] sm:$0xf]
  %v322 = vld [vmem:[%s13 + $0xc] sm:$0xf]
  %v323 = vld [vmem:[%s14] sm:$0x1]
  %v324 = vld [vmem:[%s15] sm:$0xf]
  %v325 = vld [vmem:[%s16] sm:$0xf]
  %v326 = vld [vmem:[%s16 + $0x4] sm:$0xf]
  %v327 = vld [vmem:[%s16 + $0x8] sm:$0xf]
  %v328 = vld [vmem:[%s16 + $0xc] sm:$0xf]
  %v329 = vld [vmem:[%s17] sm:$0x1]
  %v330 = vld [vmem:[%s18] sm:$0xf]
  %v331 = vld [vmem:[%s18 + $0x4] sm:$0xf]
  %v332 = vld [vmem:[%s18 + $0x8] sm:$0xf]
  %v333 = vld [vmem:[%s18 + $0xc] sm:$0xf]
  %v334 = vld [vmem:[%s18 + $0x10] sm:$0xf]
  %v335 = vld [vmem:[%s18 + $0x14] sm:$0xf]
  %v336 = vld [vmem:[%s18 + $0x18] sm:$0xf]
  %v337 = vld [vmem:[%s18 + $0x1c] sm:$0xf]
  %v338 = vld [vmem:[%s19] sm:$0x1]
  %v339 = vpack.c.bf16 %v67, %v66
  %v340 = vpack.c.bf16 %v69, %v68
  %v342 = vlaneseq
  %v343 = vshrl.u32 %v342, 7
  %v344 = vsub.s32 0, %v343
  %v345 = vrot.slane %v234, %v344
  %v351 = vunpack.c.l.b16 %v230
  %v352 = vunpack.c.l.b16 %v231
  %v353 = vunpack.c.l.b16 %v232
  %v354 = vunpack.c.l.b16 %v233
  %v355 = vpack.c.b16 %v352, %v351
  %v356 = vpack.c.b16 %v354, %v353
  %vm359 = vcmask 261120
  %v361 = vsel %vm359, %v339, 0
  %v364 = vsel %vm359, %v340, 0
  %366 = vmatprep.subr.bf16.mxu0 0
  %367 = vmatpush1.bf16.msra.mxu0 %v355
  %368 = vmatprep.subr.bf16.mxu0 0
  %369 = vmatpush1.bf16.msra.mxu0 %v356
  %370 = vmatprep.subr.bf16.mxu0 0
  %371 = vmatpush1.bf16.msra.mxu0 0
  %372 = vmatprep.subr.bf16.mxu0 0
  %373 = vmatpush1.bf16.msra.mxu0 0
  %374 = vmatprep.subr.bf16.mxu0 0
  %375 = vmatpush1.bf16.msra.mxu0 0
  %376 = vmatprep.subr.bf16.mxu0 0
  %377 = vmatpush1.bf16.msra.mxu0 0
  %378 = vmatprep.subr.bf16.mxu0 0
  %379 = vmatpush1.bf16.msra.mxu0 0
  %380 = vmatprep.subr.bf16.mxu0 0
  %381 = vmatpush1.bf16.msra.mxu0 0
  %382 = vmatprep.subr.bf16.mxu0 0
  %383 = vmatpush1.bf16.msra.mxu0 0
  %384 = vmatprep.subr.bf16.mxu0 0
  %385 = vmatpush1.bf16.msra.mxu0 0
  %386 = vmatprep.subr.bf16.mxu0 0
  %387 = vmatpush1.bf16.msra.mxu0 0
  %388 = vmatprep.subr.bf16.mxu0 0
  %389 = vmatpush1.bf16.msra.mxu0 0
  %390 = vmatprep.subr.bf16.mxu0 0
  %391 = vmatpush1.bf16.msra.mxu0 0
  %392 = vmatprep.subr.bf16.mxu0 0
  %393 = vmatpush1.bf16.msra.mxu0 0
  %394 = vmatprep.subr.bf16.mxu0 0
  %395 = vmatpush1.bf16.msra.mxu0 0
  %396 = vmatprep.subr.bf16.mxu0 0
  %397 = vmatpush1.bf16.msra.mxu0 0
  %398 = vmatprep.mubr.bf16.mxu0 0
  %399 = vmatmul.mubr.bf16.gmra.mrb[0].mxu0 %v361
  %v400 = vpop.f32.mrb[0].mxu0
  %v401 = vadd.f32 %v345, %v400
  %v402 = vpop.f32.mrb[0].mxu0
  %v403 = vpop.f32.mrb[0].mxu0
  %v404 = vadd.f32 %v345, %v403
  %v405 = vpop.f32.mrb[0].mxu0
  %406 = vmatprep.mubr.bf16.mxu0 0
  %407 = vmatmul.mubr.bf16.gmra.mrb[0].mxu0 %v364
  %v408 = vpop.f32.mrb[0].mxu0
  %v409 = vadd.f32 %v345, %v408
  %v410 = vpop.f32.mrb[0].mxu0
  %v411 = vpop.f32.mrb[0].mxu0
  %v412 = vadd.f32 %v345, %v411
  %v413 = vpop.f32.mrb[0].mxu0
  %414 = vdwg.mxu0
  %v415 = vpack.c.bf16 %v404, %v401
  %v416 = vpack.c.bf16 %v412, %v409
  %v421 = vunpack.c.l.b16 %v235
  %v422 = vunpack.c.l.b16 %v236
  %v423 = vunpack.c.l.b16 %v237
  %v424 = vunpack.c.l.b16 %v238
  %v425 = vpack.c.b16 %v422, %v421
  %v426 = vpack.c.b16 %v424, %v423
  %v430 = vsel %vm359, %v415, 0
  %v433 = vsel %vm359, %v416, 0
  %435 = vmatprep.subr.bf16.mxu0 0
  %436 = vmatpush1.bf16.msra.mxu0 %v425
  %437 = vmatprep.subr.bf16.mxu0 0
  %438 = vmatpush1.bf16.msra.mxu0 %v426
  %439 = vmatprep.subr.bf16.mxu0 0
  %440 = vmatpush1.bf16.msra.mxu0 0
  %441 = vmatprep.subr.bf16.mxu0 0
  %442 = vmatpush1.bf16.msra.mxu0 0
  %443 = vmatprep.subr.bf16.mxu0 0
  %444 = vmatpush1.bf16.msra.mxu0 0
  %445 = vmatprep.subr.bf16.mxu0 0
  %446 = vmatpush1.bf16.msra.mxu0 0
  %447 = vmatprep.subr.bf16.mxu0 0
  %448 = vmatpush1.bf16.msra.mxu0 0
  %449 = vmatprep.subr.bf16.mxu0 0
  %450 = vmatpush1.bf16.msra.mxu0 0
  %451 = vmatprep.subr.bf16.mxu0 0
  %452 = vmatpush1.bf16.msra.mxu0 0
  %453 = vmatprep.subr.bf16.mxu0 0
  %454 = vmatpush1.bf16.msra.mxu0 0
  %455 = vmatprep.subr.bf16.mxu0 0
  %456 = vmatpush1.bf16.msra.mxu0 0
  %457 = vmatprep.subr.bf16.mxu0 0
  %458 = vmatpush1.bf16.msra.mxu0 0
  %459 = vmatprep.subr.bf16.mxu0 0
  %460 = vmatpush1.bf16.msra.mxu0 0
  %461 = vmatprep.subr.bf16.mxu0 0
  %462 = vmatpush1.bf16.msra.mxu0 0
  %463 = vmatprep.subr.bf16.mxu0 0
  %464 = vmatpush1.bf16.msra.mxu0 0
  %465 = vmatprep.subr.bf16.mxu0 0
  %466 = vmatpush1.bf16.msra.mxu0 0
  %467 = vmatprep.mubr.bf16.mxu0 0
  %468 = vmatmul.mubr.bf16.gmra.mrb[0].mxu0 %v430
  %v469 = vpop.f32.mrb[0].mxu0
  %v470 = vadd.f32 0.0, %v469
  %v471 = vpop.f32.mrb[0].mxu0
  %v472 = vpop.f32.mrb[0].mxu0
  %v473 = vadd.f32 0.0, %v472
  %v474 = vpop.f32.mrb[0].mxu0
  %475 = vmatprep.mubr.bf16.mxu0 0
  %476 = vmatmul.mubr.bf16.gmra.mrb[0].mxu0 %v433
  %v477 = vpop.f32.mrb[0].mxu0
  %v478 = vadd.f32 0.0, %v477
  %v479 = vpop.f32.mrb[0].mxu0
  %v480 = vpop.f32.mrb[0].mxu0
  %v481 = vadd.f32 0.0, %v480
  %v482 = vpop.f32.mrb[0].mxu0
  %483 = vdwg.mxu0
  %v484 = vpack.c.bf16 %v473, %v470
  %v485 = vpack.c.bf16 %v481, %v478
  %v501 = vunpack.c.l.b16 %v94
  %v502 = vunpack.c.h.b16 %v94
  %v503 = vunpack.c.l.b16 %v95
  %v504 = vunpack.c.h.b16 %v95
  %v505 = vunpack.c.l.b16 %v96
  %v506 = vunpack.c.l.b16 %v97
  %v507 = vunpack.c.h.b16 %v97
  %v508 = vunpack.c.l.b16 %v98
  %v509 = vunpack.c.h.b16 %v98
  %v510 = vunpack.c.l.b16 %v99
  %v511 = vunpack.c.l.b16 %v100
  %v512 = vunpack.c.h.b16 %v100
  %v513 = vunpack.c.l.b16 %v101
  %v514 = vunpack.c.h.b16 %v101
  %v515 = vunpack.c.l.b16 %v102
  %v516 = vunpack.c.l.b16 %v103
  %v517 = vunpack.c.h.b16 %v103
  %v518 = vunpack.c.l.b16 %v104
  %v519 = vunpack.c.h.b16 %v104
  %v520 = vunpack.c.l.b16 %v105
  %v521 = vunpack.c.l.b16 %v106
  %v522 = vunpack.c.h.b16 %v106
  %v523 = vunpack.c.l.b16 %v107
  %v524 = vunpack.c.h.b16 %v107
  %v525 = vunpack.c.l.b16 %v108
  %v526 = vpack.c.b16 %v506, %v501
  %v527 = vpack.c.b16 %v507, %v502
  %v528 = vpack.c.b16 %v508, %v503
  %v529 = vpack.c.b16 %v509, %v504
  %v530 = vpack.c.b16 %v510, %v505
  %v531 = vpack.c.b16 %v516, %v511
  %v532 = vpack.c.b16 %v517, %v512
  %v533 = vpack.c.b16 %v518, %v513
  %v534 = vpack.c.b16 %v519, %v514
  %v535 = vpack.c.b16 %v520, %v515
  %v536 = vpack.c.b16 %v521, %v521
  %v537 = vpack.c.b16 %v522, %v522
  %v538 = vpack.c.b16 %v523, %v523
  %v539 = vpack.c.b16 %v524, %v524
  %v540 = vpack.c.b16 %v525, %v525
  %vm551 = vcmask 293888
  %v553 = vsel %vm551, %v484, 0
  %v556 = vsel %vm551, %v485, 0
  %vm558 = vcmask 1041408
  %v560 = vsel %vm558, %v536, 0
  %v563 = vsel %vm558, %v537, 0
  %v566 = vsel %vm558, %v538, 0
  %v569 = vsel %vm558, %v539, 0
  %v572 = vsel %vm558, %v540, 0
  %574 = vmatprep.subr.bf16.mxu0 %v527
  %575 = vmatpush1.bf16.msra.mxu0 %v526
  %576 = vmatprep.subr.bf16.mxu0 %v532
  %577 = vmatpush1.bf16.msra.mxu0 %v531
  %578 = vmatprep.subr.bf16.mxu0 %v563
  %579 = vmatpush1.bf16.msra.mxu0 %v560
  %580 = vmatprep.subr.bf16.mxu0 0
  %581 = vmatpush1.bf16.msra.mxu0 0
  %582 = vmatprep.subr.bf16.mxu0 0
  %583 = vmatpush1.bf16.msra.mxu0 0
  %584 = vmatprep.subr.bf16.mxu0 0
  %585 = vmatpush1.bf16.msra.mxu0 0
  %586 = vmatprep.subr.bf16.mxu0 0
  %587 = vmatpush1.bf16.msra.mxu0 0
  %588 = vmatprep.subr.bf16.mxu0 0
  %589 = vmatpush1.bf16.msra.mxu0 0
  %590 = vmatprep.subr.bf16.mxu0 0
  %591 = vmatpush1.bf16.msra.mxu0 0
  %592 = vmatprep.subr.bf16.mxu0 0
  %593 = vmatpush1.bf16.msra.mxu0 0
  %594 = vmatprep.subr.bf16.mxu0 0
  %595 = vmatpush1.bf16.msra.mxu0 0
  %596 = vmatprep.subr.bf16.mxu0 0
  %597 = vmatpush1.bf16.msra.mxu0 0
  %598 = vmatprep.subr.bf16.mxu0 0
  %599 = vmatpush1.bf16.msra.mxu0 0
  %600 = vmatprep.subr.bf16.mxu0 0
  %601 = vmatpush1.bf16.msra.mxu0 0
  %602 = vmatprep.subr.bf16.mxu0 0
  %603 = vmatpush1.bf16.msra.mxu0 0
  %604 = vmatprep.subr.bf16.mxu0 0
  %605 = vmatpush1.bf16.msra.mxu0 0
  %606 = vmatprep.mubr.bf16.mxu0 0
  %607 = vmatmul.mubr.bf16.gmra.mrb[0].mxu0 %v553
  %v608 = vpop.f32.mrb[0].mxu0
  %v609 = vadd.f32 0.0, %v608
  %v610 = vpop.f32.mrb[0].mxu0
  %v611 = vadd.f32 0.0, %v610
  %v612 = vpop.f32.mrb[0].mxu0
  %v613 = vadd.f32 0.0, %v612
  %v614 = vpop.f32.mrb[0].mxu0
  %v615 = vadd.f32 0.0, %v614
  %616 = vmatprep.mubr.bf16.mxu0 0
  %617 = vmatmul.mubr.bf16.gmra.mrb[0].mxu0 %v556
  %v618 = vpop.f32.mrb[0].mxu0
  %v619 = vadd.f32 0.0, %v618
  %v620 = vpop.f32.mrb[0].mxu0
  %v621 = vadd.f32 0.0, %v620
  %v622 = vpop.f32.mrb[0].mxu0
  %v623 = vadd.f32 0.0, %v622
  %v624 = vpop.f32.mrb[0].mxu0
  %v625 = vadd.f32 0.0, %v624
  %626 = vdwg.mxu0
  %627 = vmatprep.subr.bf16.mxu0 %v529
  %628 = vmatpush1.bf16.msra.mxu0 %v528
  %629 = vmatprep.subr.bf16.mxu0 %v534
  %630 = vmatpush1.bf16.msra.mxu0 %v533
  %631 = vmatprep.subr.bf16.mxu0 %v569
  %632 = vmatpush1.bf16.msra.mxu0 %v566
  %633 = vmatprep.subr.bf16.mxu0 0
  %634 = vmatpush1.bf16.msra.mxu0 0
  %635 = vmatprep.subr.bf16.mxu0 0
  %636 = vmatpush1.bf16.msra.mxu0 0
  %637 = vmatprep.subr.bf16.mxu0 0
  %638 = vmatpush1.bf16.msra.mxu0 0
  %639 = vmatprep.subr.bf16.mxu0 0
  %640 = vmatpush1.bf16.msra.mxu0 0
  %641 = vmatprep.subr.bf16.mxu0 0
  %642 = vmatpush1.bf16.msra.mxu0 0
  %643 = vmatprep.subr.bf16.mxu0 0
  %644 = vmatpush1.bf16.msra.mxu0 0
  %645 = vmatprep.subr.bf16.mxu0 0
  %646 = vmatpush1.bf16.msra.mxu0 0
  %647 = vmatprep.subr.bf16.mxu0 0
  %648 = vmatpush1.bf16.msra.mxu0 0
  %649 = vmatprep.subr.bf16.mxu0 0
  %650 = vmatpush1.bf16.msra.mxu0 0
  %651 = vmatprep.subr.bf16.mxu0 0
  %652 = vmatpush1.bf16.msra.mxu0 0
  %653 = vmatprep.subr.bf16.mxu0 0
  %654 = vmatpush1.bf16.msra.mxu0 0
  %655 = vmatprep.subr.bf16.mxu0 0
  %656 = vmatpush1.bf16.msra.mxu0 0
  %657 = vmatprep.subr.bf16.mxu0 0
  %658 = vmatpush1.bf16.msra.mxu0 0
  %659 = vmatprep.mubr.bf16.mxu0 0
  %660 = vmatmul.mubr.bf16.gmra.mrb[0].mxu0 %v553
  %v661 = vpop.f32.mrb[0].mxu0
  %v662 = vadd.f32 0.0, %v661
  %v663 = vpop.f32.mrb[0].mxu0
  %v664 = vadd.f32 0.0, %v663
  %v665 = vpop.f32.mrb[0].mxu0
  %v666 = vadd.f32 0.0, %v665
  %v667 = vpop.f32.mrb[0].mxu0
  %v668 = vadd.f32 0.0, %v667
  %669 = vmatprep.mubr.bf16.mxu0 0
  %670 = vmatmul.mubr.bf16.gmra.mrb[0].mxu0 %v556
  %v671 = vpop.f32.mrb[0].mxu0
  %v672 = vadd.f32 0.0, %v671
  %v673 = vpop.f32.mrb[0].mxu0
  %v674 = vadd.f32 0.0, %v673
  %v675 = vpop.f32.mrb[0].mxu0
  %v676 = vadd.f32 0.0, %v675
  %v677 = vpop.f32.mrb[0].mxu0
  %v678 = vadd.f32 0.0, %v677
  %679 = vdwg.mxu0
  %680 = vmatprep.subr.bf16.mxu0 0
  %681 = vmatpush1.bf16.msra.mxu0 %v530
  %682 = vmatprep.subr.bf16.mxu0 0
  %683 = vmatpush1.bf16.msra.mxu0 %v535
  %684 = vmatprep.subr.bf16.mxu0 0
  %685 = vmatpush1.bf16.msra.mxu0 %v572
  %686 = vmatprep.subr.bf16.mxu0 0
  %687 = vmatpush1.bf16.msra.mxu0 0
  %688 = vmatprep.subr.bf16.mxu0 0
  %689 = vmatpush1.bf16.msra.mxu0 0
  %690 = vmatprep.subr.bf16.mxu0 0
  %691 = vmatpush1.bf16.msra.mxu0 0
  %692 = vmatprep.subr.bf16.mxu0 0
  %693 = vmatpush1.bf16.msra.mxu0 0
  %694 = vmatprep.subr.bf16.mxu0 0
  %695 = vmatpush1.bf16.msra.mxu0 0
  %696 = vmatprep.subr.bf16.mxu0 0
  %697 = vmatpush1.bf16.msra.mxu0 0
  %698 = vmatprep.subr.bf16.mxu0 0
  %699 = vmatpush1.bf16.msra.mxu0 0
  %700 = vmatprep.subr.bf16.mxu0 0
  %701 = vmatpush1.bf16.msra.mxu0 0
  %702 = vmatprep.subr.bf16.mxu0 0
  %703 = vmatpush1.bf16.msra.mxu0 0
  %704 = vmatprep.subr.bf16.mxu0 0
  %705 = vmatpush1.bf16.msra.mxu0 0
  %706 = vmatprep.subr.bf16.mxu0 0
  %707 = vmatpush1.bf16.msra.mxu0 0
  %708 = vmatprep.subr.bf16.mxu0 0
  %709 = vmatpush1.bf16.msra.mxu0 0
  %710 = vmatprep.subr.bf16.mxu0 0
  %711 = vmatpush1.bf16.msra.mxu0 0
  %712 = vmatprep.mubr.bf16.mxu0 0
  %713 = vmatmul.mubr.bf16.gmra.mrb[0].mxu0 %v553
  %v714 = vpop.f32.mrb[0].mxu0
  %v715 = vadd.f32 0.0, %v714
  %v716 = vpop.f32.mrb[0].mxu0
  %v717 = vpop.f32.mrb[0].mxu0
  %v718 = vadd.f32 0.0, %v717
  %v719 = vpop.f32.mrb[0].mxu0
  %720 = vmatprep.mubr.bf16.mxu0 0
  %721 = vmatmul.mubr.bf16.gmra.mrb[0].mxu0 %v556
  %v722 = vpop.f32.mrb[0].mxu0
  %v723 = vadd.f32 0.0, %v722
  %v724 = vpop.f32.mrb[0].mxu0
  %v725 = vpop.f32.mrb[0].mxu0
  %v726 = vadd.f32 0.0, %v725
  %v727 = vpop.f32.mrb[0].mxu0
  %728 = vdwg.mxu0
  %v729 = vmul.f32 %v609, %v74
  %v730 = vmul.f32 %v611, %v75
  %v731 = vmul.f32 %v662, %v76
  %v732 = vmul.f32 %v664, %v77
  %v733 = vmul.f32 %v715, %v78
  %v734 = vmul.f32 %v613, %v79
  %v735 = vmul.f32 %v615, %v80
  %v736 = vmul.f32 %v666, %v81
  %v737 = vmul.f32 %v668, %v82
  %v738 = vmul.f32 %v718, %v83
  %v739 = vmul.f32 %v619, %v84
  %v740 = vmul.f32 %v621, %v85
  %v741 = vmul.f32 %v672, %v86
  %v742 = vmul.f32 %v674, %v87
  %v743 = vmul.f32 %v723, %v88
  %v744 = vmul.f32 %v623, %v89
  %v745 = vmul.f32 %v625, %v90
  %v746 = vmul.f32 %v676, %v91
  %v747 = vmul.f32 %v678, %v92
  %v748 = vmul.f32 %v726, %v93
  %v749 = vpack.c.bf16 %v734, %v729
  %v750 = vpack.c.bf16 %v735, %v730
  %v751 = vpack.c.bf16 %v736, %v731
  %v752 = vpack.c.bf16 %v737, %v732
  %v753 = vpack.c.bf16 %v738, %v733
  %v754 = vpack.c.bf16 %v744, %v739
  %v755 = vpack.c.bf16 %v745, %v740
  %v756 = vpack.c.bf16 %v746, %v741
  %v757 = vpack.c.bf16 %v747, %v742
  %v758 = vpack.c.bf16 %v748, %v743
  %v839 = vunpack.c.l.b16 %v109
  %v840 = vunpack.c.l.b16 %v110
  %v841 = vunpack.c.l.b16 %v111
  %v842 = vunpack.c.l.b16 %v112
  %v843 = vunpack.c.l.b16 %v113
  %v844 = vunpack.c.l.b16 %v114
  %v845 = vunpack.c.l.b16 %v115
  %v846 = vunpack.c.l.b16 %v116
  %v847 = vunpack.c.l.b16 %v117
  %v848 = vunpack.c.l.b16 %v118
  %v849 = vunpack.c.l.b16 %v119
  %v850 = vunpack.c.l.b16 %v120
  %v851 = vunpack.c.l.b16 %v121
  %v852 = vunpack.c.l.b16 %v122
  %v853 = vunpack.c.l.b16 %v123
  %v854 = vunpack.c.l.b16 %v124
  %v855 = vunpack.c.l.b16 %v125
  %v856 = vunpack.c.l.b16 %v126
  %v857 = vunpack.c.l.b16 %v127
  %v858 = vunpack.c.l.b16 %v128
  %v859 = vunpack.c.l.b16 %v129
  %v860 = vunpack.c.l.b16 %v130
  %v861 = vunpack.c.l.b16 %v131
  %v862 = vunpack.c.l.b16 %v132
  %v863 = vunpack.c.l.b16 %v133
  %v864 = vunpack.c.l.b16 %v134
  %v865 = vunpack.c.l.b16 %v135
  %v866 = vunpack.c.l.b16 %v136
  %v867 = vunpack.c.l.b16 %v137
  %v868 = vunpack.c.l.b16 %v138
  %v869 = vunpack.c.l.b16 %v139
  %v870 = vunpack.c.l.b16 %v140
  %v871 = vunpack.c.l.b16 %v141
  %v872 = vunpack.c.l.b16 %v142
  %v873 = vunpack.c.l.b16 %v143
  %v874 = vunpack.c.l.b16 %v144
  %v875 = vunpack.c.l.b16 %v145
  %v876 = vunpack.c.l.b16 %v146
  %v877 = vunpack.c.l.b16 %v147
  %v878 = vunpack.c.l.b16 %v148
  %v879 = vunpack.c.l.b16 %v149
  %v880 = vunpack.c.l.b16 %v150
  %v881 = vunpack.c.l.b16 %v151
  %v882 = vunpack.c.l.b16 %v152
  %v883 = vunpack.c.l.b16 %v153
  %v884 = vunpack.c.l.b16 %v154
  %v885 = vunpack.c.l.b16 %v155
  %v886 = vunpack.c.l.b16 %v156
  %v887 = vunpack.c.l.b16 %v157
  %v888 = vunpack.c.l.b16 %v158
  %v889 = vunpack.c.l.b16 %v159
  %v890 = vunpack.c.l.b16 %v160
  %v891 = vunpack.c.l.b16 %v161
  %v892 = vunpack.c.l.b16 %v162
  %v893 = vunpack.c.l.b16 %v163
  %v894 = vunpack.c.l.b16 %v164
  %v895 = vunpack.c.l.b16 %v165
  %v896 = vunpack.c.l.b16 %v166
  %v897 = vunpack.c.l.b16 %v167
  %v898 = vunpack.c.l.b16 %v168
  %v899 = vunpack.c.l.b16 %v169
  %v900 = vunpack.c.l.b16 %v170
  %v901 = vunpack.c.l.b16 %v171
  %v902 = vunpack.c.l.b16 %v172
  %v903 = vunpack.c.l.b16 %v173
  %v904 = vunpack.c.l.b16 %v174
  %v905 = vunpack.c.l.b16 %v175
  %v906 = vunpack.c.l.b16 %v176
  %v907 = vunpack.c.l.b16 %v177
  %v908 = vunpack.c.l.b16 %v178
  %v909 = vunpack.c.l.b16 %v179
  %v910 = vunpack.c.l.b16 %v180
  %v911 = vunpack.c.l.b16 %v181
  %v912 = vunpack.c.l.b16 %v182
  %v913 = vunpack.c.l.b16 %v183
  %v914 = vunpack.c.l.b16 %v184
  %v915 = vunpack.c.l.b16 %v185
  %v916 = vunpack.c.l.b16 %v186
  %v917 = vunpack.c.l.b16 %v187
  %v918 = vunpack.c.l.b16 %v188
  %v919 = vpack.c.b16 %v840, %v839
  %v920 = vpack.c.b16 %v842, %v841
  %v921 = vpack.c.b16 %v844, %v843
  %v922 = vpack.c.b16 %v846, %v845
  %v923 = vpack.c.b16 %v848, %v847
  %v924 = vpack.c.b16 %v850, %v849
  %v925 = vpack.c.b16 %v852, %v851
  %v926 = vpack.c.b16 %v854, %v853
  %v927 = vpack.c.b16 %v856, %v855
  %v928 = vpack.c.b16 %v858, %v857
  %v929 = vpack.c.b16 %v860, %v859
  %v930 = vpack.c.b16 %v862, %v861
  %v931 = vpack.c.b16 %v864, %v863
  %v932 = vpack.c.b16 %v866, %v865
  %v933 = vpack.c.b16 %v868, %v867
  %v934 = vpack.c.b16 %v870, %v869
  %v935 = vpack.c.b16 %v872, %v871
  %v936 = vpack.c.b16 %v874, %v873
  %v937 = vpack.c.b16 %v876, %v875
  %v938 = vpack.c.b16 %v878, %v877
  %v939 = vpack.c.b16 %v880, %v879
  %v940 = vpack.c.b16 %v882, %v881
  %v941 = vpack.c.b16 %v884, %v883
  %v942 = vpack.c.b16 %v886, %v885
  %v943 = vpack.c.b16 %v888, %v887
  %v944 = vpack.c.b16 %v890, %v889
  %v945 = vpack.c.b16 %v892, %v891
  %v946 = vpack.c.b16 %v894, %v893
  %v947 = vpack.c.b16 %v896, %v895
  %v948 = vpack.c.b16 %v898, %v897
  %v949 = vpack.c.b16 %v900, %v899
  %v950 = vpack.c.b16 %v902, %v901
  %v951 = vpack.c.b16 %v904, %v903
  %v952 = vpack.c.b16 %v906, %v905
  %v953 = vpack.c.b16 %v908, %v907
  %v954 = vpack.c.b16 %v910, %v909
  %v955 = vpack.c.b16 %v912, %v911
  %v956 = vpack.c.b16 %v914, %v913
  %v957 = vpack.c.b16 %v916, %v915
  %v958 = vpack.c.b16 %v918, %v917
  %999 = vmatprep.subr.bf16.mxu0 0
  %1000 = vmatpush1.bf16.msra.mxu0 %v919
  %1001 = vmatprep.subr.bf16.mxu0 0
  %1002 = vmatpush1.bf16.msra.mxu0 %v920
  %1003 = vmatprep.subr.bf16.mxu0 0
  %1004 = vmatpush1.bf16.msra.mxu0 %v921
  %1005 = vmatprep.subr.bf16.mxu0 0
  %1006 = vmatpush1.bf16.msra.mxu0 %v922
  %1007 = vmatprep.subr.bf16.mxu0 0
  %1008 = vmatpush1.bf16.msra.mxu0 %v923
  %1009 = vmatprep.subr.bf16.mxu0 0
  %1010 = vmatpush1.bf16.msra.mxu0 %v924
  %1011 = vmatprep.subr.bf16.mxu0 0
  %1012 = vmatpush1.bf16.msra.mxu0 %v925
  %1013 = vmatprep.subr.bf16.mxu0 0
  %1014 = vmatpush1.bf16.msra.mxu0 %v926
  %1015 = vmatprep.subr.bf16.mxu0 0
  %1016 = vmatpush1.bf16.msra.mxu0 %v927
  %1017 = vmatprep.subr.bf16.mxu0 0
  %1018 = vmatpush1.bf16.msra.mxu0 %v928
  %1019 = vmatprep.subr.bf16.mxu0 0
  %1020 = vmatpush1.bf16.msra.mxu0 %v929
  %1021 = vmatprep.subr.bf16.mxu0 0
  %1022 = vmatpush1.bf16.msra.mxu0 %v930
  %1023 = vmatprep.subr.bf16.mxu0 0
  %1024 = vmatpush1.bf16.msra.mxu0 %v931
  %1025 = vmatprep.subr.bf16.mxu0 0
  %1026 = vmatpush1.bf16.msra.mxu0 %v932
  %1027 = vmatprep.subr.bf16.mxu0 0
  %1028 = vmatpush1.bf16.msra.mxu0 %v933
  %1029 = vmatprep.subr.bf16.mxu0 0
  %1030 = vmatpush1.bf16.msra.mxu0 %v934
  %1031 = vmatprep.mubr.bf16.mxu0 %v750
  %1032 = vmatmul.mubr.bf16.gmra.mrb[0].mxu0 %v749
  %v1033 = vpop.f32.mrb[0].mxu0
  %v1034 = vadd.f32 0.0, %v1033
  %v1035 = vpop.f32.mrb[0].mxu0
  %v1036 = vpop.f32.mrb[0].mxu0
  %v1037 = vadd.f32 0.0, %v1036
  %v1038 = vpop.f32.mrb[0].mxu0
  %1039 = vmatprep.mubr.bf16.mxu0 %v755
  %1040 = vmatmul.mubr.bf16.gmra.mrb[0].mxu0 %v754
  %v1041 = vpop.f32.mrb[0].mxu0
  %v1042 = vadd.f32 0.0, %v1041
  %v1043 = vpop.f32.mrb[0].mxu0
  %v1044 = vpop.f32.mrb[0].mxu0
  %v1045 = vadd.f32 0.0, %v1044
  %v1046 = vpop.f32.mrb[0].mxu0
  %1047 = vdwg.mxu0
  %1048 = vmatprep.subr.bf16.mxu0 0
  %1049 = vmatpush1.bf16.msra.mxu0 %v935
  %1050 = vmatprep.subr.bf16.mxu0 0
  %1051 = vmatpush1.bf16.msra.mxu0 %v936
  %1052 = vmatprep.subr.bf16.mxu0 0
  %1053 = vmatpush1.bf16.msra.mxu0 %v937
  %1054 = vmatprep.subr.bf16.mxu0 0
  %1055 = vmatpush1.bf16.msra.mxu0 %v938
  %1056 = vmatprep.subr.bf16.mxu0 0
  %1057 = vmatpush1.bf16.msra.mxu0 %v939
  %1058 = vmatprep.subr.bf16.mxu0 0
  %1059 = vmatpush1.bf16.msra.mxu0 %v940
  %1060 = vmatprep.subr.bf16.mxu0 0
  %1061 = vmatpush1.bf16.msra.mxu0 %v941
  %1062 = vmatprep.subr.bf16.mxu0 0
  %1063 = vmatpush1.bf16.msra.mxu0 %v942
  %1064 = vmatprep.subr.bf16.mxu0 0
  %1065 = vmatpush1.bf16.msra.mxu0 %v943
  %1066 = vmatprep.subr.bf16.mxu0 0
  %1067 = vmatpush1.bf16.msra.mxu0 %v944
  %1068 = vmatprep.subr.bf16.mxu0 0
  %1069 = vmatpush1.bf16.msra.mxu0 %v945
  %1070 = vmatprep.subr.bf16.mxu0 0
  %1071 = vmatpush1.bf16.msra.mxu0 %v946
  %1072 = vmatprep.subr.bf16.mxu0 0
  %1073 = vmatpush1.bf16.msra.mxu0 %v947
  %1074 = vmatprep.subr.bf16.mxu0 0
  %1075 = vmatpush1.bf16.msra.mxu0 %v948
  %1076 = vmatprep.subr.bf16.mxu0 0
  %1077 = vmatpush1.bf16.msra.mxu0 %v949
  %1078 = vmatprep.subr.bf16.mxu0 0
  %1079 = vmatpush1.bf16.msra.mxu0 %v950
  %1080 = vmatprep.mubr.bf16.mxu0 %v752
  %1081 = vmatmul.mubr.bf16.gmra.mrb[0].mxu0 %v751
  %v1082 = vpop.f32.mrb[0].mxu0
  %v1083 = vadd.f32 %v1034, %v1082
  %v1084 = vpop.f32.mrb[0].mxu0
  %v1085 = vpop.f32.mrb[0].mxu0
  %v1086 = vadd.f32 %v1037, %v1085
  %v1087 = vpop.f32.mrb[0].mxu0
  %1088 = vmatprep.mubr.bf16.mxu0 %v757
  %1089 = vmatmul.mubr.bf16.gmra.mrb[0].mxu0 %v756
  %v1090 = vpop.f32.mrb[0].mxu0
  %v1091 = vadd.f32 %v1042, %v1090
  %v1092 = vpop.f32.mrb[0].mxu0
  %v1093 = vpop.f32.mrb[0].mxu0
  %v1094 = vadd.f32 %v1045, %v1093
  %v1095 = vpop.f32.mrb[0].mxu0
  %1096 = vdwg.mxu0
  %1097 = vmatprep.subr.bf16.mxu0 0
  %1098 = vmatpush1.bf16.msra.mxu0 %v951
  %1099 = vmatprep.subr.bf16.mxu0 0
  %1100 = vmatpush1.bf16.msra.mxu0 %v952
  %1101 = vmatprep.subr.bf16.mxu0 0
  %1102 = vmatpush1.bf16.msra.mxu0 %v953
  %1103 = vmatprep.subr.bf16.mxu0 0
  %1104 = vmatpush1.bf16.msra.mxu0 %v954
  %1105 = vmatprep.subr.bf16.mxu0 0
  %1106 = vmatpush1.bf16.msra.mxu0 %v955
  %1107 = vmatprep.subr.bf16.mxu0 0
  %1108 = vmatpush1.bf16.msra.mxu0 %v956
  %1109 = vmatprep.subr.bf16.mxu0 0
  %1110 = vmatpush1.bf16.msra.mxu0 %v957
  %1111 = vmatprep.subr.bf16.mxu0 0
  %1112 = vmatpush1.bf16.msra.mxu0 %v958
  %1113 = vmatprep.subr.bf16.mxu0 0
  %1114 = vmatpush1.bf16.msra.mxu0 0
  %1115 = vmatprep.subr.bf16.mxu0 0
  %1116 = vmatpush1.bf16.msra.mxu0 0
  %1117 = vmatprep.subr.bf16.mxu0 0
  %1118 = vmatpush1.bf16.msra.mxu0 0
  %1119 = vmatprep.subr.bf16.mxu0 0
  %1120 = vmatpush1.bf16.msra.mxu0 0
  %1121 = vmatprep.subr.bf16.mxu0 0
  %1122 = vmatpush1.bf16.msra.mxu0 0
  %1123 = vmatprep.subr.bf16.mxu0 0
  %1124 = vmatpush1.bf16.msra.mxu0 0
  %1125 = vmatprep.subr.bf16.mxu0 0
  %1126 = vmatpush1.bf16.msra.mxu0 0
  %1127 = vmatprep.subr.bf16.mxu0 0
  %1128 = vmatpush1.bf16.msra.mxu0 0
  %1129 = vmatprep.mubr.bf16.mxu0 0
  %1130 = vmatmul.mubr.bf16.gmra.mrb[0].mxu0 %v753
  %v1131 = vpop.f32.mrb[0].mxu0
  %v1132 = vadd.f32 %v1083, %v1131
  %v1133 = vpop.f32.mrb[0].mxu0
  %v1134 = vpop.f32.mrb[0].mxu0
  %v1135 = vadd.f32 %v1086, %v1134
  %v1136 = vpop.f32.mrb[0].mxu0
  %1137 = vmatprep.mubr.bf16.mxu0 0
  %1138 = vmatmul.mubr.bf16.gmra.mrb[0].mxu0 %v758
  %v1139 = vpop.f32.mrb[0].mxu0
  %v1140 = vadd.f32 %v1091, %v1139
  %v1141 = vpop.f32.mrb[0].mxu0
  %v1142 = vpop.f32.mrb[0].mxu0
  %v1143 = vadd.f32 %v1094, %v1142
  %v1144 = vpop.f32.mrb[0].mxu0
  %1145 = vdwg.mxu0
  %1154 = vrot.lane.b32.xlu0 %v222, 32
  %v1155 = vpop.permute.xlu0 %1154
  %1156 = vrot.lane.b32.xlu0 %v223, 32
  %v1157 = vpop.permute.xlu0 %1156
  %1158 = vrot.lane.b32.xlu0 %v224, 32
  %v1159 = vpop.permute.xlu0 %1158
  %1160 = vrot.lane.b32.xlu0 %v225, 32
  %v1161 = vpop.permute.xlu0 %1160
  %1162 = vrot.lane.b32.xlu0 %v226, 32
  %v1163 = vpop.permute.xlu0 %1162
  %1164 = vrot.lane.b32.xlu0 %v227, 32
  %v1165 = vpop.permute.xlu0 %1164
  %1166 = vrot.lane.b32.xlu0 %v228, 32
  %v1167 = vpop.permute.xlu0 %1166
  %1168 = vrot.lane.b32.xlu0 %v229, 32
  %v1169 = vpop.permute.xlu0 %1168
  %v1178 = vmul.f32 %v401, %v1155
  %v1179 = vmul.f32 %v404, %v1157
  %v1180 = vmul.f32 %v401, %v1159
  %v1181 = vmul.f32 %v404, %v1161
  %v1182 = vmul.f32 %v401, %v1163
  %v1183 = vmul.f32 %v404, %v1165
  %v1184 = vmul.f32 %v401, %v1167
  %v1185 = vmul.f32 %v404, %v1169
  %v1186 = vpack.c.bf16 %v1179, %v1178
  %v1187 = vpack.c.bf16 %v1181, %v1180
  %v1188 = vpack.c.bf16 %v1183, %v1182
  %v1189 = vpack.c.bf16 %v1185, %v1184
  %1190 = vrot.lane.b32.xlu0 %v222, 64
  %v1191 = vpop.permute.xlu0 %1190
  %1192 = vrot.lane.b32.xlu0 %v223, 64
  %v1193 = vpop.permute.xlu0 %1192
  %1194 = vrot.lane.b32.xlu0 %v224, 64
  %v1195 = vpop.permute.xlu0 %1194
  %1196 = vrot.lane.b32.xlu0 %v225, 64
  %v1197 = vpop.permute.xlu0 %1196
  %1198 = vrot.lane.b32.xlu0 %v226, 64
  %v1199 = vpop.permute.xlu0 %1198
  %1200 = vrot.lane.b32.xlu0 %v227, 64
  %v1201 = vpop.permute.xlu0 %1200
  %1202 = vrot.lane.b32.xlu0 %v228, 64
  %v1203 = vpop.permute.xlu0 %1202
  %1204 = vrot.lane.b32.xlu0 %v229, 64
  %v1205 = vpop.permute.xlu0 %1204
  %v1214 = vmul.f32 %v401, %v1191
  %v1215 = vmul.f32 %v404, %v1193
  %v1216 = vmul.f32 %v401, %v1195
  %v1217 = vmul.f32 %v404, %v1197
  %v1218 = vmul.f32 %v401, %v1199
  %v1219 = vmul.f32 %v404, %v1201
  %v1220 = vmul.f32 %v401, %v1203
  %v1221 = vmul.f32 %v404, %v1205
  %v1222 = vpack.c.bf16 %v1215, %v1214
  %v1223 = vpack.c.bf16 %v1217, %v1216
  %v1224 = vpack.c.bf16 %v1219, %v1218
  %v1225 = vpack.c.bf16 %v1221, %v1220
  %1230 = vrot.lane.b32.xlu0 %v1186, 96
  %v1231 = vpop.permute.xlu0 %1230
  %1232 = vrot.lane.b32.xlu0 %v1187, 96
  %v1233 = vpop.permute.xlu0 %1232
  %1234 = vrot.lane.b32.xlu0 %v1188, 96
  %v1235 = vpop.permute.xlu0 %1234
  %1236 = vrot.lane.b32.xlu0 %v1189, 96
  %v1237 = vpop.permute.xlu0 %1236
  %v1239 = vsel %vm359, %v1231, 0
  %v1242 = vsel %vm359, %v1233, 0
  %v1245 = vsel %vm359, %v1235, 0
  %v1248 = vsel %vm359, %v1237, 0
  %1250 = vmatprep.subr.bf16.mxu0 0
  %1251 = vmatpush1.bf16.xpose.msra.mxu0 %v1239
  %1252 = vmatprep.subr.bf16.mxu0 0
  %1253 = vmatpush1.bf16.xpose.msra.mxu0 %v1242
  %1254 = vmatprep.subr.bf16.mxu0 0
  %1255 = vmatpush1.bf16.xpose.msra.mxu0 %v1245
  %1256 = vmatprep.subr.bf16.mxu0 0
  %1257 = vmatpush1.bf16.xpose.msra.mxu0 %v1248
  %1258 = vmatprep.subr.bf16.mxu0 0
  %1259 = vmatpush1.bf16.xpose.msra.mxu0 0
  %1260 = vmatprep.subr.bf16.mxu0 0
  %1261 = vmatpush1.bf16.xpose.msra.mxu0 0
  %1262 = vmatprep.subr.bf16.mxu0 0
  %1263 = vmatpush1.bf16.xpose.msra.mxu0 0
  %1264 = vmatprep.subr.bf16.mxu0 0
  %1265 = vmatpush1.bf16.xpose.msra.mxu0 0
  %1266 = vmatprep.subr.bf16.mxu0 0
  %1267 = vmatpush1.bf16.xpose.msra.mxu0 0
  %1268 = vmatprep.subr.bf16.mxu0 0
  %1269 = vmatpush1.bf16.xpose.msra.mxu0 0
  %1270 = vmatprep.subr.bf16.mxu0 0
  %1271 = vmatpush1.bf16.xpose.msra.mxu0 0
  %1272 = vmatprep.subr.bf16.mxu0 0
  %1273 = vmatpush1.bf16.xpose.msra.mxu0 0
  %1274 = vmatprep.subr.bf16.mxu0 0
  %1275 = vmatpush1.bf16.xpose.msra.mxu0 0
  %1276 = vmatprep.subr.bf16.mxu0 0
  %1277 = vmatpush1.bf16.xpose.msra.mxu0 0
  %1278 = vmatprep.subr.bf16.mxu0 0
  %1279 = vmatpush1.bf16.xpose.msra.mxu0 0
  %1280 = vmatprep.subr.bf16.mxu0 0
  %1281 = vmatpush1.bf16.xpose.msra.mxu0 0
  %1282 = vmatprep.mubr.bf16.mxu0 0
  %1283 = vmatmul.mubr.bf16.gmra.mrb[0].mxu0 %v430
  %v1284 = vpop.f32.mrb[0].mxu0
  %v1285 = vadd.f32 0.0, %v1284
  %v1286 = vpop.f32.mrb[0].mxu0
  %v1287 = vpop.f32.mrb[0].mxu0
  %v1288 = vadd.f32 0.0, %v1287
  %v1289 = vpop.f32.mrb[0].mxu0
  %1290 = vdwg.mxu0
  %v1291 = vmul.f32 %v409, %v1155
  %v1292 = vmul.f32 %v412, %v1157
  %v1293 = vmul.f32 %v409, %v1159
  %v1294 = vmul.f32 %v412, %v1161
  %v1295 = vmul.f32 %v409, %v1163
  %v1296 = vmul.f32 %v412, %v1165
  %v1297 = vmul.f32 %v409, %v1167
  %v1298 = vmul.f32 %v412, %v1169
  %v1299 = vpack.c.bf16 %v1292, %v1291
  %v1300 = vpack.c.bf16 %v1294, %v1293
  %v1301 = vpack.c.bf16 %v1296, %v1295
  %v1302 = vpack.c.bf16 %v1298, %v1297
  %v1303 = vmul.f32 %v409, %v1191
  %v1304 = vmul.f32 %v412, %v1193
  %v1305 = vmul.f32 %v409, %v1195
  %v1306 = vmul.f32 %v412, %v1197
  %v1307 = vmul.f32 %v409, %v1199
  %v1308 = vmul.f32 %v412, %v1201
  %v1309 = vmul.f32 %v409, %v1203
  %v1310 = vmul.f32 %v412, %v1205
  %v1311 = vpack.c.bf16 %v1304, %v1303
  %v1312 = vpack.c.bf16 %v1306, %v1305
  %v1313 = vpack.c.bf16 %v1308, %v1307
  %v1314 = vpack.c.bf16 %v1310, %v1309
  %1319 = vrot.lane.b32.xlu0 %v1299, 96
  %v1320 = vpop.permute.xlu0 %1319
  %1321 = vrot.lane.b32.xlu0 %v1300, 96
  %v1322 = vpop.permute.xlu0 %1321
  %1323 = vrot.lane.b32.xlu0 %v1301, 96
  %v1324 = vpop.permute.xlu0 %1323
  %1325 = vrot.lane.b32.xlu0 %v1302, 96
  %v1326 = vpop.permute.xlu0 %1325
  %v1328 = vsel %vm359, %v1320, 0
  %v1331 = vsel %vm359, %v1322, 0
  %v1334 = vsel %vm359, %v1324, 0
  %v1337 = vsel %vm359, %v1326, 0
  %1339 = vmatprep.subr.bf16.mxu0 0
  %1340 = vmatpush1.bf16.xpose.msra.mxu0 %v1328
  %1341 = vmatprep.subr.bf16.mxu0 0
  %1342 = vmatpush1.bf16.xpose.msra.mxu0 %v1331
  %1343 = vmatprep.subr.bf16.mxu0 0
  %1344 = vmatpush1.bf16.xpose.msra.mxu0 %v1334
  %1345 = vmatprep.subr.bf16.mxu0 0
  %1346 = vmatpush1.bf16.xpose.msra.mxu0 %v1337
  %1347 = vmatprep.subr.bf16.mxu0 0
  %1348 = vmatpush1.bf16.xpose.msra.mxu0 0
  %1349 = vmatprep.subr.bf16.mxu0 0
  %1350 = vmatpush1.bf16.xpose.msra.mxu0 0
  %1351 = vmatprep.subr.bf16.mxu0 0
  %1352 = vmatpush1.bf16.xpose.msra.mxu0 0
  %1353 = vmatprep.subr.bf16.mxu0 0
  %1354 = vmatpush1.bf16.xpose.msra.mxu0 0
  %1355 = vmatprep.subr.bf16.mxu0 0
  %1356 = vmatpush1.bf16.xpose.msra.mxu0 0
  %1357 = vmatprep.subr.bf16.mxu0 0
  %1358 = vmatpush1.bf16.xpose.msra.mxu0 0
  %1359 = vmatprep.subr.bf16.mxu0 0
  %1360 = vmatpush1.bf16.xpose.msra.mxu0 0
  %1361 = vmatprep.subr.bf16.mxu0 0
  %1362 = vmatpush1.bf16.xpose.msra.mxu0 0
  %1363 = vmatprep.subr.bf16.mxu0 0
  %1364 = vmatpush1.bf16.xpose.msra.mxu0 0
  %1365 = vmatprep.subr.bf16.mxu0 0
  %1366 = vmatpush1.bf16.xpose.msra.mxu0 0
  %1367 = vmatprep.subr.bf16.mxu0 0
  %1368 = vmatpush1.bf16.xpose.msra.mxu0 0
  %1369 = vmatprep.subr.bf16.mxu0 0
  %1370 = vmatpush1.bf16.xpose.msra.mxu0 0
  %1371 = vmatprep.mubr.bf16.mxu0 0
  %1372 = vmatmul.mubr.bf16.gmra.mrb[0].mxu0 %v433
  %v1373 = vpop.f32.mrb[0].mxu0
  %v1374 = vadd.f32 0.0, %v1373
  %v1375 = vpop.f32.mrb[0].mxu0
  %v1376 = vpop.f32.mrb[0].mxu0
  %v1377 = vadd.f32 0.0, %v1376
  %v1378 = vpop.f32.mrb[0].mxu0
  %1379 = vdwg.mxu0
  %v1380 = vadd.f32 %v1285, %v1132
  %v1381 = vadd.f32 %v1288, %v1135
  %v1382 = vadd.f32 %v1374, %v1140
  %v1383 = vadd.f32 %v1377, %v1143
  %v1384 = vadd.f32 %v1380, %v70
  %v1385 = vadd.f32 %v1381, %v71
  %v1386 = vadd.f32 %v1382, %v72
  %v1387 = vadd.f32 %v1383, %v73
  %vm1388 = vcmask 523264
  %v1389 = vsel %vm1388, %v1384, -inf
  %1390 = vmax.xlane.f32.xlu0 %v1389
  %v1391 = vpop.xlane.xlu0 %1390
  %v1392 = vsel %vm1388, %v1385, -inf
  %1393 = vmax.xlane.f32.xlu0 %v1392
  %v1394 = vpop.xlane.xlu0 %1393
  %v1395 = vsel %vm1388, %v1386, -inf
  %1396 = vmax.xlane.f32.xlu0 %v1395
  %v1397 = vpop.xlane.xlu0 %1396
  %v1398 = vsel %vm1388, %v1387, -inf
  %1399 = vmax.xlane.f32.xlu0 %v1398
  %v1400 = vpop.xlane.xlu0 %1399
  %v1401 = vsub.f32 %v1384, %v1391
  %v1402 = vsub.f32 %v1385, %v1394
  %v1403 = vsub.f32 %v1386, %v1397
  %v1404 = vsub.f32 %v1387, %v1400
  %v1405 = vmul.f32 %v1401, 1.442695
  %v1406 = vpow.pop %v1405
  %v1407 = vmul.f32 %v1402, 1.442695
  %v1408 = vpow.pop %v1407
  %v1409 = vmul.f32 %v1403, 1.442695
  %v1410 = vpow.pop %v1409
  %v1411 = vmul.f32 %v1404, 1.442695
  %v1412 = vpow.pop %v1411
  %v1413 = vpack.c.bf16 %v1408, %v1406
  %v1414 = vpack.c.bf16 %v1412, %v1410
  %v1423 = vunpack.c.l.b16 %v213
  %v1424 = vunpack.c.l.b16 %v214
  %v1425 = vunpack.c.l.b16 %v215
  %v1426 = vunpack.c.l.b16 %v216
  %v1427 = vunpack.c.l.b16 %v217
  %v1428 = vunpack.c.l.b16 %v218
  %v1429 = vunpack.c.l.b16 %v219
  %v1430 = vunpack.c.l.b16 %v220
  %v1431 = vpack.c.b16 %v1424, %v1423
  %v1432 = vpack.c.b16 %v1426, %v1425
  %v1433 = vpack.c.b16 %v1428, %v1427
  %v1434 = vpack.c.b16 %v1430, %v1429
  %v1440 = vsel %vm1388, %v1413, 0
  %v1443 = vsel %vm1388, %v1414, 0
  %1445 = vmatprep.subr.bf16.mxu0 0
  %1446 = vmatpush1.bf16.msra.mxu0 %v1431
  %1447 = vmatprep.subr.bf16.mxu0 0
  %1448 = vmatpush1.bf16.msra.mxu0 %v1432
  %1449 = vmatprep.subr.bf16.mxu0 0
  %1450 = vmatpush1.bf16.msra.mxu0 %v1433
  %1451 = vmatprep.subr.bf16.mxu0 0
  %1452 = vmatpush1.bf16.msra.mxu0 %v1434
  %1453 = vmatprep.subr.bf16.mxu0 0
  %1454 = vmatpush1.bf16.msra.mxu0 0
  %1455 = vmatprep.subr.bf16.mxu0 0
  %1456 = vmatpush1.bf16.msra.mxu0 0
  %1457 = vmatprep.subr.bf16.mxu0 0
  %1458 = vmatpush1.bf16.msra.mxu0 0
  %1459 = vmatprep.subr.bf16.mxu0 0
  %1460 = vmatpush1.bf16.msra.mxu0 0
  %1461 = vmatprep.subr.bf16.mxu0 0
  %1462 = vmatpush1.bf16.msra.mxu0 0
  %1463 = vmatprep.subr.bf16.mxu0 0
  %1464 = vmatpush1.bf16.msra.mxu0 0
  %1465 = vmatprep.subr.bf16.mxu0 0
  %1466 = vmatpush1.bf16.msra.mxu0 0
  %1467 = vmatprep.subr.bf16.mxu0 0
  %1468 = vmatpush1.bf16.msra.mxu0 0
  %1469 = vmatprep.subr.bf16.mxu0 0
  %1470 = vmatpush1.bf16.msra.mxu0 0
  %1471 = vmatprep.subr.bf16.mxu0 0
  %1472 = vmatpush1.bf16.msra.mxu0 0
  %1473 = vmatprep.subr.bf16.mxu0 0
  %1474 = vmatpush1.bf16.msra.mxu0 0
  %1475 = vmatprep.subr.bf16.mxu0 0
  %1476 = vmatpush1.bf16.msra.mxu0 0
  %1477 = vmatprep.mubr.bf16.mxu0 0
  %1478 = vmatmul.mubr.bf16.gmra.mrb[0].mxu0 %v1440
  %v1479 = vpop.f32.mrb[0].mxu0
  %v1480 = vadd.f32 0.0, %v1479
  %v1481 = vpop.f32.mrb[0].mxu0
  %v1482 = vpop.f32.mrb[0].mxu0
  %v1483 = vadd.f32 0.0, %v1482
  %v1484 = vpop.f32.mrb[0].mxu0
  %1485 = vmatprep.mubr.bf16.mxu0 0
  %1486 = vmatmul.mubr.bf16.gmra.mrb[0].mxu0 %v1443
  %v1487 = vpop.f32.mrb[0].mxu0
  %v1488 = vadd.f32 0.0, %v1487
  %v1489 = vpop.f32.mrb[0].mxu0
  %v1490 = vpop.f32.mrb[0].mxu0
  %v1491 = vadd.f32 0.0, %v1490
  %v1492 = vpop.f32.mrb[0].mxu0
  %1493 = vdwg.mxu0
  %v1494 = vrcp.pop %v1480
  %v1495 = vrcp.pop %v1483
  %v1496 = vrcp.pop %v1488
  %v1497 = vrcp.pop %v1491
  %v1498 = vpack.c.bf16 %v1495, %v1494
  %v1499 = vpack.c.bf16 %v1497, %v1496
  %vm1500 = vcmask 31744
  %v1502 = vsel %vm1500, %v1498, 0
  %v1505 = vsel %vm1500, %v1499, 0
  %v1508 = vsel %vm558, %v221, 0
  %1510 = vmatprep.subr.bf16.mxu0 0
  %1511 = vmatpush1.bf16.msra.mxu0 %v1508
  %1512 = vmatprep.subr.bf16.mxu0 0
  %1513 = vmatpush1.bf16.msra.mxu0 0
  %1514 = vmatprep.subr.bf16.mxu0 0
  %1515 = vmatpush1.bf16.msra.mxu0 0
  %1516 = vmatprep.subr.bf16.mxu0 0
  %1517 = vmatpush1.bf16.msra.mxu0 0
  %1518 = vmatprep.subr.bf16.mxu0 0
  %1519 = vmatpush1.bf16.msra.mxu0 0
  %1520 = vmatprep.subr.bf16.mxu0 0
  %1521 = vmatpush1.bf16.msra.mxu0 0
  %1522 = vmatprep.subr.bf16.mxu0 0
  %1523 = vmatpush1.bf16.msra.mxu0 0
  %1524 = vmatprep.subr.bf16.mxu0 0
  %1525 = vmatpush1.bf16.msra.mxu0 0
  %1526 = vmatprep.subr.bf16.mxu0 0
  %1527 = vmatpush1.bf16.msra.mxu0 0
  %1528 = vmatprep.subr.bf16.mxu0 0
  %1529 = vmatpush1.bf16.msra.mxu0 0
  %1530 = vmatprep.subr.bf16.mxu0 0
  %1531 = vmatpush1.bf16.msra.mxu0 0
  %1532 = vmatprep.subr.bf16.mxu0 0
  %1533 = vmatpush1.bf16.msra.mxu0 0
  %1534 = vmatprep.subr.bf16.mxu0 0
  %1535 = vmatpush1.bf16.msra.mxu0 0
  %1536 = vmatprep.subr.bf16.mxu0 0
  %1537 = vmatpush1.bf16.msra.mxu0 0
  %1538 = vmatprep.subr.bf16.mxu0 0
  %1539 = vmatpush1.bf16.msra.mxu0 0
  %1540 = vmatprep.subr.bf16.mxu0 0
  %1541 = vmatpush1.bf16.msra.mxu0 0
  %1542 = vmatprep.mubr.bf16.mxu0 0
  %1543 = vmatmul.mubr.bf16.gmra.mrb[0].mxu0 %v1502
  %v1544 = vpop.f32.mrb[0].mxu0
  %v1545 = vadd.f32 0.0, %v1544
  %v1546 = vpop.f32.mrb[0].mxu0
  %v1547 = vpop.f32.mrb[0].mxu0
  %v1548 = vadd.f32 0.0, %v1547
  %v1549 = vpop.f32.mrb[0].mxu0
  %1550 = vmatprep.mubr.bf16.mxu0 0
  %1551 = vmatmul.mubr.bf16.gmra.mrb[0].mxu0 %v1505
  %v1552 = vpop.f32.mrb[0].mxu0
  %v1553 = vadd.f32 0.0, %v1552
  %v1554 = vpop.f32.mrb[0].mxu0
  %v1555 = vpop.f32.mrb[0].mxu0
  %v1556 = vadd.f32 0.0, %v1555
  %v1557 = vpop.f32.mrb[0].mxu0
  %1558 = vdwg.mxu0
  %v1559 = vmul.f32 %v1406, %v1545
  %v1560 = vmul.f32 %v1408, %v1548
  %v1561 = vmul.f32 %v1410, %v1553
  %v1562 = vmul.f32 %v1412, %v1556
  %v1563 = vpack.c.bf16 %v1560, %v1559
  %v1564 = vpack.c.bf16 %v1562, %v1561
  %1569 = vrot.lane.b32.xlu0 %v1222, 64
  %v1570 = vpop.permute.xlu0 %1569
  %1571 = vrot.lane.b32.xlu0 %v1223, 64
  %v1572 = vpop.permute.xlu0 %1571
  %1573 = vrot.lane.b32.xlu0 %v1224, 64
  %v1574 = vpop.permute.xlu0 %1573
  %1575 = vrot.lane.b32.xlu0 %v1225, 64
  %v1576 = vpop.permute.xlu0 %1575
  %v1582 = vsel %vm1388, %v1563, 0
  %1584 = vmatprep.subr.bf16.mxu0 0
  %1585 = vmatpush1.bf16.msra.mxu0 %v1570
  %1586 = vmatprep.subr.bf16.mxu0 0
  %1587 = vmatpush1.bf16.msra.mxu0 %v1572
  %1588 = vmatprep.subr.bf16.mxu0 0
  %1589 = vmatpush1.bf16.msra.mxu0 %v1574
  %1590 = vmatprep.subr.bf16.mxu0 0
  %1591 = vmatpush1.bf16.msra.mxu0 %v1576
  %1592 = vmatprep.subr.bf16.mxu0 0
  %1593 = vmatpush1.bf16.msra.mxu0 0
  %1594 = vmatprep.subr.bf16.mxu0 0
  %1595 = vmatpush1.bf16.msra.mxu0 0
  %1596 = vmatprep.subr.bf16.mxu0 0
  %1597 = vmatpush1.bf16.msra.mxu0 0
  %1598 = vmatprep.subr.bf16.mxu0 0
  %1599 = vmatpush1.bf16.msra.mxu0 0
  %1600 = vmatprep.subr.bf16.mxu0 0
  %1601 = vmatpush1.bf16.msra.mxu0 0
  %1602 = vmatprep.subr.bf16.mxu0 0
  %1603 = vmatpush1.bf16.msra.mxu0 0
  %1604 = vmatprep.subr.bf16.mxu0 0
  %1605 = vmatpush1.bf16.msra.mxu0 0
  %1606 = vmatprep.subr.bf16.mxu0 0
  %1607 = vmatpush1.bf16.msra.mxu0 0
  %1608 = vmatprep.subr.bf16.mxu0 0
  %1609 = vmatpush1.bf16.msra.mxu0 0
  %1610 = vmatprep.subr.bf16.mxu0 0
  %1611 = vmatpush1.bf16.msra.mxu0 0
  %1612 = vmatprep.subr.bf16.mxu0 0
  %1613 = vmatpush1.bf16.msra.mxu0 0
  %1614 = vmatprep.subr.bf16.mxu0 0
  %1615 = vmatpush1.bf16.msra.mxu0 0
  %1616 = vmatprep.mubr.bf16.mxu0 0
  %1617 = vmatmul.mubr.bf16.gmra.mrb[0].mxu0 %v1582
  %v1618 = vpop.f32.mrb[0].mxu0
  %v1619 = vadd.f32 0.0, %v1618
  %v1620 = vpop.f32.mrb[0].mxu0
  %v1621 = vpop.f32.mrb[0].mxu0
  %v1622 = vadd.f32 0.0, %v1621
  %v1623 = vpop.f32.mrb[0].mxu0
  %1624 = vdwg.mxu0
  %1629 = vrot.lane.b32.xlu0 %v1311, 64
  %v1630 = vpop.permute.xlu0 %1629
  %1631 = vrot.lane.b32.xlu0 %v1312, 64
  %v1632 = vpop.permute.xlu0 %1631
  %1633 = vrot.lane.b32.xlu0 %v1313, 64
  %v1634 = vpop.permute.xlu0 %1633
  %1635 = vrot.lane.b32.xlu0 %v1314, 64
  %v1636 = vpop.permute.xlu0 %1635
  %v1642 = vsel %vm1388, %v1564, 0
  %1644 = vmatprep.subr.bf16.mxu0 0
  %1645 = vmatpush1.bf16.msra.mxu0 %v1630
  %1646 = vmatprep.subr.bf16.mxu0 0
  %1647 = vmatpush1.bf16.msra.mxu0 %v1632
  %1648 = vmatprep.subr.bf16.mxu0 0
  %1649 = vmatpush1.bf16.msra.mxu0 %v1634
  %1650 = vmatprep.subr.bf16.mxu0 0
  %1651 = vmatpush1.bf16.msra.mxu0 %v1636
  %1652 = vmatprep.subr.bf16.mxu0 0
  %1653 = vmatpush1.bf16.msra.mxu0 0
  %1654 = vmatprep.subr.bf16.mxu0 0
  %1655 = vmatpush1.bf16.msra.mxu0 0
  %1656 = vmatprep.subr.bf16.mxu0 0
  %1657 = vmatpush1.bf16.msra.mxu0 0
  %1658 = vmatprep.subr.bf16.mxu0 0
  %1659 = vmatpush1.bf16.msra.mxu0 0
  %1660 = vmatprep.subr.bf16.mxu0 0
  %1661 = vmatpush1.bf16.msra.mxu0 0
  %1662 = vmatprep.subr.bf16.mxu0 0
  %1663 = vmatpush1.bf16.msra.mxu0 0
  %1664 = vmatprep.subr.bf16.mxu0 0
  %1665 = vmatpush1.bf16.msra.mxu0 0
  %1666 = vmatprep.subr.bf16.mxu0 0
  %1667 = vmatpush1.bf16.msra.mxu0 0
  %1668 = vmatprep.subr.bf16.mxu0 0
  %1669 = vmatpush1.bf16.msra.mxu0 0
  %1670 = vmatprep.subr.bf16.mxu0 0
  %1671 = vmatpush1.bf16.msra.mxu0 0
  %1672 = vmatprep.subr.bf16.mxu0 0
  %1673 = vmatpush1.bf16.msra.mxu0 0
  %1674 = vmatprep.subr.bf16.mxu0 0
  %1675 = vmatpush1.bf16.msra.mxu0 0
  %1676 = vmatprep.mubr.bf16.mxu0 0
  %1677 = vmatmul.mubr.bf16.gmra.mrb[0].mxu0 %v1642
  %v1678 = vpop.f32.mrb[0].mxu0
  %v1679 = vadd.f32 0.0, %v1678
  %v1680 = vpop.f32.mrb[0].mxu0
  %v1681 = vpop.f32.mrb[0].mxu0
  %v1682 = vadd.f32 0.0, %v1681
  %v1683 = vpop.f32.mrb[0].mxu0
  %1684 = vdwg.mxu0
  %v1709 = vunpack.c.l.b16 %v189
  %v1710 = vunpack.c.h.b16 %v189
  %v1711 = vunpack.c.l.b16 %v190
  %v1712 = vunpack.c.h.b16 %v190
  %v1713 = vunpack.c.l.b16 %v191
  %v1714 = vunpack.c.l.b16 %v192
  %v1715 = vunpack.c.h.b16 %v192
  %v1716 = vunpack.c.l.b16 %v193
  %v1717 = vunpack.c.h.b16 %v193
  %v1718 = vunpack.c.l.b16 %v194
  %v1719 = vunpack.c.l.b16 %v195
  %v1720 = vunpack.c.h.b16 %v195
  %v1721 = vunpack.c.l.b16 %v196
  %v1722 = vunpack.c.h.b16 %v196
  %v1723 = vunpack.c.l.b16 %v197
  %v1724 = vunpack.c.l.b16 %v198
  %v1725 = vunpack.c.h.b16 %v198
  %v1726 = vunpack.c.l.b16 %v199
  %v1727 = vunpack.c.h.b16 %v199
  %v1728 = vunpack.c.l.b16 %v200
  %v1729 = vunpack.c.l.b16 %v201
  %v1730 = vunpack.c.h.b16 %v201
  %v1731 = vunpack.c.l.b16 %v202
  %v1732 = vunpack.c.h.b16 %v202
  %v1733 = vunpack.c.l.b16 %v203
  %v1734 = vunpack.c.l.b16 %v204
  %v1735 = vunpack.c.h.b16 %v204
  %v1736 = vunpack.c.l.b16 %v205
  %v1737 = vunpack.c.h.b16 %v205
  %v1738 = vunpack.c.l.b16 %v206
  %v1739 = vunpack.c.l.b16 %v207
  %v1740 = vunpack.c.h.b16 %v207
  %v1741 = vunpack.c.l.b16 %v208
  %v1742 = vunpack.c.h.b16 %v208
  %v1743 = vunpack.c.l.b16 %v209
  %v1744 = vunpack.c.l.b16 %v210
  %v1745 = vunpack.c.h.b16 %v210
  %v1746 = vunpack.c.l.b16 %v211
  %v1747 = vunpack.c.h.b16 %v211
  %v1748 = vunpack.c.l.b16 %v212
  %v1749 = vpack.c.b16 %v1714, %v1709
  %v1750 = vpack.c.b16 %v1715, %v1710
  %v1751 = vpack.c.b16 %v1716, %v1711
  %v1752 = vpack.c.b16 %v1717, %v1712
  %v1753 = vpack.c.b16 %v1718, %v1713
  %v1754 = vpack.c.b16 %v1724, %v1719
  %v1755 = vpack.c.b16 %v1725, %v1720
  %v1756 = vpack.c.b16 %v1726, %v1721
  %v1757 = vpack.c.b16 %v1727, %v1722
  %v1758 = vpack.c.b16 %v1728, %v1723
  %v1759 = vpack.c.b16 %v1734, %v1729
  %v1760 = vpack.c.b16 %v1735, %v1730
  %v1761 = vpack.c.b16 %v1736, %v1731
  %v1762 = vpack.c.b16 %v1737, %v1732
  %v1763 = vpack.c.b16 %v1738, %v1733
  %v1764 = vpack.c.b16 %v1744, %v1739
  %v1765 = vpack.c.b16 %v1745, %v1740
  %v1766 = vpack.c.b16 %v1746, %v1741
  %v1767 = vpack.c.b16 %v1747, %v1742
  %v1768 = vpack.c.b16 %v1748, %v1743
  %1789 = vmatprep.subr.bf16.mxu0 %v1750
  %1790 = vmatpush1.bf16.msra.mxu0 %v1749
  %1791 = vmatprep.subr.bf16.mxu0 %v1755
  %1792 = vmatpush1.bf16.msra.mxu0 %v1754
  %1793 = vmatprep.subr.bf16.mxu0 %v1760
  %1794 = vmatpush1.bf16.msra.mxu0 %v1759
  %1795 = vmatprep.subr.bf16.mxu0 %v1765
  %1796 = vmatpush1.bf16.msra.mxu0 %v1764
  %1797 = vmatprep.subr.bf16.mxu0 0
  %1798 = vmatpush1.bf16.msra.mxu0 0
  %1799 = vmatprep.subr.bf16.mxu0 0
  %1800 = vmatpush1.bf16.msra.mxu0 0
  %1801 = vmatprep.subr.bf16.mxu0 0
  %1802 = vmatpush1.bf16.msra.mxu0 0
  %1803 = vmatprep.subr.bf16.mxu0 0
  %1804 = vmatpush1.bf16.msra.mxu0 0
  %1805 = vmatprep.subr.bf16.mxu0 0
  %1806 = vmatpush1.bf16.msra.mxu0 0
  %1807 = vmatprep.subr.bf16.mxu0 0
  %1808 = vmatpush1.bf16.msra.mxu0 0
  %1809 = vmatprep.subr.bf16.mxu0 0
  %1810 = vmatpush1.bf16.msra.mxu0 0
  %1811 = vmatprep.subr.bf16.mxu0 0
  %1812 = vmatpush1.bf16.msra.mxu0 0
  %1813 = vmatprep.subr.bf16.mxu0 0
  %1814 = vmatpush1.bf16.msra.mxu0 0
  %1815 = vmatprep.subr.bf16.mxu0 0
  %1816 = vmatpush1.bf16.msra.mxu0 0
  %1817 = vmatprep.subr.bf16.mxu0 0
  %1818 = vmatpush1.bf16.msra.mxu0 0
  %1819 = vmatprep.subr.bf16.mxu0 0
  %1820 = vmatpush1.bf16.msra.mxu0 0
  %1821 = vmatprep.mubr.bf16.mxu0 0
  %1822 = vmatmul.mubr.bf16.gmra.mrb[0].mxu0 %v1582
  %v1823 = vpop.f32.mrb[0].mxu0
  %v1824 = vadd.f32 0.0, %v1823
  %v1825 = vpop.f32.mrb[0].mxu0
  %v1826 = vadd.f32 0.0, %v1825
  %v1827 = vpop.f32.mrb[0].mxu0
  %v1828 = vadd.f32 0.0, %v1827
  %v1829 = vpop.f32.mrb[0].mxu0
  %v1830 = vadd.f32 0.0, %v1829
  %1831 = vmatprep.mubr.bf16.mxu0 0
  %1832 = vmatmul.mubr.bf16.gmra.mrb[0].mxu0 %v1642
  %v1833 = vpop.f32.mrb[0].mxu0
  %v1834 = vadd.f32 0.0, %v1833
  %v1835 = vpop.f32.mrb[0].mxu0
  %v1836 = vadd.f32 0.0, %v1835
  %v1837 = vpop.f32.mrb[0].mxu0
  %v1838 = vadd.f32 0.0, %v1837
  %v1839 = vpop.f32.mrb[0].mxu0
  %v1840 = vadd.f32 0.0, %v1839
  %1841 = vdwg.mxu0
  %1842 = vmatprep.subr.bf16.mxu0 %v1752
  %1843 = vmatpush1.bf16.msra.mxu0 %v1751
  %1844 = vmatprep.subr.bf16.mxu0 %v1757
  %1845 = vmatpush1.bf16.msra.mxu0 %v1756
  %1846 = vmatprep.subr.bf16.mxu0 %v1762
  %1847 = vmatpush1.bf16.msra.mxu0 %v1761
  %1848 = vmatprep.subr.bf16.mxu0 %v1767
  %1849 = vmatpush1.bf16.msra.mxu0 %v1766
  %1850 = vmatprep.subr.bf16.mxu0 0
  %1851 = vmatpush1.bf16.msra.mxu0 0
  %1852 = vmatprep.subr.bf16.mxu0 0
  %1853 = vmatpush1.bf16.msra.mxu0 0
  %1854 = vmatprep.subr.bf16.mxu0 0
  %1855 = vmatpush1.bf16.msra.mxu0 0
  %1856 = vmatprep.subr.bf16.mxu0 0
  %1857 = vmatpush1.bf16.msra.mxu0 0
  %1858 = vmatprep.subr.bf16.mxu0 0
  %1859 = vmatpush1.bf16.msra.mxu0 0
  %1860 = vmatprep.subr.bf16.mxu0 0
  %1861 = vmatpush1.bf16.msra.mxu0 0
  %1862 = vmatprep.subr.bf16.mxu0 0
  %1863 = vmatpush1.bf16.msra.mxu0 0
  %1864 = vmatprep.subr.bf16.mxu0 0
  %1865 = vmatpush1.bf16.msra.mxu0 0
  %1866 = vmatprep.subr.bf16.mxu0 0
  %1867 = vmatpush1.bf16.msra.mxu0 0
  %1868 = vmatprep.subr.bf16.mxu0 0
  %1869 = vmatpush1.bf16.msra.mxu0 0
  %1870 = vmatprep.subr.bf16.mxu0 0
  %1871 = vmatpush1.bf16.msra.mxu0 0
  %1872 = vmatprep.subr.bf16.mxu0 0
  %1873 = vmatpush1.bf16.msra.mxu0 0
  %1874 = vmatprep.mubr.bf16.mxu0 0
  %1875 = vmatmul.mubr.bf16.gmra.mrb[0].mxu0 %v1582
  %v1876 = vpop.f32.mrb[0].mxu0
  %v1877 = vadd.f32 0.0, %v1876
  %v1878 = vpop.f32.mrb[0].mxu0
  %v1879 = vadd.f32 0.0, %v1878
  %v1880 = vpop.f32.mrb[0].mxu0
  %v1881 = vadd.f32 0.0, %v1880
  %v1882 = vpop.f32.mrb[0].mxu0
  %v1883 = vadd.f32 0.0, %v1882
  %1884 = vmatprep.mubr.bf16.mxu0 0
  %1885 = vmatmul.mubr.bf16.gmra.mrb[0].mxu0 %v1642
  %v1886 = vpop.f32.mrb[0].mxu0
  %v1887 = vadd.f32 0.0, %v1886
  %v1888 = vpop.f32.mrb[0].mxu0
  %v1889 = vadd.f32 0.0, %v1888
  %v1890 = vpop.f32.mrb[0].mxu0
  %v1891 = vadd.f32 0.0, %v1890
  %v1892 = vpop.f32.mrb[0].mxu0
  %v1893 = vadd.f32 0.0, %v1892
  %1894 = vdwg.mxu0
  %1895 = vmatprep.subr.bf16.mxu0 0
  %1896 = vmatpush1.bf16.msra.mxu0 %v1753
  %1897 = vmatprep.subr.bf16.mxu0 0
  %1898 = vmatpush1.bf16.msra.mxu0 %v1758
  %1899 = vmatprep.subr.bf16.mxu0 0
  %1900 = vmatpush1.bf16.msra.mxu0 %v1763
  %1901 = vmatprep.subr.bf16.mxu0 0
  %1902 = vmatpush1.bf16.msra.mxu0 %v1768
  %1903 = vmatprep.subr.bf16.mxu0 0
  %1904 = vmatpush1.bf16.msra.mxu0 0
  %1905 = vmatprep.subr.bf16.mxu0 0
  %1906 = vmatpush1.bf16.msra.mxu0 0
  %1907 = vmatprep.subr.bf16.mxu0 0
  %1908 = vmatpush1.bf16.msra.mxu0 0
  %1909 = vmatprep.subr.bf16.mxu0 0
  %1910 = vmatpush1.bf16.msra.mxu0 0
  %1911 = vmatprep.subr.bf16.mxu0 0
  %1912 = vmatpush1.bf16.msra.mxu0 0
  %1913 = vmatprep.subr.bf16.mxu0 0
  %1914 = vmatpush1.bf16.msra.mxu0 0
  %1915 = vmatprep.subr.bf16.mxu0 0
  %1916 = vmatpush1.bf16.msra.mxu0 0
  %1917 = vmatprep.subr.bf16.mxu0 0
  %1918 = vmatpush1.bf16.msra.mxu0 0
  %1919 = vmatprep.subr.bf16.mxu0 0
  %1920 = vmatpush1.bf16.msra.mxu0 0
  %1921 = vmatprep.subr.bf16.mxu0 0
  %1922 = vmatpush1.bf16.msra.mxu0 0
  %1923 = vmatprep.subr.bf16.mxu0 0
  %1924 = vmatpush1.bf16.msra.mxu0 0
  %1925 = vmatprep.subr.bf16.mxu0 0
  %1926 = vmatpush1.bf16.msra.mxu0 0
  %1927 = vmatprep.mubr.bf16.mxu0 0
  %1928 = vmatmul.mubr.bf16.gmra.mrb[0].mxu0 %v1582
  %v1929 = vpop.f32.mrb[0].mxu0
  %v1930 = vadd.f32 0.0, %v1929
  %v1931 = vpop.f32.mrb[0].mxu0
  %v1932 = vpop.f32.mrb[0].mxu0
  %v1933 = vadd.f32 0.0, %v1932
  %v1934 = vpop.f32.mrb[0].mxu0
  %1935 = vmatprep.mubr.bf16.mxu0 0
  %1936 = vmatmul.mubr.bf16.gmra.mrb[0].mxu0 %v1642
  %v1937 = vpop.f32.mrb[0].mxu0
  %v1938 = vadd.f32 0.0, %v1937
  %v1939 = vpop.f32.mrb[0].mxu0
  %v1940 = vpop.f32.mrb[0].mxu0
  %v1941 = vadd.f32 0.0, %v1940
  %v1942 = vpop.f32.mrb[0].mxu0
  %1943 = vdwg.mxu0
  %v1944 = vmul.f32 %v1824, %v74
  %v1945 = vmul.f32 %v1826, %v75
  %v1946 = vmul.f32 %v1877, %v76
  %v1947 = vmul.f32 %v1879, %v77
  %v1948 = vmul.f32 %v1930, %v78
  %v1949 = vmul.f32 %v1828, %v79
  %v1950 = vmul.f32 %v1830, %v80
  %v1951 = vmul.f32 %v1881, %v81
  %v1952 = vmul.f32 %v1883, %v82
  %v1953 = vmul.f32 %v1933, %v83
  %v1954 = vmul.f32 %v1834, %v84
  %v1955 = vmul.f32 %v1836, %v85
  %v1956 = vmul.f32 %v1887, %v86
  %v1957 = vmul.f32 %v1889, %v87
  %v1958 = vmul.f32 %v1938, %v88
  %v1959 = vmul.f32 %v1838, %v89
  %v1960 = vmul.f32 %v1840, %v90
  %v1961 = vmul.f32 %v1891, %v91
  %v1962 = vmul.f32 %v1893, %v92
  %v1963 = vmul.f32 %v1941, %v93
  %v1964 = vpack.c.bf16 %v1949, %v1944
  %v1965 = vpack.c.bf16 %v1950, %v1945
  %v1966 = vpack.c.bf16 %v1951, %v1946
  %v1967 = vpack.c.bf16 %v1952, %v1947
  %v1968 = vpack.c.bf16 %v1953, %v1948
  %v1969 = vpack.c.bf16 %v1959, %v1954
  %v1970 = vpack.c.bf16 %v1960, %v1955
  %v1971 = vpack.c.bf16 %v1961, %v1956
  %v1972 = vpack.c.bf16 %v1962, %v1957
  %v1973 = vpack.c.bf16 %v1963, %v1958
  %v2054 = vunpack.c.l.b16 %v239
  %v2055 = vunpack.c.l.b16 %v240
  %v2056 = vunpack.c.l.b16 %v241
  %v2057 = vunpack.c.l.b16 %v242
  %v2058 = vunpack.c.l.b16 %v243
  %v2059 = vunpack.c.l.b16 %v244
  %v2060 = vunpack.c.l.b16 %v245
  %v2061 = vunpack.c.l.b16 %v246
  %v2062 = vunpack.c.l.b16 %v247
  %v2063 = vunpack.c.l.b16 %v248
  %v2064 = vunpack.c.l.b16 %v249
  %v2065 = vunpack.c.l.b16 %v250
  %v2066 = vunpack.c.l.b16 %v251
  %v2067 = vunpack.c.l.b16 %v252
  %v2068 = vunpack.c.l.b16 %v253
  %v2069 = vunpack.c.l.b16 %v254
  %v2070 = vunpack.c.l.b16 %v255
  %v2071 = vunpack.c.l.b16 %v256
  %v2072 = vunpack.c.l.b16 %v257
  %v2073 = vunpack.c.l.b16 %v258
  %v2074 = vunpack.c.l.b16 %v259
  %v2075 = vunpack.c.l.b16 %v260
  %v2076 = vunpack.c.l.b16 %v261
  %v2077 = vunpack.c.l.b16 %v262
  %v2078 = vunpack.c.l.b16 %v263
  %v2079 = vunpack.c.l.b16 %v264
  %v2080 = vunpack.c.l.b16 %v265
  %v2081 = vunpack.c.l.b16 %v266
  %v2082 = vunpack.c.l.b16 %v267
  %v2083 = vunpack.c.l.b16 %v268
  %v2084 = vunpack.c.l.b16 %v269
  %v2085 = vunpack.c.l.b16 %v270
  %v2086 = vunpack.c.l.b16 %v271
  %v2087 = vunpack.c.l.b16 %v272
  %v2088 = vunpack.c.l.b16 %v273
  %v2089 = vunpack.c.l.b16 %v274
  %v2090 = vunpack.c.l.b16 %v275
  %v2091 = vunpack.c.l.b16 %v276
  %v2092 = vunpack.c.l.b16 %v277
  %v2093 = vunpack.c.l.b16 %v278
  %v2094 = vunpack.c.l.b16 %v279
  %v2095 = vunpack.c.l.b16 %v280
  %v2096 = vunpack.c.l.b16 %v281
  %v2097 = vunpack.c.l.b16 %v282
  %v2098 = vunpack.c.l.b16 %v283
  %v2099 = vunpack.c.l.b16 %v284
  %v2100 = vunpack.c.l.b16 %v285
  %v2101 = vunpack.c.l.b16 %v286
  %v2102 = vunpack.c.l.b16 %v287
  %v2103 = vunpack.c.l.b16 %v288
  %v2104 = vunpack.c.l.b16 %v289
  %v2105 = vunpack.c.l.b16 %v290
  %v2106 = vunpack.c.l.b16 %v291
  %v2107 = vunpack.c.l.b16 %v292
  %v2108 = vunpack.c.l.b16 %v293
  %v2109 = vunpack.c.l.b16 %v294
  %v2110 = vunpack.c.l.b16 %v295
  %v2111 = vunpack.c.l.b16 %v296
  %v2112 = vunpack.c.l.b16 %v297
  %v2113 = vunpack.c.l.b16 %v298
  %v2114 = vunpack.c.l.b16 %v299
  %v2115 = vunpack.c.l.b16 %v300
  %v2116 = vunpack.c.l.b16 %v301
  %v2117 = vunpack.c.l.b16 %v302
  %v2118 = vunpack.c.l.b16 %v303
  %v2119 = vunpack.c.l.b16 %v304
  %v2120 = vunpack.c.l.b16 %v305
  %v2121 = vunpack.c.l.b16 %v306
  %v2122 = vunpack.c.l.b16 %v307
  %v2123 = vunpack.c.l.b16 %v308
  %v2124 = vunpack.c.l.b16 %v309
  %v2125 = vunpack.c.l.b16 %v310
  %v2126 = vunpack.c.l.b16 %v311
  %v2127 = vunpack.c.l.b16 %v312
  %v2128 = vunpack.c.l.b16 %v313
  %v2129 = vunpack.c.l.b16 %v314
  %v2130 = vunpack.c.l.b16 %v315
  %v2131 = vunpack.c.l.b16 %v316
  %v2132 = vunpack.c.l.b16 %v317
  %v2133 = vunpack.c.l.b16 %v318
  %v2134 = vpack.c.b16 %v2055, %v2054
  %v2135 = vpack.c.b16 %v2057, %v2056
  %v2136 = vpack.c.b16 %v2059, %v2058
  %v2137 = vpack.c.b16 %v2061, %v2060
  %v2138 = vpack.c.b16 %v2063, %v2062
  %v2139 = vpack.c.b16 %v2065, %v2064
  %v2140 = vpack.c.b16 %v2067, %v2066
  %v2141 = vpack.c.b16 %v2069, %v2068
  %v2142 = vpack.c.b16 %v2071, %v2070
  %v2143 = vpack.c.b16 %v2073, %v2072
  %v2144 = vpack.c.b16 %v2075, %v2074
  %v2145 = vpack.c.b16 %v2077, %v2076
  %v2146 = vpack.c.b16 %v2079, %v2078
  %v2147 = vpack.c.b16 %v2081, %v2080
  %v2148 = vpack.c.b16 %v2083, %v2082
  %v2149 = vpack.c.b16 %v2085, %v2084
  %v2150 = vpack.c.b16 %v2087, %v2086
  %v2151 = vpack.c.b16 %v2089, %v2088
  %v2152 = vpack.c.b16 %v2091, %v2090
  %v2153 = vpack.c.b16 %v2093, %v2092
  %v2154 = vpack.c.b16 %v2095, %v2094
  %v2155 = vpack.c.b16 %v2097, %v2096
  %v2156 = vpack.c.b16 %v2099, %v2098
  %v2157 = vpack.c.b16 %v2101, %v2100
  %v2158 = vpack.c.b16 %v2103, %v2102
  %v2159 = vpack.c.b16 %v2105, %v2104
  %v2160 = vpack.c.b16 %v2107, %v2106
  %v2161 = vpack.c.b16 %v2109, %v2108
  %v2162 = vpack.c.b16 %v2111, %v2110
  %v2163 = vpack.c.b16 %v2113, %v2112
  %v2164 = vpack.c.b16 %v2115, %v2114
  %v2165 = vpack.c.b16 %v2117, %v2116
  %v2166 = vpack.c.b16 %v2119, %v2118
  %v2167 = vpack.c.b16 %v2121, %v2120
  %v2168 = vpack.c.b16 %v2123, %v2122
  %v2169 = vpack.c.b16 %v2125, %v2124
  %v2170 = vpack.c.b16 %v2127, %v2126
  %v2171 = vpack.c.b16 %v2129, %v2128
  %v2172 = vpack.c.b16 %v2131, %v2130
  %v2173 = vpack.c.b16 %v2133, %v2132
  %2214 = vmatprep.subr.bf16.mxu0 0
  %2215 = vmatpush1.bf16.msra.mxu0 %v2134
  %2216 = vmatprep.subr.bf16.mxu0 0
  %2217 = vmatpush1.bf16.msra.mxu0 %v2135
  %2218 = vmatprep.subr.bf16.mxu0 0
  %2219 = vmatpush1.bf16.msra.mxu0 %v2136
  %2220 = vmatprep.subr.bf16.mxu0 0
  %2221 = vmatpush1.bf16.msra.mxu0 %v2137
  %2222 = vmatprep.subr.bf16.mxu0 0
  %2223 = vmatpush1.bf16.msra.mxu0 %v2138
  %2224 = vmatprep.subr.bf16.mxu0 0
  %2225 = vmatpush1.bf16.msra.mxu0 %v2139
  %2226 = vmatprep.subr.bf16.mxu0 0
  %2227 = vmatpush1.bf16.msra.mxu0 %v2140
  %2228 = vmatprep.subr.bf16.mxu0 0
  %2229 = vmatpush1.bf16.msra.mxu0 %v2141
  %2230 = vmatprep.subr.bf16.mxu0 0
  %2231 = vmatpush1.bf16.msra.mxu0 %v2142
  %2232 = vmatprep.subr.bf16.mxu0 0
  %2233 = vmatpush1.bf16.msra.mxu0 %v2143
  %2234 = vmatprep.subr.bf16.mxu0 0
  %2235 = vmatpush1.bf16.msra.mxu0 %v2144
  %2236 = vmatprep.subr.bf16.mxu0 0
  %2237 = vmatpush1.bf16.msra.mxu0 %v2145
  %2238 = vmatprep.subr.bf16.mxu0 0
  %2239 = vmatpush1.bf16.msra.mxu0 %v2146
  %2240 = vmatprep.subr.bf16.mxu0 0
  %2241 = vmatpush1.bf16.msra.mxu0 %v2147
  %2242 = vmatprep.subr.bf16.mxu0 0
  %2243 = vmatpush1.bf16.msra.mxu0 %v2148
  %2244 = vmatprep.subr.bf16.mxu0 0
  %2245 = vmatpush1.bf16.msra.mxu0 %v2149
  %2246 = vmatprep.mubr.bf16.mxu0 %v1965
  %2247 = vmatmul.mubr.bf16.gmra.mrb[0].mxu0 %v1964
  %v2248 = vpop.f32.mrb[0].mxu0
  %v2249 = vadd.f32 0.0, %v2248
  %v2250 = vpop.f32.mrb[0].mxu0
  %v2251 = vpop.f32.mrb[0].mxu0
  %v2252 = vadd.f32 0.0, %v2251
  %v2253 = vpop.f32.mrb[0].mxu0
  %2254 = vmatprep.mubr.bf16.mxu0 %v1970
  %2255 = vmatmul.mubr.bf16.gmra.mrb[0].mxu0 %v1969
  %v2256 = vpop.f32.mrb[0].mxu0
  %v2257 = vadd.f32 0.0, %v2256
  %v2258 = vpop.f32.mrb[0].mxu0
  %v2259 = vpop.f32.mrb[0].mxu0
  %v2260 = vadd.f32 0.0, %v2259
  %v2261 = vpop.f32.mrb[0].mxu0
  %2262 = vdwg.mxu0
  %2263 = vmatprep.subr.bf16.mxu0 0
  %2264 = vmatpush1.bf16.msra.mxu0 %v2150
  %2265 = vmatprep.subr.bf16.mxu0 0
  %2266 = vmatpush1.bf16.msra.mxu0 %v2151
  %2267 = vmatprep.subr.bf16.mxu0 0
  %2268 = vmatpush1.bf16.msra.mxu0 %v2152
  %2269 = vmatprep.subr.bf16.mxu0 0
  %2270 = vmatpush1.bf16.msra.mxu0 %v2153
  %2271 = vmatprep.subr.bf16.mxu0 0
  %2272 = vmatpush1.bf16.msra.mxu0 %v2154
  %2273 = vmatprep.subr.bf16.mxu0 0
  %2274 = vmatpush1.bf16.msra.mxu0 %v2155
  %2275 = vmatprep.subr.bf16.mxu0 0
  %2276 = vmatpush1.bf16.msra.mxu0 %v2156
  %2277 = vmatprep.subr.bf16.mxu0 0
  %2278 = vmatpush1.bf16.msra.mxu0 %v2157
  %2279 = vmatprep.subr.bf16.mxu0 0
  %2280 = vmatpush1.bf16.msra.mxu0 %v2158
  %2281 = vmatprep.subr.bf16.mxu0 0
  %2282 = vmatpush1.bf16.msra.mxu0 %v2159
  %2283 = vmatprep.subr.bf16.mxu0 0
  %2284 = vmatpush1.bf16.msra.mxu0 %v2160
  %2285 = vmatprep.subr.bf16.mxu0 0
  %2286 = vmatpush1.bf16.msra.mxu0 %v2161
  %2287 = vmatprep.subr.bf16.mxu0 0
  %2288 = vmatpush1.bf16.msra.mxu0 %v2162
  %2289 = vmatprep.subr.bf16.mxu0 0
  %2290 = vmatpush1.bf16.msra.mxu0 %v2163
  %2291 = vmatprep.subr.bf16.mxu0 0
  %2292 = vmatpush1.bf16.msra.mxu0 %v2164
  %2293 = vmatprep.subr.bf16.mxu0 0
  %2294 = vmatpush1.bf16.msra.mxu0 %v2165
  %2295 = vmatprep.mubr.bf16.mxu0 %v1967
  %2296 = vmatmul.mubr.bf16.gmra.mrb[0].mxu0 %v1966
  %v2297 = vpop.f32.mrb[0].mxu0
  %v2298 = vadd.f32 %v2249, %v2297
  %v2299 = vpop.f32.mrb[0].mxu0
  %v2300 = vpop.f32.mrb[0].mxu0
  %v2301 = vadd.f32 %v2252, %v2300
  %v2302 = vpop.f32.mrb[0].mxu0
  %2303 = vmatprep.mubr.bf16.mxu0 %v1972
  %2304 = vmatmul.mubr.bf16.gmra.mrb[0].mxu0 %v1971
  %v2305 = vpop.f32.mrb[0].mxu0
  %v2306 = vadd.f32 %v2257, %v2305
  %v2307 = vpop.f32.mrb[0].mxu0
  %v2308 = vpop.f32.mrb[0].mxu0
  %v2309 = vadd.f32 %v2260, %v2308
  %v2310 = vpop.f32.mrb[0].mxu0
  %2311 = vdwg.mxu0
  %2312 = vmatprep.subr.bf16.mxu0 0
  %2313 = vmatpush1.bf16.msra.mxu0 %v2166
  %2314 = vmatprep.subr.bf16.mxu0 0
  %2315 = vmatpush1.bf16.msra.mxu0 %v2167
  %2316 = vmatprep.subr.bf16.mxu0 0
  %2317 = vmatpush1.bf16.msra.mxu0 %v2168
  %2318 = vmatprep.subr.bf16.mxu0 0
  %2319 = vmatpush1.bf16.msra.mxu0 %v2169
  %2320 = vmatprep.subr.bf16.mxu0 0
  %2321 = vmatpush1.bf16.msra.mxu0 %v2170
  %2322 = vmatprep.subr.bf16.mxu0 0
  %2323 = vmatpush1.bf16.msra.mxu0 %v2171
  %2324 = vmatprep.subr.bf16.mxu0 0
  %2325 = vmatpush1.bf16.msra.mxu0 %v2172
  %2326 = vmatprep.subr.bf16.mxu0 0
  %2327 = vmatpush1.bf16.msra.mxu0 %v2173
  %2328 = vmatprep.subr.bf16.mxu0 0
  %2329 = vmatpush1.bf16.msra.mxu0 0
  %2330 = vmatprep.subr.bf16.mxu0 0
  %2331 = vmatpush1.bf16.msra.mxu0 0
  %2332 = vmatprep.subr.bf16.mxu0 0
  %2333 = vmatpush1.bf16.msra.mxu0 0
  %2334 = vmatprep.subr.bf16.mxu0 0
  %2335 = vmatpush1.bf16.msra.mxu0 0
  %2336 = vmatprep.subr.bf16.mxu0 0
  %2337 = vmatpush1.bf16.msra.mxu0 0
  %2338 = vmatprep.subr.bf16.mxu0 0
  %2339 = vmatpush1.bf16.msra.mxu0 0
  %2340 = vmatprep.subr.bf16.mxu0 0
  %2341 = vmatpush1.bf16.msra.mxu0 0
  %2342 = vmatprep.subr.bf16.mxu0 0
  %2343 = vmatpush1.bf16.msra.mxu0 0
  %2344 = vmatprep.mubr.bf16.mxu0 0
  %2345 = vmatmul.mubr.bf16.gmra.mrb[0].mxu0 %v1968
  %v2346 = vpop.f32.mrb[0].mxu0
  %v2347 = vadd.f32 %v2298, %v2346
  %v2348 = vpop.f32.mrb[0].mxu0
  %v2349 = vpop.f32.mrb[0].mxu0
  %v2350 = vadd.f32 %v2301, %v2349
  %v2351 = vpop.f32.mrb[0].mxu0
  %2352 = vmatprep.mubr.bf16.mxu0 0
  %2353 = vmatmul.mubr.bf16.gmra.mrb[0].mxu0 %v1973
  %v2354 = vpop.f32.mrb[0].mxu0
  %v2355 = vadd.f32 %v2306, %v2354
  %v2356 = vpop.f32.mrb[0].mxu0
  %v2357 = vpop.f32.mrb[0].mxu0
  %v2358 = vadd.f32 %v2309, %v2357
  %v2359 = vpop.f32.mrb[0].mxu0
  %2360 = vdwg.mxu0
  %v2361 = vadd.f32 %v1619, %v2347
  %v2362 = vadd.f32 %v1622, %v2350
  %v2363 = vadd.f32 %v1679, %v2355
  %v2364 = vadd.f32 %v1682, %v2358
  %v2365 = vpack.c.bf16 %v2362, %v2361
  %v2366 = vpack.c.bf16 %v2364, %v2363
  %v2368 = vlaneseq
  %v2369 = vshrl.u32 %v2368, 7
  %v2370 = vsub.s32 0, %v2369
  %v2371 = vrot.slane %v323, %v2370
  %v2377 = vunpack.c.l.b16 %v319
  %v2378 = vunpack.c.l.b16 %v320
  %v2379 = vunpack.c.l.b16 %v321
  %v2380 = vunpack.c.l.b16 %v322
  %v2381 = vpack.c.b16 %v2378, %v2377
  %v2382 = vpack.c.b16 %v2380, %v2379
  %v2386 = vsel %vm359, %v2365, 0
  %v2389 = vsel %vm359, %v2366, 0
  %2391 = vmatprep.subr.bf16.mxu0 0
  %2392 = vmatpush1.bf16.msra.mxu0 %v2381
  %2393 = vmatprep.subr.bf16.mxu0 0
  %2394 = vmatpush1.bf16.msra.mxu0 %v2382
  %2395 = vmatprep.subr.bf16.mxu0 0
  %2396 = vmatpush1.bf16.msra.mxu0 0
  %2397 = vmatprep.subr.bf16.mxu0 0
  %2398 = vmatpush1.bf16.msra.mxu0 0
  %2399 = vmatprep.subr.bf16.mxu0 0
  %2400 = vmatpush1.bf16.msra.mxu0 0
  %2401 = vmatprep.subr.bf16.mxu0 0
  %2402 = vmatpush1.bf16.msra.mxu0 0
  %2403 = vmatprep.subr.bf16.mxu0 0
  %2404 = vmatpush1.bf16.msra.mxu0 0
  %2405 = vmatprep.subr.bf16.mxu0 0
  %2406 = vmatpush1.bf16.msra.mxu0 0
  %2407 = vmatprep.subr.bf16.mxu0 0
  %2408 = vmatpush1.bf16.msra.mxu0 0
  %2409 = vmatprep.subr.bf16.mxu0 0
  %2410 = vmatpush1.bf16.msra.mxu0 0
  %2411 = vmatprep.subr.bf16.mxu0 0
  %2412 = vmatpush1.bf16.msra.mxu0 0
  %2413 = vmatprep.subr.bf16.mxu0 0
  %2414 = vmatpush1.bf16.msra.mxu0 0
  %2415 = vmatprep.subr.bf16.mxu0 0
  %2416 = vmatpush1.bf16.msra.mxu0 0
  %2417 = vmatprep.subr.bf16.mxu0 0
  %2418 = vmatpush1.bf16.msra.mxu0 0
  %2419 = vmatprep.subr.bf16.mxu0 0
  %2420 = vmatpush1.bf16.msra.mxu0 0
  %2421 = vmatprep.subr.bf16.mxu0 0
  %2422 = vmatpush1.bf16.msra.mxu0 0
  %2423 = vmatprep.mubr.bf16.mxu0 0
  %2424 = vmatmul.mubr.bf16.gmra.mrb[0].mxu0 %v2386
  %v2425 = vpop.f32.mrb[0].mxu0
  %v2426 = vadd.f32 %v2371, %v2425
  %v2427 = vpop.f32.mrb[0].mxu0
  %v2428 = vpop.f32.mrb[0].mxu0
  %v2429 = vadd.f32 %v2371, %v2428
  %v2430 = vpop.f32.mrb[0].mxu0
  %2431 = vmatprep.mubr.bf16.mxu0 0
  %2432 = vmatmul.mubr.bf16.gmra.mrb[0].mxu0 %v2389
  %v2433 = vpop.f32.mrb[0].mxu0
  %v2434 = vadd.f32 %v2371, %v2433
  %v2435 = vpop.f32.mrb[0].mxu0
  %v2436 = vpop.f32.mrb[0].mxu0
  %v2437 = vadd.f32 %v2371, %v2436
  %v2438 = vpop.f32.mrb[0].mxu0
  %2439 = vdwg.mxu0
  %v2440 = vadd.f32 %v2426, %v66
  %v2441 = vadd.f32 %v2429, %v67
  %v2442 = vadd.f32 %v2434, %v68
  %v2443 = vadd.f32 %v2437, %v69
  %v2444 = vsel %vm359, %v2440, 0.0
  %2445 = vadd.xlane.f32.xlu0 %v2444
  %v2446 = vpop.xlane.xlu0 %2445
  %v2447 = vsel %vm359, %v2441, 0.0
  %2448 = vadd.xlane.f32.xlu0 %v2447
  %v2449 = vpop.xlane.xlu0 %2448
  %v2450 = vsel %vm359, %v2442, 0.0
  %2451 = vadd.xlane.f32.xlu0 %v2450
  %v2452 = vpop.xlane.xlu0 %2451
  %v2453 = vsel %vm359, %v2443, 0.0
  %2454 = vadd.xlane.f32.xlu0 %v2453
  %v2455 = vpop.xlane.xlu0 %2454
  %v2456 = vrcp.pop 32.0
  %v2457 = vmul.f32 %v2446, %v2456
  %v2458 = vmul.f32 %v2449, %v2456
  %v2459 = vmul.f32 %v2452, %v2456
  %v2460 = vmul.f32 %v2455, %v2456
  %v2461 = vsub.f32 %v2440, %v2457
  %v2462 = vsub.f32 %v2441, %v2458
  %v2463 = vsub.f32 %v2442, %v2459
  %v2464 = vsub.f32 %v2443, %v2460
  %v2465 = vmul.f32 %v2461, %v2461
  %v2466 = vmul.f32 %v2462, %v2462
  %v2467 = vmul.f32 %v2463, %v2463
  %v2468 = vmul.f32 %v2464, %v2464
  %v2469 = vsel %vm359, %v2465, 0.0
  %2470 = vadd.xlane.f32.xlu0 %v2469
  %v2471 = vpop.xlane.xlu0 %2470
  %v2472 = vsel %vm359, %v2466, 0.0
  %2473 = vadd.xlane.f32.xlu0 %v2472
  %v2474 = vpop.xlane.xlu0 %2473
  %v2475 = vsel %vm359, %v2467, 0.0
  %2476 = vadd.xlane.f32.xlu0 %v2475
  %v2477 = vpop.xlane.xlu0 %2476
  %v2478 = vsel %vm359, %v2468, 0.0
  %2479 = vadd.xlane.f32.xlu0 %v2478
  %v2480 = vpop.xlane.xlu0 %2479
  %v2481 = vmul.f32 %v2471, %v2456
  %v2482 = vmul.f32 %v2474, %v2456
  %v2483 = vmul.f32 %v2477, %v2456
  %v2484 = vmul.f32 %v2480, %v2456
  %v2485 = vadd.f32 %v2481, 1e-06
  %v2486 = vadd.f32 %v2482, 1e-06
  %v2487 = vadd.f32 %v2483, 1e-06
  %v2488 = vadd.f32 %v2484, 1e-06
  %v2489 = vrsqrt.pop %v2485
  %v2490 = vrsqrt.pop %v2486
  %v2491 = vrsqrt.pop %v2487
  %v2492 = vrsqrt.pop %v2488
  %v2493 = vmul.f32 %v2461, %v2489
  %v2494 = vmul.f32 %v2462, %v2490
  %v2495 = vmul.f32 %v2463, %v2491
  %v2496 = vmul.f32 %v2464, %v2492
  %v2497 = vlaneseq
  %v2498 = vshrl.u32 %v2497, 7
  %v2499 = vsub.s32 0, %v2498
  %v2500 = vrot.slane %v324, %v2499
  %v2501 = vmul.f32 %v2493, %v2500
  %v2502 = vmul.f32 %v2494, %v2500
  %v2503 = vmul.f32 %v2495, %v2500
  %v2504 = vmul.f32 %v2496, %v2500
  %v2505 = vlaneseq
  %v2506 = vshrl.u32 %v2505, 7
  %v2507 = vsub.s32 1, %v2506
  %v2508 = vrot.slane %v324, %v2507
  %v2509 = vadd.f32 %v2501, %v2508
  %v2510 = vadd.f32 %v2502, %v2508
  %v2511 = vadd.f32 %v2503, %v2508
  %v2512 = vadd.f32 %v2504, %v2508
  %v2513 = vsel %vm359, %v2509, 0.0
  %2514 = vadd.xlane.f32.xlu0 %v2513
  %v2515 = vpop.xlane.xlu0 %2514
  %v2516 = vsel %vm359, %v2510, 0.0
  %2517 = vadd.xlane.f32.xlu0 %v2516
  %v2518 = vpop.xlane.xlu0 %2517
  %v2519 = vsel %vm359, %v2511, 0.0
  %2520 = vadd.xlane.f32.xlu0 %v2519
  %v2521 = vpop.xlane.xlu0 %2520
  %v2522 = vsel %vm359, %v2512, 0.0
  %2523 = vadd.xlane.f32.xlu0 %v2522
  %v2524 = vpop.xlane.xlu0 %2523
  %v2525 = vmul.f32 %v2515, %v2456
  %v2526 = vmul.f32 %v2518, %v2456
  %v2527 = vmul.f32 %v2521, %v2456
  %v2528 = vmul.f32 %v2524, %v2456
  %v2529 = vsub.f32 %v2509, %v2525
  %v2530 = vsub.f32 %v2510, %v2526
  %v2531 = vsub.f32 %v2511, %v2527
  %v2532 = vsub.f32 %v2512, %v2528
  %v2533 = vmul.f32 %v2529, %v2529
  %v2534 = vmul.f32 %v2530, %v2530
  %v2535 = vmul.f32 %v2531, %v2531
  %v2536 = vmul.f32 %v2532, %v2532
  %v2537 = vsel %vm359, %v2533, 0.0
  %2538 = vadd.xlane.f32.xlu0 %v2537
  %v2539 = vpop.xlane.xlu0 %2538
  %v2540 = vsel %vm359, %v2534, 0.0
  %2541 = vadd.xlane.f32.xlu0 %v2540
  %v2542 = vpop.xlane.xlu0 %2541
  %v2543 = vsel %vm359, %v2535, 0.0
  %2544 = vadd.xlane.f32.xlu0 %v2543
  %v2545 = vpop.xlane.xlu0 %2544
  %v2546 = vsel %vm359, %v2536, 0.0
  %2547 = vadd.xlane.f32.xlu0 %v2546
  %v2548 = vpop.xlane.xlu0 %2547
  %v2549 = vmul.f32 %v2539, %v2456
  %v2550 = vmul.f32 %v2542, %v2456
  %v2551 = vmul.f32 %v2545, %v2456
  %v2552 = vmul.f32 %v2548, %v2456
  %v2553 = vadd.f32 %v2549, 1e-06
  %v2554 = vadd.f32 %v2550, 1e-06
  %v2555 = vadd.f32 %v2551, 1e-06
  %v2556 = vadd.f32 %v2552, 1e-06
  %v2557 = vrsqrt.pop %v2553
  %v2558 = vrsqrt.pop %v2554
  %v2559 = vrsqrt.pop %v2555
  %v2560 = vrsqrt.pop %v2556
  %v2561 = vmul.f32 %v2529, %v2557
  %v2562 = vmul.f32 %v2530, %v2558
  %v2563 = vmul.f32 %v2531, %v2559
  %v2564 = vmul.f32 %v2532, %v2560
  %v2565 = vlaneseq
  %v2566 = vshrl.u32 %v2565, 7
  %v2567 = vsub.s32 2, %v2566
  %v2568 = vrot.slane %v324, %v2567
  %v2569 = vmul.f32 %v2561, %v2568
  %v2570 = vmul.f32 %v2562, %v2568
  %v2571 = vmul.f32 %v2563, %v2568
  %v2572 = vmul.f32 %v2564, %v2568
  %v2573 = vlaneseq
  %v2574 = vshrl.u32 %v2573, 7
  %v2575 = vsub.s32 3, %v2574
  %v2576 = vrot.slane %v324, %v2575
  %v2577 = vadd.f32 %v2569, %v2576
  %v2578 = vadd.f32 %v2570, %v2576
  %v2579 = vadd.f32 %v2571, %v2576
  %v2580 = vadd.f32 %v2572, %v2576
  %v2581 = vpack.c.bf16 %v2578, %v2577
  %v2582 = vpack.c.bf16 %v2580, %v2579
  %v2584 = vlaneseq
  %v2585 = vshrl.u32 %v2584, 7
  %v2586 = vsub.s32 0, %v2585
  %v2587 = vrot.slane %v329, %v2586
  %v2593 = vunpack.c.l.b16 %v325
  %v2594 = vunpack.c.l.b16 %v326
  %v2595 = vunpack.c.l.b16 %v327
  %v2596 = vunpack.c.l.b16 %v328
  %v2597 = vpack.c.b16 %v2594, %v2593
  %v2598 = vpack.c.b16 %v2596, %v2595
  %v2602 = vsel %vm359, %v2581, 0
  %v2605 = vsel %vm359, %v2582, 0
  %2607 = vmatprep.subr.bf16.mxu0 0
  %2608 = vmatpush1.bf16.msra.mxu0 %v2597
  %2609 = vmatprep.subr.bf16.mxu0 0
  %2610 = vmatpush1.bf16.msra.mxu0 %v2598
  %2611 = vmatprep.subr.bf16.mxu0 0
  %2612 = vmatpush1.bf16.msra.mxu0 0
  %2613 = vmatprep.subr.bf16.mxu0 0
  %2614 = vmatpush1.bf16.msra.mxu0 0
  %2615 = vmatprep.subr.bf16.mxu0 0
  %2616 = vmatpush1.bf16.msra.mxu0 0
  %2617 = vmatprep.subr.bf16.mxu0 0
  %2618 = vmatpush1.bf16.msra.mxu0 0
  %2619 = vmatprep.subr.bf16.mxu0 0
  %2620 = vmatpush1.bf16.msra.mxu0 0
  %2621 = vmatprep.subr.bf16.mxu0 0
  %2622 = vmatpush1.bf16.msra.mxu0 0
  %2623 = vmatprep.subr.bf16.mxu0 0
  %2624 = vmatpush1.bf16.msra.mxu0 0
  %2625 = vmatprep.subr.bf16.mxu0 0
  %2626 = vmatpush1.bf16.msra.mxu0 0
  %2627 = vmatprep.subr.bf16.mxu0 0
  %2628 = vmatpush1.bf16.msra.mxu0 0
  %2629 = vmatprep.subr.bf16.mxu0 0
  %2630 = vmatpush1.bf16.msra.mxu0 0
  %2631 = vmatprep.subr.bf16.mxu0 0
  %2632 = vmatpush1.bf16.msra.mxu0 0
  %2633 = vmatprep.subr.bf16.mxu0 0
  %2634 = vmatpush1.bf16.msra.mxu0 0
  %2635 = vmatprep.subr.bf16.mxu0 0
  %2636 = vmatpush1.bf16.msra.mxu0 0
  %2637 = vmatprep.subr.bf16.mxu0 0
  %2638 = vmatpush1.bf16.msra.mxu0 0
  %2639 = vmatprep.mubr.bf16.mxu0 0
  %2640 = vmatmul.mubr.bf16.gmra.mrb[0].mxu0 %v2602
  %v2641 = vpop.f32.mrb[0].mxu0
  %v2642 = vadd.f32 %v2587, %v2641
  %v2643 = vpop.f32.mrb[0].mxu0
  %v2644 = vpop.f32.mrb[0].mxu0
  %v2645 = vadd.f32 %v2587, %v2644
  %v2646 = vpop.f32.mrb[0].mxu0
  %2647 = vmatprep.mubr.bf16.mxu0 0
  %2648 = vmatmul.mubr.bf16.gmra.mrb[0].mxu0 %v2605
  %v2649 = vpop.f32.mrb[0].mxu0
  %v2650 = vadd.f32 %v2587, %v2649
  %v2651 = vpop.f32.mrb[0].mxu0
  %v2652 = vpop.f32.mrb[0].mxu0
  %v2653 = vadd.f32 %v2587, %v2652
  %v2654 = vpop.f32.mrb[0].mxu0
  %2655 = vdwg.mxu0
  %v2656 = vmax.f32 %v2642, 0.0
  %v2657 = vmax.f32 %v2645, 0.0
  %v2658 = vmax.f32 %v2650, 0.0
  %v2659 = vmax.f32 %v2653, 0.0
  %v2660 = vpack.c.bf16 %v2657, %v2656
  %v2661 = vpack.c.bf16 %v2659, %v2658
  %v2663 = vlaneseq
  %v2664 = vshrl.u32 %v2663, 7
  %v2665 = vsub.s32 0, %v2664
  %v2666 = vrot.slane %v338, %v2665
  %v2676 = vunpack.c.l.b16 %v330
  %v2677 = vunpack.c.l.b16 %v331
  %v2678 = vunpack.c.l.b16 %v332
  %v2679 = vunpack.c.l.b16 %v333
  %v2680 = vunpack.c.l.b16 %v334
  %v2681 = vunpack.c.l.b16 %v335
  %v2682 = vunpack.c.l.b16 %v336
  %v2683 = vunpack.c.l.b16 %v337
  %v2684 = vpack.c.b16 %v2677, %v2676
  %v2685 = vpack.c.b16 %v2679, %v2678
  %v2686 = vpack.c.b16 %v2681, %v2680
  %v2687 = vpack.c.b16 %v2683, %v2682
  %v2693 = vsel %vm1388, %v2660, 0
  %v2696 = vsel %vm1388, %v2661, 0
  %2698 = vmatprep.subr.bf16.mxu0 0
  %2699 = vmatpush1.bf16.msra.mxu0 %v2684
  %2700 = vmatprep.subr.bf16.mxu0 0
  %2701 = vmatpush1.bf16.msra.mxu0 %v2685
  %2702 = vmatprep.subr.bf16.mxu0 0
  %2703 = vmatpush1.bf16.msra.mxu0 %v2686
  %2704 = vmatprep.subr.bf16.mxu0 0
  %2705 = vmatpush1.bf16.msra.mxu0 %v2687
  %2706 = vmatprep.subr.bf16.mxu0 0
  %2707 = vmatpush1.bf16.msra.mxu0 0
  %2708 = vmatprep.subr.bf16.mxu0 0
  %2709 = vmatpush1.bf16.msra.mxu0 0
  %2710 = vmatprep.subr.bf16.mxu0 0
  %2711 = vmatpush1.bf16.msra.mxu0 0
  %2712 = vmatprep.subr.bf16.mxu0 0
  %2713 = vmatpush1.bf16.msra.mxu0 0
  %2714 = vmatprep.subr.bf16.mxu0 0
  %2715 = vmatpush1.bf16.msra.mxu0 0
  %2716 = vmatprep.subr.bf16.mxu0 0
  %2717 = vmatpush1.bf16.msra.mxu0 0
  %2718 = vmatprep.subr.bf16.mxu0 0
  %2719 = vmatpush1.bf16.msra.mxu0 0
  %2720 = vmatprep.subr.bf16.mxu0 0
  %2721 = vmatpush1.bf16.msra.mxu0 0
  %2722 = vmatprep.subr.bf16.mxu0 0
  %2723 = vmatpush1.bf16.msra.mxu0 0
  %2724 = vmatprep.subr.bf16.mxu0 0
  %2725 = vmatpush1.bf16.msra.mxu0 0
  %2726 = vmatprep.subr.bf16.mxu0 0
  %2727 = vmatpush1.bf16.msra.mxu0 0
  %2728 = vmatprep.subr.bf16.mxu0 0
  %2729 = vmatpush1.bf16.msra.mxu0 0
  %2730 = vmatprep.mubr.bf16.mxu0 0
  %2731 = vmatmul.mubr.bf16.gmra.mrb[0].mxu0 %v2693
  %v2732 = vpop.f32.mrb[0].mxu0
  %v2733 = vadd.f32 %v2666, %v2732
  %v2734 = vpop.f32.mrb[0].mxu0
  %v2735 = vpop.f32.mrb[0].mxu0
  %v2736 = vadd.f32 %v2666, %v2735
  %v2737 = vpop.f32.mrb[0].mxu0
  %2738 = vmatprep.mubr.bf16.mxu0 0
  %2739 = vmatmul.mubr.bf16.gmra.mrb[0].mxu0 %v2696
  %v2740 = vpop.f32.mrb[0].mxu0
  %v2741 = vadd.f32 %v2666, %v2740
  %v2742 = vpop.f32.mrb[0].mxu0
  %v2743 = vpop.f32.mrb[0].mxu0
  %v2744 = vadd.f32 %v2666, %v2743
  %v2745 = vpop.f32.mrb[0].mxu0
  %2746 = vdwg.mxu0
  %v2747 = vadd.f32 %v2733, %v2509
  %v2748 = vadd.f32 %v2736, %v2510
  %v2749 = vadd.f32 %v2741, %v2511
  %v2750 = vadd.f32 %v2744, %v2512
  %2751 = vst.msk [vmem:[%s20] sm:$0xff] %vm359, %v2747
  %2752 = vst.msk [vmem:[%s20 + $0x8] sm:$0xff] %vm359, %v2748
  %2753 = vst.msk [vmem:[%s20 + $0x10] sm:$0xff] %vm359, %v2749
  %2754 = vst.msk [vmem:[%s20 + $0x18] sm:$0xff] %vm359, %v2750
  %s2755 = scalar_lea.vmem %s9, 16
  %v2756 = vld [vmem:[%s2755] sm:$0xf]
  %v2757 = vld [vmem:[%s2755 + $0x4] sm:$0xf]
  %v2758 = vld [vmem:[%s2755 + $0x8] sm:$0xf]
  %v2759 = vld [vmem:[%s2755 + $0xc] sm:$0xf]
  %s2760 = scalar_lea.vmem %s10, 1
  %v2761 = vld [vmem:[%s2760] sm:$0x1]
  %s2762 = scalar_lea.vmem %s11, 16
  %v2763 = vld [vmem:[%s2762] sm:$0xf]
  %v2764 = vld [vmem:[%s2762 + $0x4] sm:$0xf]
  %v2765 = vld [vmem:[%s2762 + $0x8] sm:$0xf]
  %v2766 = vld [vmem:[%s2762 + $0xc] sm:$0xf]
  %s2767 = scalar_lea.vmem %s12, 320
  %v2768 = vld [vmem:[%s2767] sm:$0xf]
  %v2769 = vld [vmem:[%s2767 + $0x4] sm:$0xf]
  %v2770 = vld [vmem:[%s2767 + $0x8] sm:$0xf]
  %v2771 = vld [vmem:[%s2767 + $0xc] sm:$0xf]
  %v2772 = vld [vmem:[%s2767 + $0x10] sm:$0xf]
  %v2773 = vld [vmem:[%s2767 + $0x14] sm:$0xf]
  %v2774 = vld [vmem:[%s2767 + $0x18] sm:$0xf]
  %v2775 = vld [vmem:[%s2767 + $0x1c] sm:$0xf]
  %v2776 = vld [vmem:[%s2767 + $0x20] sm:$0xf]
  %v2777 = vld [vmem:[%s2767 + $0x24] sm:$0xf]
  %v2778 = vld [vmem:[%s2767 + $0x28] sm:$0xf]
  %v2779 = vld [vmem:[%s2767 + $0x2c] sm:$0xf]
  %v2780 = vld [vmem:[%s2767 + $0x30] sm:$0xf]
  %v2781 = vld [vmem:[%s2767 + $0x34] sm:$0xf]
  %v2782 = vld [vmem:[%s2767 + $0x38] sm:$0xf]
  %v2783 = vld [vmem:[%s2767 + $0x3c] sm:$0xf]
  %v2784 = vld [vmem:[%s2767 + $0x40] sm:$0xf]
  %v2785 = vld [vmem:[%s2767 + $0x44] sm:$0xf]
  %v2786 = vld [vmem:[%s2767 + $0x48] sm:$0xf]
  %v2787 = vld [vmem:[%s2767 + $0x4c] sm:$0xf]
  %v2788 = vld [vmem:[%s2767 + $0x50] sm:$0xf]
  %v2789 = vld [vmem:[%s2767 + $0x54] sm:$0xf]
  %v2790 = vld [vmem:[%s2767 + $0x58] sm:$0xf]
  %v2791 = vld [vmem:[%s2767 + $0x5c] sm:$0xf]
  %v2792 = vld [vmem:[%s2767 + $0x60] sm:$0xf]
  %v2793 = vld [vmem:[%s2767 + $0x64] sm:$0xf]
  %v2794 = vld [vmem:[%s2767 + $0x68] sm:$0xf]
  %v2795 = vld [vmem:[%s2767 + $0x6c] sm:$0xf]
  %v2796 = vld [vmem:[%s2767 + $0x70] sm:$0xf]
  %v2797 = vld [vmem:[%s2767 + $0x74] sm:$0xf]
  %v2798 = vld [vmem:[%s2767 + $0x78] sm:$0xf]
  %v2799 = vld [vmem:[%s2767 + $0x7c] sm:$0xf]
  %v2800 = vld [vmem:[%s2767 + $0x80] sm:$0xf]
  %v2801 = vld [vmem:[%s2767 + $0x84] sm:$0xf]
  %v2802 = vld [vmem:[%s2767 + $0x88] sm:$0xf]
  %v2803 = vld [vmem:[%s2767 + $0x8c] sm:$0xf]
  %v2804 = vld [vmem:[%s2767 + $0x90] sm:$0xf]
  %v2805 = vld [vmem:[%s2767 + $0x94] sm:$0xf]
  %v2806 = vld [vmem:[%s2767 + $0x98] sm:$0xf]
  %v2807 = vld [vmem:[%s2767 + $0x9c] sm:$0xf]
  %v2808 = vld [vmem:[%s2767 + $0xa0] sm:$0xf]
  %v2809 = vld [vmem:[%s2767 + $0xa4] sm:$0xf]
  %v2810 = vld [vmem:[%s2767 + $0xa8] sm:$0xf]
  %v2811 = vld [vmem:[%s2767 + $0xac] sm:$0xf]
  %v2812 = vld [vmem:[%s2767 + $0xb0] sm:$0xf]
  %v2813 = vld [vmem:[%s2767 + $0xb4] sm:$0xf]
  %v2814 = vld [vmem:[%s2767 + $0xb8] sm:$0xf]
  %v2815 = vld [vmem:[%s2767 + $0xbc] sm:$0xf]
  %v2816 = vld [vmem:[%s2767 + $0xc0] sm:$0xf]
  %v2817 = vld [vmem:[%s2767 + $0xc4] sm:$0xf]
  %v2818 = vld [vmem:[%s2767 + $0xc8] sm:$0xf]
  %v2819 = vld [vmem:[%s2767 + $0xcc] sm:$0xf]
  %v2820 = vld [vmem:[%s2767 + $0xd0] sm:$0xf]
  %v2821 = vld [vmem:[%s2767 + $0xd4] sm:$0xf]
  %v2822 = vld [vmem:[%s2767 + $0xd8] sm:$0xf]
  %v2823 = vld [vmem:[%s2767 + $0xdc] sm:$0xf]
  %v2824 = vld [vmem:[%s2767 + $0xe0] sm:$0xf]
  %v2825 = vld [vmem:[%s2767 + $0xe4] sm:$0xf]
  %v2826 = vld [vmem:[%s2767 + $0xe8] sm:$0xf]
  %v2827 = vld [vmem:[%s2767 + $0xec] sm:$0xf]
  %v2828 = vld [vmem:[%s2767 + $0xf0] sm:$0xf]
  %v2829 = vld [vmem:[%s2767 + $0xf4] sm:$0xf]
  %v2830 = vld [vmem:[%s2767 + $0xf8] sm:$0xf]
  %v2831 = vld [vmem:[%s2767 + $0xfc] sm:$0xf]
  %v2832 = vld [vmem:[%s2767 + $0x100] sm:$0xf]
  %v2833 = vld [vmem:[%s2767 + $0x104] sm:$0xf]
  %v2834 = vld [vmem:[%s2767 + $0x108] sm:$0xf]
  %v2835 = vld [vmem:[%s2767 + $0x10c] sm:$0xf]
  %v2836 = vld [vmem:[%s2767 + $0x110] sm:$0xf]
  %v2837 = vld [vmem:[%s2767 + $0x114] sm:$0xf]
  %v2838 = vld [vmem:[%s2767 + $0x118] sm:$0xf]
  %v2839 = vld [vmem:[%s2767 + $0x11c] sm:$0xf]
  %v2840 = vld [vmem:[%s2767 + $0x120] sm:$0xf]
  %v2841 = vld [vmem:[%s2767 + $0x124] sm:$0xf]
  %v2842 = vld [vmem:[%s2767 + $0x128] sm:$0xf]
  %v2843 = vld [vmem:[%s2767 + $0x12c] sm:$0xf]
  %v2844 = vld [vmem:[%s2767 + $0x130] sm:$0xf]
  %v2845 = vld [vmem:[%s2767 + $0x134] sm:$0xf]
  %v2846 = vld [vmem:[%s2767 + $0x138] sm:$0xf]
  %v2847 = vld [vmem:[%s2767 + $0x13c] sm:$0xf]
  %s2848 = scalar_lea.vmem %s13, 16
  %v2849 = vld [vmem:[%s2848] sm:$0xf]
  %v2850 = vld [vmem:[%s2848 + $0x4] sm:$0xf]
  %v2851 = vld [vmem:[%s2848 + $0x8] sm:$0xf]
  %v2852 = vld [vmem:[%s2848 + $0xc] sm:$0xf]
  %s2853 = scalar_lea.vmem %s14, 1
  %v2854 = vld [vmem:[%s2853] sm:$0x1]
  %s2855 = scalar_lea.vmem %s15, 4
  %v2856 = vld [vmem:[%s2855] sm:$0xf]
  %s2857 = scalar_lea.vmem %s16, 16
  %v2858 = vld [vmem:[%s2857] sm:$0xf]
  %v2859 = vld [vmem:[%s2857 + $0x4] sm:$0xf]
  %v2860 = vld [vmem:[%s2857 + $0x8] sm:$0xf]
  %v2861 = vld [vmem:[%s2857 + $0xc] sm:$0xf]
  %s2862 = scalar_lea.vmem %s17, 1
  %v2863 = vld [vmem:[%s2862] sm:$0x1]
  %s2864 = scalar_lea.vmem %s18, 32
  %v2865 = vld [vmem:[%s2864] sm:$0xf]
  %v2866 = vld [vmem:[%s2864 + $0x4] sm:$0xf]
  %v2867 = vld [vmem:[%s2864 + $0x8] sm:$0xf]
  %v2868 = vld [vmem:[%s2864 + $0xc] sm:$0xf]
  %v2869 = vld [vmem:[%s2864 + $0x10] sm:$0xf]
  %v2870 = vld [vmem:[%s2864 + $0x14] sm:$0xf]
  %v2871 = vld [vmem:[%s2864 + $0x18] sm:$0xf]
  %v2872 = vld [vmem:[%s2864 + $0x1c] sm:$0xf]
  %s2873 = scalar_lea.vmem %s19, 1
  %v2874 = vld [vmem:[%s2873] sm:$0x1]
  %v2875 = vpack.c.bf16 %v2748, %v2747
  %v2876 = vpack.c.bf16 %v2750, %v2749
  %v2878 = vlaneseq
  %v2879 = vshrl.u32 %v2878, 7
  %v2880 = vsub.s32 0, %v2879
  %v2881 = vrot.slane %v2761, %v2880
  %v2887 = vunpack.c.l.b16 %v2756
  %v2888 = vunpack.c.l.b16 %v2757
  %v2889 = vunpack.c.l.b16 %v2758
  %v2890 = vunpack.c.l.b16 %v2759
  %v2891 = vpack.c.b16 %v2888, %v2887
  %v2892 = vpack.c.b16 %v2890, %v2889
  %v2896 = vsel %vm359, %v2875, 0
  %v2899 = vsel %vm359, %v2876, 0
  %2901 = vmatprep.subr.bf16.mxu0 0
  %2902 = vmatpush1.bf16.msra.mxu0 %v2891
  %2903 = vmatprep.subr.bf16.mxu0 0
  %2904 = vmatpush1.bf16.msra.mxu0 %v2892
  %2905 = vmatprep.subr.bf16.mxu0 0
  %2906 = vmatpush1.bf16.msra.mxu0 0
  %2907 = vmatprep.subr.bf16.mxu0 0
  %2908 = vmatpush1.bf16.msra.mxu0 0
  %2909 = vmatprep.subr.bf16.mxu0 0
  %2910 = vmatpush1.bf16.msra.mxu0 0
  %2911 = vmatprep.subr.bf16.mxu0 0
  %2912 = vmatpush1.bf16.msra.mxu0 0
  %2913 = vmatprep.subr.bf16.mxu0 0
  %2914 = vmatpush1.bf16.msra.mxu0 0
  %2915 = vmatprep.subr.bf16.mxu0 0
  %2916 = vmatpush1.bf16.msra.mxu0 0
  %2917 = vmatprep.subr.bf16.mxu0 0
  %2918 = vmatpush1.bf16.msra.mxu0 0
  %2919 = vmatprep.subr.bf16.mxu0 0
  %2920 = vmatpush1.bf16.msra.mxu0 0
  %2921 = vmatprep.subr.bf16.mxu0 0
  %2922 = vmatpush1.bf16.msra.mxu0 0
  %2923 = vmatprep.subr.bf16.mxu0 0
  %2924 = vmatpush1.bf16.msra.mxu0 0
  %2925 = vmatprep.subr.bf16.mxu0 0
  %2926 = vmatpush1.bf16.msra.mxu0 0
  %2927 = vmatprep.subr.bf16.mxu0 0
  %2928 = vmatpush1.bf16.msra.mxu0 0
  %2929 = vmatprep.subr.bf16.mxu0 0
  %2930 = vmatpush1.bf16.msra.mxu0 0
  %2931 = vmatprep.subr.bf16.mxu0 0
  %2932 = vmatpush1.bf16.msra.mxu0 0
  %2933 = vmatprep.mubr.bf16.mxu0 0
  %2934 = vmatmul.mubr.bf16.gmra.mrb[0].mxu0 %v2896
  %v2935 = vpop.f32.mrb[0].mxu0
  %v2936 = vadd.f32 %v2881, %v2935
  %v2937 = vpop.f32.mrb[0].mxu0
  %v2938 = vpop.f32.mrb[0].mxu0
  %v2939 = vadd.f32 %v2881, %v2938
  %v2940 = vpop.f32.mrb[0].mxu0
  %2941 = vmatprep.mubr.bf16.mxu0 0
  %2942 = vmatmul.mubr.bf16.gmra.mrb[0].mxu0 %v2899
  %v2943 = vpop.f32.mrb[0].mxu0
  %v2944 = vadd.f32 %v2881, %v2943
  %v2945 = vpop.f32.mrb[0].mxu0
  %v2946 = vpop.f32.mrb[0].mxu0
  %v2947 = vadd.f32 %v2881, %v2946
  %v2948 = vpop.f32.mrb[0].mxu0
  %2949 = vdwg.mxu0
  %v2950 = vpack.c.bf16 %v2939, %v2936
  %v2951 = vpack.c.bf16 %v2947, %v2944
  %v2956 = vunpack.c.l.b16 %v2763
  %v2957 = vunpack.c.l.b16 %v2764
  %v2958 = vunpack.c.l.b16 %v2765
  %v2959 = vunpack.c.l.b16 %v2766
  %v2960 = vpack.c.b16 %v2957, %v2956
  %v2961 = vpack.c.b16 %v2959, %v2958
  %v2965 = vsel %vm359, %v2950, 0
  %v2968 = vsel %vm359, %v2951, 0
  %2970 = vmatprep.subr.bf16.mxu0 0
  %2971 = vmatpush1.bf16.msra.mxu0 %v2960
  %2972 = vmatprep.subr.bf16.mxu0 0
  %2973 = vmatpush1.bf16.msra.mxu0 %v2961
  %2974 = vmatprep.subr.bf16.mxu0 0
  %2975 = vmatpush1.bf16.msra.mxu0 0
  %2976 = vmatprep.subr.bf16.mxu0 0
  %2977 = vmatpush1.bf16.msra.mxu0 0
  %2978 = vmatprep.subr.bf16.mxu0 0
  %2979 = vmatpush1.bf16.msra.mxu0 0
  %2980 = vmatprep.subr.bf16.mxu0 0
  %2981 = vmatpush1.bf16.msra.mxu0 0
  %2982 = vmatprep.subr.bf16.mxu0 0
  %2983 = vmatpush1.bf16.msra.mxu0 0
  %2984 = vmatprep.subr.bf16.mxu0 0
  %2985 = vmatpush1.bf16.msra.mxu0 0
  %2986 = vmatprep.subr.bf16.mxu0 0
  %2987 = vmatpush1.bf16.msra.mxu0 0
  %2988 = vmatprep.subr.bf16.mxu0 0
  %2989 = vmatpush1.bf16.msra.mxu0 0
  %2990 = vmatprep.subr.bf16.mxu0 0
  %2991 = vmatpush1.bf16.msra.mxu0 0
  %2992 = vmatprep.subr.bf16.mxu0 0
  %2993 = vmatpush1.bf16.msra.mxu0 0
  %2994 = vmatprep.subr.bf16.mxu0 0
  %2995 = vmatpush1.bf16.msra.mxu0 0
  %2996 = vmatprep.subr.bf16.mxu0 0
  %2997 = vmatpush1.bf16.msra.mxu0 0
  %2998 = vmatprep.subr.bf16.mxu0 0
  %2999 = vmatpush1.bf16.msra.mxu0 0
  %3000 = vmatprep.subr.bf16.mxu0 0
  %3001 = vmatpush1.bf16.msra.mxu0 0
  %3002 = vmatprep.mubr.bf16.mxu0 0
  %3003 = vmatmul.mubr.bf16.gmra.mrb[0].mxu0 %v2965
  %v3004 = vpop.f32.mrb[0].mxu0
  %v3005 = vadd.f32 0.0, %v3004
  %v3006 = vpop.f32.mrb[0].mxu0
  %v3007 = vpop.f32.mrb[0].mxu0
  %v3008 = vadd.f32 0.0, %v3007
  %v3009 = vpop.f32.mrb[0].mxu0
  %3010 = vmatprep.mubr.bf16.mxu0 0
  %3011 = vmatmul.mubr.bf16.gmra.mrb[0].mxu0 %v2968
  %v3012 = vpop.f32.mrb[0].mxu0
  %v3013 = vadd.f32 0.0, %v3012
  %v3014 = vpop.f32.mrb[0].mxu0
  %v3015 = vpop.f32.mrb[0].mxu0
  %v3016 = vadd.f32 0.0, %v3015
  %v3017 = vpop.f32.mrb[0].mxu0
  %3018 = vdwg.mxu0
  %v3019 = vpack.c.bf16 %v3008, %v3005
  %v3020 = vpack.c.bf16 %v3016, %v3013
  %v3022 = vsel %vm551, %v3019, 0
  %v3025 = vsel %vm551, %v3020, 0
  %3027 = vmatprep.subr.bf16.mxu0 %v527
  %3028 = vmatpush1.bf16.msra.mxu0 %v526
  %3029 = vmatprep.subr.bf16.mxu0 %v532
  %3030 = vmatpush1.bf16.msra.mxu0 %v531
  %3031 = vmatprep.subr.bf16.mxu0 %v563
  %3032 = vmatpush1.bf16.msra.mxu0 %v560
  %3033 = vmatprep.subr.bf16.mxu0 0
  %3034 = vmatpush1.bf16.msra.mxu0 0
  %3035 = vmatprep.subr.bf16.mxu0 0
  %3036 = vmatpush1.bf16.msra.mxu0 0
  %3037 = vmatprep.subr.bf16.mxu0 0
  %3038 = vmatpush1.bf16.msra.mxu0 0
  %3039 = vmatprep.subr.bf16.mxu0 0
  %3040 = vmatpush1.bf16.msra.mxu0 0
  %3041 = vmatprep.subr.bf16.mxu0 0
  %3042 = vmatpush1.bf16.msra.mxu0 0
  %3043 = vmatprep.subr.bf16.mxu0 0
  %3044 = vmatpush1.bf16.msra.mxu0 0
  %3045 = vmatprep.subr.bf16.mxu0 0
  %3046 = vmatpush1.bf16.msra.mxu0 0
  %3047 = vmatprep.subr.bf16.mxu0 0
  %3048 = vmatpush1.bf16.msra.mxu0 0
  %3049 = vmatprep.subr.bf16.mxu0 0
  %3050 = vmatpush1.bf16.msra.mxu0 0
  %3051 = vmatprep.subr.bf16.mxu0 0
  %3052 = vmatpush1.bf16.msra.mxu0 0
  %3053 = vmatprep.subr.bf16.mxu0 0
  %3054 = vmatpush1.bf16.msra.mxu0 0
  %3055 = vmatprep.subr.bf16.mxu0 0
  %3056 = vmatpush1.bf16.msra.mxu0 0
  %3057 = vmatprep.subr.bf16.mxu0 0
  %3058 = vmatpush1.bf16.msra.mxu0 0
  %3059 = vmatprep.mubr.bf16.mxu0 0
  %3060 = vmatmul.mubr.bf16.gmra.mrb[0].mxu0 %v3022
  %v3061 = vpop.f32.mrb[0].mxu0
  %v3062 = vadd.f32 0.0, %v3061
  %v3063 = vpop.f32.mrb[0].mxu0
  %v3064 = vadd.f32 0.0, %v3063
  %v3065 = vpop.f32.mrb[0].mxu0
  %v3066 = vadd.f32 0.0, %v3065
  %v3067 = vpop.f32.mrb[0].mxu0
  %v3068 = vadd.f32 0.0, %v3067
  %3069 = vmatprep.mubr.bf16.mxu0 0
  %3070 = vmatmul.mubr.bf16.gmra.mrb[0].mxu0 %v3025
  %v3071 = vpop.f32.mrb[0].mxu0
  %v3072 = vadd.f32 0.0, %v3071
  %v3073 = vpop.f32.mrb[0].mxu0
  %v3074 = vadd.f32 0.0, %v3073
  %v3075 = vpop.f32.mrb[0].mxu0
  %v3076 = vadd.f32 0.0, %v3075
  %v3077 = vpop.f32.mrb[0].mxu0
  %v3078 = vadd.f32 0.0, %v3077
  %3079 = vdwg.mxu0
  %3080 = vmatprep.subr.bf16.mxu0 %v529
  %3081 = vmatpush1.bf16.msra.mxu0 %v528
  %3082 = vmatprep.subr.bf16.mxu0 %v534
  %3083 = vmatpush1.bf16.msra.mxu0 %v533
  %3084 = vmatprep.subr.bf16.mxu0 %v569
  %3085 = vmatpush1.bf16.msra.mxu0 %v566
  %3086 = vmatprep.subr.bf16.mxu0 0
  %3087 = vmatpush1.bf16.msra.mxu0 0
  %3088 = vmatprep.subr.bf16.mxu0 0
  %3089 = vmatpush1.bf16.msra.mxu0 0
  %3090 = vmatprep.subr.bf16.mxu0 0
  %3091 = vmatpush1.bf16.msra.mxu0 0
  %3092 = vmatprep.subr.bf16.mxu0 0
  %3093 = vmatpush1.bf16.msra.mxu0 0
  %3094 = vmatprep.subr.bf16.mxu0 0
  %3095 = vmatpush1.bf16.msra.mxu0 0
  %3096 = vmatprep.subr.bf16.mxu0 0
  %3097 = vmatpush1.bf16.msra.mxu0 0
  %3098 = vmatprep.subr.bf16.mxu0 0
  %3099 = vmatpush1.bf16.msra.mxu0 0
  %3100 = vmatprep.subr.bf16.mxu0 0
  %3101 = vmatpush1.bf16.msra.mxu0 0
  %3102 = vmatprep.subr.bf16.mxu0 0
  %3103 = vmatpush1.bf16.msra.mxu0 0
  %3104 = vmatprep.subr.bf16.mxu0 0
  %3105 = vmatpush1.bf16.msra.mxu0 0
  %3106 = vmatprep.subr.bf16.mxu0 0
  %3107 = vmatpush1.bf16.msra.mxu0 0
  %3108 = vmatprep.subr.bf16.mxu0 0
  %3109 = vmatpush1.bf16.msra.mxu0 0
  %3110 = vmatprep.subr.bf16.mxu0 0
  %3111 = vmatpush1.bf16.msra.mxu0 0
  %3112 = vmatprep.mubr.bf16.mxu0 0
  %3113 = vmatmul.mubr.bf16.gmra.mrb[0].mxu0 %v3022
  %v3114 = vpop.f32.mrb[0].mxu0
  %v3115 = vadd.f32 0.0, %v3114
  %v3116 = vpop.f32.mrb[0].mxu0
  %v3117 = vadd.f32 0.0, %v3116
  %v3118 = vpop.f32.mrb[0].mxu0
  %v3119 = vadd.f32 0.0, %v3118
  %v3120 = vpop.f32.mrb[0].mxu0
  %v3121 = vadd.f32 0.0, %v3120
  %3122 = vmatprep.mubr.bf16.mxu0 0
  %3123 = vmatmul.mubr.bf16.gmra.mrb[0].mxu0 %v3025
  %v3124 = vpop.f32.mrb[0].mxu0
  %v3125 = vadd.f32 0.0, %v3124
  %v3126 = vpop.f32.mrb[0].mxu0
  %v3127 = vadd.f32 0.0, %v3126
  %v3128 = vpop.f32.mrb[0].mxu0
  %v3129 = vadd.f32 0.0, %v3128
  %v3130 = vpop.f32.mrb[0].mxu0
  %v3131 = vadd.f32 0.0, %v3130
  %3132 = vdwg.mxu0
  %3133 = vmatprep.subr.bf16.mxu0 0
  %3134 = vmatpush1.bf16.msra.mxu0 %v530
  %3135 = vmatprep.subr.bf16.mxu0 0
  %3136 = vmatpush1.bf16.msra.mxu0 %v535
  %3137 = vmatprep.subr.bf16.mxu0 0
  %3138 = vmatpush1.bf16.msra.mxu0 %v572
  %3139 = vmatprep.subr.bf16.mxu0 0
  %3140 = vmatpush1.bf16.msra.mxu0 0
  %3141 = vmatprep.subr.bf16.mxu0 0
  %3142 = vmatpush1.bf16.msra.mxu0 0
  %3143 = vmatprep.subr.bf16.mxu0 0
  %3144 = vmatpush1.bf16.msra.mxu0 0
  %3145 = vmatprep.subr.bf16.mxu0 0
  %3146 = vmatpush1.bf16.msra.mxu0 0
  %3147 = vmatprep.subr.bf16.mxu0 0
  %3148 = vmatpush1.bf16.msra.mxu0 0
  %3149 = vmatprep.subr.bf16.mxu0 0
  %3150 = vmatpush1.bf16.msra.mxu0 0
  %3151 = vmatprep.subr.bf16.mxu0 0
  %3152 = vmatpush1.bf16.msra.mxu0 0
  %3153 = vmatprep.subr.bf16.mxu0 0
  %3154 = vmatpush1.bf16.msra.mxu0 0
  %3155 = vmatprep.subr.bf16.mxu0 0
  %3156 = vmatpush1.bf16.msra.mxu0 0
  %3157 = vmatprep.subr.bf16.mxu0 0
  %3158 = vmatpush1.bf16.msra.mxu0 0
  %3159 = vmatprep.subr.bf16.mxu0 0
  %3160 = vmatpush1.bf16.msra.mxu0 0
  %3161 = vmatprep.subr.bf16.mxu0 0
  %3162 = vmatpush1.bf16.msra.mxu0 0
  %3163 = vmatprep.subr.bf16.mxu0 0
  %3164 = vmatpush1.bf16.msra.mxu0 0
  %3165 = vmatprep.mubr.bf16.mxu0 0
  %3166 = vmatmul.mubr.bf16.gmra.mrb[0].mxu0 %v3022
  %v3167 = vpop.f32.mrb[0].mxu0
  %v3168 = vadd.f32 0.0, %v3167
  %v3169 = vpop.f32.mrb[0].mxu0
  %v3170 = vpop.f32.mrb[0].mxu0
  %v3171 = vadd.f32 0.0, %v3170
  %v3172 = vpop.f32.mrb[0].mxu0
  %3173 = vmatprep.mubr.bf16.mxu0 0
  %3174 = vmatmul.mubr.bf16.gmra.mrb[0].mxu0 %v3025
  %v3175 = vpop.f32.mrb[0].mxu0
  %v3176 = vadd.f32 0.0, %v3175
  %v3177 = vpop.f32.mrb[0].mxu0
  %v3178 = vpop.f32.mrb[0].mxu0
  %v3179 = vadd.f32 0.0, %v3178
  %v3180 = vpop.f32.mrb[0].mxu0
  %3181 = vdwg.mxu0
  %v3182 = vmul.f32 %v3062, %v74
  %v3183 = vmul.f32 %v3064, %v75
  %v3184 = vmul.f32 %v3115, %v76
  %v3185 = vmul.f32 %v3117, %v77
  %v3186 = vmul.f32 %v3168, %v78
  %v3187 = vmul.f32 %v3066, %v79
  %v3188 = vmul.f32 %v3068, %v80
  %v3189 = vmul.f32 %v3119, %v81
  %v3190 = vmul.f32 %v3121, %v82
  %v3191 = vmul.f32 %v3171, %v83
  %v3192 = vmul.f32 %v3072, %v84
  %v3193 = vmul.f32 %v3074, %v85
  %v3194 = vmul.f32 %v3125, %v86
  %v3195 = vmul.f32 %v3127, %v87
  %v3196 = vmul.f32 %v3176, %v88
  %v3197 = vmul.f32 %v3076, %v89
  %v3198 = vmul.f32 %v3078, %v90
  %v3199 = vmul.f32 %v3129, %v91
  %v3200 = vmul.f32 %v3131, %v92
  %v3201 = vmul.f32 %v3179, %v93
  %v3202 = vpack.c.bf16 %v3187, %v3182
  %v3203 = vpack.c.bf16 %v3188, %v3183
  %v3204 = vpack.c.bf16 %v3189, %v3184
  %v3205 = vpack.c.bf16 %v3190, %v3185
  %v3206 = vpack.c.bf16 %v3191, %v3186
  %v3207 = vpack.c.bf16 %v3197, %v3192
  %v3208 = vpack.c.bf16 %v3198, %v3193
  %v3209 = vpack.c.bf16 %v3199, %v3194
  %v3210 = vpack.c.bf16 %v3200, %v3195
  %v3211 = vpack.c.bf16 %v3201, %v3196
  %3212 = vmatprep.subr.bf16.mxu0 0
  %3213 = vmatpush1.bf16.msra.mxu0 %v919
  %3214 = vmatprep.subr.bf16.mxu0 0
  %3215 = vmatpush1.bf16.msra.mxu0 %v920
  %3216 = vmatprep.subr.bf16.mxu0 0
  %3217 = vmatpush1.bf16.msra.mxu0 %v921
  %3218 = vmatprep.subr.bf16.mxu0 0
  %3219 = vmatpush1.bf16.msra.mxu0 %v922
  %3220 = vmatprep.subr.bf16.mxu0 0
  %3221 = vmatpush1.bf16.msra.mxu0 %v923
  %3222 = vmatprep.subr.bf16.mxu0 0
  %3223 = vmatpush1.bf16.msra.mxu0 %v924
  %3224 = vmatprep.subr.bf16.mxu0 0
  %3225 = vmatpush1.bf16.msra.mxu0 %v925
  %3226 = vmatprep.subr.bf16.mxu0 0
  %3227 = vmatpush1.bf16.msra.mxu0 %v926
  %3228 = vmatprep.subr.bf16.mxu0 0
  %3229 = vmatpush1.bf16.msra.mxu0 %v927
  %3230 = vmatprep.subr.bf16.mxu0 0
  %3231 = vmatpush1.bf16.msra.mxu0 %v928
  %3232 = vmatprep.subr.bf16.mxu0 0
  %3233 = vmatpush1.bf16.msra.mxu0 %v929
  %3234 = vmatprep.subr.bf16.mxu0 0
  %3235 = vmatpush1.bf16.msra.mxu0 %v930
  %3236 = vmatprep.subr.bf16.mxu0 0
  %3237 = vmatpush1.bf16.msra.mxu0 %v931
  %3238 = vmatprep.subr.bf16.mxu0 0
  %3239 = vmatpush1.bf16.msra.mxu0 %v932
  %3240 = vmatprep.subr.bf16.mxu0 0
  %3241 = vmatpush1.bf16.msra.mxu0 %v933
  %3242 = vmatprep.subr.bf16.mxu0 0
  %3243 = vmatpush1.bf16.msra.mxu0 %v934
  %3244 = vmatprep.mubr.bf16.mxu0 %v3203
  %3245 = vmatmul.mubr.bf16.gmra.mrb[0].mxu0 %v3202
  %v3246 = vpop.f32.mrb[0].mxu0
  %v3247 = vadd.f32 0.0, %v3246
  %v3248 = vpop.f32.mrb[0].mxu0
  %v3249 = vpop.f32.mrb[0].mxu0
  %v3250 = vadd.f32 0.0, %v3249
  %v3251 = vpop.f32.mrb[0].mxu0
  %3252 = vmatprep.mubr.bf16.mxu0 %v3208
  %3253 = vmatmul.mubr.bf16.gmra.mrb[0].mxu0 %v3207
  %v3254 = vpop.f32.mrb[0].mxu0
  %v3255 = vadd.f32 0.0, %v3254
  %v3256 = vpop.f32.mrb[0].mxu0
  %v3257 = vpop.f32.mrb[0].mxu0
  %v3258 = vadd.f32 0.0, %v3257
  %v3259 = vpop.f32.mrb[0].mxu0
  %3260 = vdwg.mxu0
  %3261 = vmatprep.subr.bf16.mxu0 0
  %3262 = vmatpush1.bf16.msra.mxu0 %v935
  %3263 = vmatprep.subr.bf16.mxu0 0
  %3264 = vmatpush1.bf16.msra.mxu0 %v936
  %3265 = vmatprep.subr.bf16.mxu0 0
  %3266 = vmatpush1.bf16.msra.mxu0 %v937
  %3267 = vmatprep.subr.bf16.mxu0 0
  %3268 = vmatpush1.bf16.msra.mxu0 %v938
  %3269 = vmatprep.subr.bf16.mxu0 0
  %3270 = vmatpush1.bf16.msra.mxu0 %v939
  %3271 = vmatprep.subr.bf16.mxu0 0
  %3272 = vmatpush1.bf16.msra.mxu0 %v940
  %3273 = vmatprep.subr.bf16.mxu0 0
  %3274 = vmatpush1.bf16.msra.mxu0 %v941
  %3275 = vmatprep.subr.bf16.mxu0 0
  %3276 = vmatpush1.bf16.msra.mxu0 %v942
  %3277 = vmatprep.subr.bf16.mxu0 0
  %3278 = vmatpush1.bf16.msra.mxu0 %v943
  %3279 = vmatprep.subr.bf16.mxu0 0
  %3280 = vmatpush1.bf16.msra.mxu0 %v944
  %3281 = vmatprep.subr.bf16.mxu0 0
  %3282 = vmatpush1.bf16.msra.mxu0 %v945
  %3283 = vmatprep.subr.bf16.mxu0 0
  %3284 = vmatpush1.bf16.msra.mxu0 %v946
  %3285 = vmatprep.subr.bf16.mxu0 0
  %3286 = vmatpush1.bf16.msra.mxu0 %v947
  %3287 = vmatprep.subr.bf16.mxu0 0
  %3288 = vmatpush1.bf16.msra.mxu0 %v948
  %3289 = vmatprep.subr.bf16.mxu0 0
  %3290 = vmatpush1.bf16.msra.mxu0 %v949
  %3291 = vmatprep.subr.bf16.mxu0 0
  %3292 = vmatpush1.bf16.msra.mxu0 %v950
  %3293 = vmatprep.mubr.bf16.mxu0 %v3205
  %3294 = vmatmul.mubr.bf16.gmra.mrb[0].mxu0 %v3204
  %v3295 = vpop.f32.mrb[0].mxu0
  %v3296 = vadd.f32 %v3247, %v3295
  %v3297 = vpop.f32.mrb[0].mxu0
  %v3298 = vpop.f32.mrb[0].mxu0
  %v3299 = vadd.f32 %v3250, %v3298
  %v3300 = vpop.f32.mrb[0].mxu0
  %3301 = vmatprep.mubr.bf16.mxu0 %v3210
  %3302 = vmatmul.mubr.bf16.gmra.mrb[0].mxu0 %v3209
  %v3303 = vpop.f32.mrb[0].mxu0
  %v3304 = vadd.f32 %v3255, %v3303
  %v3305 = vpop.f32.mrb[0].mxu0
  %v3306 = vpop.f32.mrb[0].mxu0
  %v3307 = vadd.f32 %v3258, %v3306
  %v3308 = vpop.f32.mrb[0].mxu0
  %3309 = vdwg.mxu0
  %3310 = vmatprep.subr.bf16.mxu0 0
  %3311 = vmatpush1.bf16.msra.mxu0 %v951
  %3312 = vmatprep.subr.bf16.mxu0 0
  %3313 = vmatpush1.bf16.msra.mxu0 %v952
  %3314 = vmatprep.subr.bf16.mxu0 0
  %3315 = vmatpush1.bf16.msra.mxu0 %v953
  %3316 = vmatprep.subr.bf16.mxu0 0
  %3317 = vmatpush1.bf16.msra.mxu0 %v954
  %3318 = vmatprep.subr.bf16.mxu0 0
  %3319 = vmatpush1.bf16.msra.mxu0 %v955
  %3320 = vmatprep.subr.bf16.mxu0 0
  %3321 = vmatpush1.bf16.msra.mxu0 %v956
  %3322 = vmatprep.subr.bf16.mxu0 0
  %3323 = vmatpush1.bf16.msra.mxu0 %v957
  %3324 = vmatprep.subr.bf16.mxu0 0
  %3325 = vmatpush1.bf16.msra.mxu0 %v958
  %3326 = vmatprep.subr.bf16.mxu0 0
  %3327 = vmatpush1.bf16.msra.mxu0 0
  %3328 = vmatprep.subr.bf16.mxu0 0
  %3329 = vmatpush1.bf16.msra.mxu0 0
  %3330 = vmatprep.subr.bf16.mxu0 0
  %3331 = vmatpush1.bf16.msra.mxu0 0
  %3332 = vmatprep.subr.bf16.mxu0 0
  %3333 = vmatpush1.bf16.msra.mxu0 0
  %3334 = vmatprep.subr.bf16.mxu0 0
  %3335 = vmatpush1.bf16.msra.mxu0 0
  %3336 = vmatprep.subr.bf16.mxu0 0
  %3337 = vmatpush1.bf16.msra.mxu0 0
  %3338 = vmatprep.subr.bf16.mxu0 0
  %3339 = vmatpush1.bf16.msra.mxu0 0
  %3340 = vmatprep.subr.bf16.mxu0 0
  %3341 = vmatpush1.bf16.msra.mxu0 0
  %3342 = vmatprep.mubr.bf16.mxu0 0
  %3343 = vmatmul.mubr.bf16.gmra.mrb[0].mxu0 %v3206
  %v3344 = vpop.f32.mrb[0].mxu0
  %v3345 = vadd.f32 %v3296, %v3344
  %v3346 = vpop.f32.mrb[0].mxu0
  %v3347 = vpop.f32.mrb[0].mxu0
  %v3348 = vadd.f32 %v3299, %v3347
  %v3349 = vpop.f32.mrb[0].mxu0
  %3350 = vmatprep.mubr.bf16.mxu0 0
  %3351 = vmatmul.mubr.bf16.gmra.mrb[0].mxu0 %v3211
  %v3352 = vpop.f32.mrb[0].mxu0
  %v3353 = vadd.f32 %v3304, %v3352
  %v3354 = vpop.f32.mrb[0].mxu0
  %v3355 = vpop.f32.mrb[0].mxu0
  %v3356 = vadd.f32 %v3307, %v3355
  %v3357 = vpop.f32.mrb[0].mxu0
  %3358 = vdwg.mxu0
  %v3359 = vmul.f32 %v2936, %v1155
  %v3360 = vmul.f32 %v2939, %v1157
  %v3361 = vmul.f32 %v2936, %v1159
  %v3362 = vmul.f32 %v2939, %v1161
  %v3363 = vmul.f32 %v2936, %v1163
  %v3364 = vmul.f32 %v2939, %v1165
  %v3365 = vmul.f32 %v2936, %v1167
  %v3366 = vmul.f32 %v2939, %v1169
  %v3367 = vpack.c.bf16 %v3360, %v3359
  %v3368 = vpack.c.bf16 %v3362, %v3361
  %v3369 = vpack.c.bf16 %v3364, %v3363
  %v3370 = vpack.c.bf16 %v3366, %v3365
  %v3371 = vmul.f32 %v2936, %v1191
  %v3372 = vmul.f32 %v2939, %v1193
  %v3373 = vmul.f32 %v2936, %v1195
  %v3374 = vmul.f32 %v2939, %v1197
  %v3375 = vmul.f32 %v2936, %v1199
  %v3376 = vmul.f32 %v2939, %v1201
  %v3377 = vmul.f32 %v2936, %v1203
  %v3378 = vmul.f32 %v2939, %v1205
  %v3379 = vpack.c.bf16 %v3372, %v3371
  %v3380 = vpack.c.bf16 %v3374, %v3373
  %v3381 = vpack.c.bf16 %v3376, %v3375
  %v3382 = vpack.c.bf16 %v3378, %v3377
  %3387 = vrot.lane.b32.xlu0 %v3367, 96
  %v3388 = vpop.permute.xlu0 %3387
  %3389 = vrot.lane.b32.xlu0 %v3368, 96
  %v3390 = vpop.permute.xlu0 %3389
  %3391 = vrot.lane.b32.xlu0 %v3369, 96
  %v3392 = vpop.permute.xlu0 %3391
  %3393 = vrot.lane.b32.xlu0 %v3370, 96
  %v3394 = vpop.permute.xlu0 %3393
  %v3396 = vsel %vm359, %v3388, 0
  %v3399 = vsel %vm359, %v3390, 0
  %v3402 = vsel %vm359, %v3392, 0
  %v3405 = vsel %vm359, %v3394, 0
  %3407 = vmatprep.subr.bf16.mxu0 0
  %3408 = vmatpush1.bf16.xpose.msra.mxu0 %v3396
  %3409 = vmatprep.subr.bf16.mxu0 0
  %3410 = vmatpush1.bf16.xpose.msra.mxu0 %v3399
  %3411 = vmatprep.subr.bf16.mxu0 0
  %3412 = vmatpush1.bf16.xpose.msra.mxu0 %v3402
  %3413 = vmatprep.subr.bf16.mxu0 0
  %3414 = vmatpush1.bf16.xpose.msra.mxu0 %v3405
  %3415 = vmatprep.subr.bf16.mxu0 0
  %3416 = vmatpush1.bf16.xpose.msra.mxu0 0
  %3417 = vmatprep.subr.bf16.mxu0 0
  %3418 = vmatpush1.bf16.xpose.msra.mxu0 0
  %3419 = vmatprep.subr.bf16.mxu0 0
  %3420 = vmatpush1.bf16.xpose.msra.mxu0 0
  %3421 = vmatprep.subr.bf16.mxu0 0
  %3422 = vmatpush1.bf16.xpose.msra.mxu0 0
  %3423 = vmatprep.subr.bf16.mxu0 0
  %3424 = vmatpush1.bf16.xpose.msra.mxu0 0
  %3425 = vmatprep.subr.bf16.mxu0 0
  %3426 = vmatpush1.bf16.xpose.msra.mxu0 0
  %3427 = vmatprep.subr.bf16.mxu0 0
  %3428 = vmatpush1.bf16.xpose.msra.mxu0 0
  %3429 = vmatprep.subr.bf16.mxu0 0
  %3430 = vmatpush1.bf16.xpose.msra.mxu0 0
  %3431 = vmatprep.subr.bf16.mxu0 0
  %3432 = vmatpush1.bf16.xpose.msra.mxu0 0
  %3433 = vmatprep.subr.bf16.mxu0 0
  %3434 = vmatpush1.bf16.xpose.msra.mxu0 0
  %3435 = vmatprep.subr.bf16.mxu0 0
  %3436 = vmatpush1.bf16.xpose.msra.mxu0 0
  %3437 = vmatprep.subr.bf16.mxu0 0
  %3438 = vmatpush1.bf16.xpose.msra.mxu0 0
  %3439 = vmatprep.mubr.bf16.mxu0 0
  %3440 = vmatmul.mubr.bf16.gmra.mrb[0].mxu0 %v2965
  %v3441 = vpop.f32.mrb[0].mxu0
  %v3442 = vadd.f32 0.0, %v3441
  %v3443 = vpop.f32.mrb[0].mxu0
  %v3444 = vpop.f32.mrb[0].mxu0
  %v3445 = vadd.f32 0.0, %v3444
  %v3446 = vpop.f32.mrb[0].mxu0
  %3447 = vdwg.mxu0
  %v3448 = vmul.f32 %v2944, %v1155
  %v3449 = vmul.f32 %v2947, %v1157
  %v3450 = vmul.f32 %v2944, %v1159
  %v3451 = vmul.f32 %v2947, %v1161
  %v3452 = vmul.f32 %v2944, %v1163
  %v3453 = vmul.f32 %v2947, %v1165
  %v3454 = vmul.f32 %v2944, %v1167
  %v3455 = vmul.f32 %v2947, %v1169
  %v3456 = vpack.c.bf16 %v3449, %v3448
  %v3457 = vpack.c.bf16 %v3451, %v3450
  %v3458 = vpack.c.bf16 %v3453, %v3452
  %v3459 = vpack.c.bf16 %v3455, %v3454
  %v3460 = vmul.f32 %v2944, %v1191
  %v3461 = vmul.f32 %v2947, %v1193
  %v3462 = vmul.f32 %v2944, %v1195
  %v3463 = vmul.f32 %v2947, %v1197
  %v3464 = vmul.f32 %v2944, %v1199
  %v3465 = vmul.f32 %v2947, %v1201
  %v3466 = vmul.f32 %v2944, %v1203
  %v3467 = vmul.f32 %v2947, %v1205
  %v3468 = vpack.c.bf16 %v3461, %v3460
  %v3469 = vpack.c.bf16 %v3463, %v3462
  %v3470 = vpack.c.bf16 %v3465, %v3464
  %v3471 = vpack.c.bf16 %v3467, %v3466
  %3476 = vrot.lane.b32.xlu0 %v3456, 96
  %v3477 = vpop.permute.xlu0 %3476
  %3478 = vrot.lane.b32.xlu0 %v3457, 96
  %v3479 = vpop.permute.xlu0 %3478
  %3480 = vrot.lane.b32.xlu0 %v3458, 96
  %v3481 = vpop.permute.xlu0 %3480
  %3482 = vrot.lane.b32.xlu0 %v3459, 96
  %v3483 = vpop.permute.xlu0 %3482
  %v3485 = vsel %vm359, %v3477, 0
  %v3488 = vsel %vm359, %v3479, 0
  %v3491 = vsel %vm359, %v3481, 0
  %v3494 = vsel %vm359, %v3483, 0
  %3496 = vmatprep.subr.bf16.mxu0 0
  %3497 = vmatpush1.bf16.xpose.msra.mxu0 %v3485
  %3498 = vmatprep.subr.bf16.mxu0 0
  %3499 = vmatpush1.bf16.xpose.msra.mxu0 %v3488
  %3500 = vmatprep.subr.bf16.mxu0 0
  %3501 = vmatpush1.bf16.xpose.msra.mxu0 %v3491
  %3502 = vmatprep.subr.bf16.mxu0 0
  %3503 = vmatpush1.bf16.xpose.msra.mxu0 %v3494
  %3504 = vmatprep.subr.bf16.mxu0 0
  %3505 = vmatpush1.bf16.xpose.msra.mxu0 0
  %3506 = vmatprep.subr.bf16.mxu0 0
  %3507 = vmatpush1.bf16.xpose.msra.mxu0 0
  %3508 = vmatprep.subr.bf16.mxu0 0
  %3509 = vmatpush1.bf16.xpose.msra.mxu0 0
  %3510 = vmatprep.subr.bf16.mxu0 0
  %3511 = vmatpush1.bf16.xpose.msra.mxu0 0
  %3512 = vmatprep.subr.bf16.mxu0 0
  %3513 = vmatpush1.bf16.xpose.msra.mxu0 0
  %3514 = vmatprep.subr.bf16.mxu0 0
  %3515 = vmatpush1.bf16.xpose.msra.mxu0 0
  %3516 = vmatprep.subr.bf16.mxu0 0
  %3517 = vmatpush1.bf16.xpose.msra.mxu0 0
  %3518 = vmatprep.subr.bf16.mxu0 0
  %3519 = vmatpush1.bf16.xpose.msra.mxu0 0
  %3520 = vmatprep.subr.bf16.mxu0 0
  %3521 = vmatpush1.bf16.xpose.msra.mxu0 0
  %3522 = vmatprep.subr.bf16.mxu0 0
  %3523 = vmatpush1.bf16.xpose.msra.mxu0 0
  %3524 = vmatprep.subr.bf16.mxu0 0
  %3525 = vmatpush1.bf16.xpose.msra.mxu0 0
  %3526 = vmatprep.subr.bf16.mxu0 0
  %3527 = vmatpush1.bf16.xpose.msra.mxu0 0
  %3528 = vmatprep.mubr.bf16.mxu0 0
  %3529 = vmatmul.mubr.bf16.gmra.mrb[0].mxu0 %v2968
  %v3530 = vpop.f32.mrb[0].mxu0
  %v3531 = vadd.f32 0.0, %v3530
  %v3532 = vpop.f32.mrb[0].mxu0
  %v3533 = vpop.f32.mrb[0].mxu0
  %v3534 = vadd.f32 0.0, %v3533
  %v3535 = vpop.f32.mrb[0].mxu0
  %3536 = vdwg.mxu0
  %v3537 = vadd.f32 %v3442, %v3345
  %v3538 = vadd.f32 %v3445, %v3348
  %v3539 = vadd.f32 %v3531, %v3353
  %v3540 = vadd.f32 %v3534, %v3356
  %v3541 = vadd.f32 %v3537, %v70
  %v3542 = vadd.f32 %v3538, %v71
  %v3543 = vadd.f32 %v3539, %v72
  %v3544 = vadd.f32 %v3540, %v73
  %v3545 = vsel %vm1388, %v3541, -inf
  %3546 = vmax.xlane.f32.xlu0 %v3545
  %v3547 = vpop.xlane.xlu0 %3546
  %v3548 = vsel %vm1388, %v3542, -inf
  %3549 = vmax.xlane.f32.xlu0 %v3548
  %v3550 = vpop.xlane.xlu0 %3549
  %v3551 = vsel %vm1388, %v3543, -inf
  %3552 = vmax.xlane.f32.xlu0 %v3551
  %v3553 = vpop.xlane.xlu0 %3552
  %v3554 = vsel %vm1388, %v3544, -inf
  %3555 = vmax.xlane.f32.xlu0 %v3554
  %v3556 = vpop.xlane.xlu0 %3555
  %v3557 = vsub.f32 %v3541, %v3547
  %v3558 = vsub.f32 %v3542, %v3550
  %v3559 = vsub.f32 %v3543, %v3553
  %v3560 = vsub.f32 %v3544, %v3556
  %v3561 = vmul.f32 %v3557, 1.442695
  %v3562 = vpow.pop %v3561
  %v3563 = vmul.f32 %v3558, 1.442695
  %v3564 = vpow.pop %v3563
  %v3565 = vmul.f32 %v3559, 1.442695
  %v3566 = vpow.pop %v3565
  %v3567 = vmul.f32 %v3560, 1.442695
  %v3568 = vpow.pop %v3567
  %v3569 = vpack.c.bf16 %v3564, %v3562
  %v3570 = vpack.c.bf16 %v3568, %v3566
  %v3572 = vsel %vm1388, %v3569, 0
  %v3575 = vsel %vm1388, %v3570, 0
  %3577 = vmatprep.subr.bf16.mxu0 0
  %3578 = vmatpush1.bf16.msra.mxu0 %v1431
  %3579 = vmatprep.subr.bf16.mxu0 0
  %3580 = vmatpush1.bf16.msra.mxu0 %v1432
  %3581 = vmatprep.subr.bf16.mxu0 0
  %3582 = vmatpush1.bf16.msra.mxu0 %v1433
  %3583 = vmatprep.subr.bf16.mxu0 0
  %3584 = vmatpush1.bf16.msra.mxu0 %v1434
  %3585 = vmatprep.subr.bf16.mxu0 0
  %3586 = vmatpush1.bf16.msra.mxu0 0
  %3587 = vmatprep.subr.bf16.mxu0 0
  %3588 = vmatpush1.bf16.msra.mxu0 0
  %3589 = vmatprep.subr.bf16.mxu0 0
  %3590 = vmatpush1.bf16.msra.mxu0 0
  %3591 = vmatprep.subr.bf16.mxu0 0
  %3592 = vmatpush1.bf16.msra.mxu0 0
  %3593 = vmatprep.subr.bf16.mxu0 0
  %3594 = vmatpush1.bf16.msra.mxu0 0
  %3595 = vmatprep.subr.bf16.mxu0 0
  %3596 = vmatpush1.bf16.msra.mxu0 0
  %3597 = vmatprep.subr.bf16.mxu0 0
  %3598 = vmatpush1.bf16.msra.mxu0 0
  %3599 = vmatprep.subr.bf16.mxu0 0
  %3600 = vmatpush1.bf16.msra.mxu0 0
  %3601 = vmatprep.subr.bf16.mxu0 0
  %3602 = vmatpush1.bf16.msra.mxu0 0
  %3603 = vmatprep.subr.bf16.mxu0 0
  %3604 = vmatpush1.bf16.msra.mxu0 0
  %3605 = vmatprep.subr.bf16.mxu0 0
  %3606 = vmatpush1.bf16.msra.mxu0 0
  %3607 = vmatprep.subr.bf16.mxu0 0
  %3608 = vmatpush1.bf16.msra.mxu0 0
  %3609 = vmatprep.mubr.bf16.mxu0 0
  %3610 = vmatmul.mubr.bf16.gmra.mrb[0].mxu0 %v3572
  %v3611 = vpop.f32.mrb[0].mxu0
  %v3612 = vadd.f32 0.0, %v3611
  %v3613 = vpop.f32.mrb[0].mxu0
  %v3614 = vpop.f32.mrb[0].mxu0
  %v3615 = vadd.f32 0.0, %v3614
  %v3616 = vpop.f32.mrb[0].mxu0
  %3617 = vmatprep.mubr.bf16.mxu0 0
  %3618 = vmatmul.mubr.bf16.gmra.mrb[0].mxu0 %v3575
  %v3619 = vpop.f32.mrb[0].mxu0
  %v3620 = vadd.f32 0.0, %v3619
  %v3621 = vpop.f32.mrb[0].mxu0
  %v3622 = vpop.f32.mrb[0].mxu0
  %v3623 = vadd.f32 0.0, %v3622
  %v3624 = vpop.f32.mrb[0].mxu0
  %3625 = vdwg.mxu0
  %v3626 = vrcp.pop %v3612
  %v3627 = vrcp.pop %v3615
  %v3628 = vrcp.pop %v3620
  %v3629 = vrcp.pop %v3623
  %v3630 = vpack.c.bf16 %v3627, %v3626
  %v3631 = vpack.c.bf16 %v3629, %v3628
  %v3633 = vsel %vm1500, %v3630, 0
  %v3636 = vsel %vm1500, %v3631, 0
  %3638 = vmatprep.subr.bf16.mxu0 0
  %3639 = vmatpush1.bf16.msra.mxu0 %v1508
  %3640 = vmatprep.subr.bf16.mxu0 0
  %3641 = vmatpush1.bf16.msra.mxu0 0
  %3642 = vmatprep.subr.bf16.mxu0 0
  %3643 = vmatpush1.bf16.msra.mxu0 0
  %3644 = vmatprep.subr.bf16.mxu0 0
  %3645 = vmatpush1.bf16.msra.mxu0 0
  %3646 = vmatprep.subr.bf16.mxu0 0
  %3647 = vmatpush1.bf16.msra.mxu0 0
  %3648 = vmatprep.subr.bf16.mxu0 0
  %3649 = vmatpush1.bf16.msra.mxu0 0
  %3650 = vmatprep.subr.bf16.mxu0 0
  %3651 = vmatpush1.bf16.msra.mxu0 0
  %3652 = vmatprep.subr.bf16.mxu0 0
  %3653 = vmatpush1.bf16.msra.mxu0 0
  %3654 = vmatprep.subr.bf16.mxu0 0
  %3655 = vmatpush1.bf16.msra.mxu0 0
  %3656 = vmatprep.subr.bf16.mxu0 0
  %3657 = vmatpush1.bf16.msra.mxu0 0
  %3658 = vmatprep.subr.bf16.mxu0 0
  %3659 = vmatpush1.bf16.msra.mxu0 0
  %3660 = vmatprep.subr.bf16.mxu0 0
  %3661 = vmatpush1.bf16.msra.mxu0 0
  %3662 = vmatprep.subr.bf16.mxu0 0
  %3663 = vmatpush1.bf16.msra.mxu0 0
  %3664 = vmatprep.subr.bf16.mxu0 0
  %3665 = vmatpush1.bf16.msra.mxu0 0
  %3666 = vmatprep.subr.bf16.mxu0 0
  %3667 = vmatpush1.bf16.msra.mxu0 0
  %3668 = vmatprep.subr.bf16.mxu0 0
  %3669 = vmatpush1.bf16.msra.mxu0 0
  %3670 = vmatprep.mubr.bf16.mxu0 0
  %3671 = vmatmul.mubr.bf16.gmra.mrb[0].mxu0 %v3633
  %v3672 = vpop.f32.mrb[0].mxu0
  %v3673 = vadd.f32 0.0, %v3672
  %v3674 = vpop.f32.mrb[0].mxu0
  %v3675 = vpop.f32.mrb[0].mxu0
  %v3676 = vadd.f32 0.0, %v3675
  %v3677 = vpop.f32.mrb[0].mxu0
  %3678 = vmatprep.mubr.bf16.mxu0 0
  %3679 = vmatmul.mubr.bf16.gmra.mrb[0].mxu0 %v3636
  %v3680 = vpop.f32.mrb[0].mxu0
  %v3681 = vadd.f32 0.0, %v3680
  %v3682 = vpop.f32.mrb[0].mxu0
  %v3683 = vpop.f32.mrb[0].mxu0
  %v3684 = vadd.f32 0.0, %v3683
  %v3685 = vpop.f32.mrb[0].mxu0
  %3686 = vdwg.mxu0
  %v3687 = vmul.f32 %v3562, %v3673
  %v3688 = vmul.f32 %v3564, %v3676
  %v3689 = vmul.f32 %v3566, %v3681
  %v3690 = vmul.f32 %v3568, %v3684
  %v3691 = vpack.c.bf16 %v3688, %v3687
  %v3692 = vpack.c.bf16 %v3690, %v3689
  %3697 = vrot.lane.b32.xlu0 %v3379, 64
  %v3698 = vpop.permute.xlu0 %3697
  %3699 = vrot.lane.b32.xlu0 %v3380, 64
  %v3700 = vpop.permute.xlu0 %3699
  %3701 = vrot.lane.b32.xlu0 %v3381, 64
  %v3702 = vpop.permute.xlu0 %3701
  %3703 = vrot.lane.b32.xlu0 %v3382, 64
  %v3704 = vpop.permute.xlu0 %3703
  %v3710 = vsel %vm1388, %v3691, 0
  %3712 = vmatprep.subr.bf16.mxu0 0
  %3713 = vmatpush1.bf16.msra.mxu0 %v3698
  %3714 = vmatprep.subr.bf16.mxu0 0
  %3715 = vmatpush1.bf16.msra.mxu0 %v3700
  %3716 = vmatprep.subr.bf16.mxu0 0
  %3717 = vmatpush1.bf16.msra.mxu0 %v3702
  %3718 = vmatprep.subr.bf16.mxu0 0
  %3719 = vmatpush1.bf16.msra.mxu0 %v3704
  %3720 = vmatprep.subr.bf16.mxu0 0
  %3721 = vmatpush1.bf16.msra.mxu0 0
  %3722 = vmatprep.subr.bf16.mxu0 0
  %3723 = vmatpush1.bf16.msra.mxu0 0
  %3724 = vmatprep.subr.bf16.mxu0 0
  %3725 = vmatpush1.bf16.msra.mxu0 0
  %3726 = vmatprep.subr.bf16.mxu0 0
  %3727 = vmatpush1.bf16.msra.mxu0 0
  %3728 = vmatprep.subr.bf16.mxu0 0
  %3729 = vmatpush1.bf16.msra.mxu0 0
  %3730 = vmatprep.subr.bf16.mxu0 0
  %3731 = vmatpush1.bf16.msra.mxu0 0
  %3732 = vmatprep.subr.bf16.mxu0 0
  %3733 = vmatpush1.bf16.msra.mxu0 0
  %3734 = vmatprep.subr.bf16.mxu0 0
  %3735 = vmatpush1.bf16.msra.mxu0 0
  %3736 = vmatprep.subr.bf16.mxu0 0
  %3737 = vmatpush1.bf16.msra.mxu0 0
  %3738 = vmatprep.subr.bf16.mxu0 0
  %3739 = vmatpush1.bf16.msra.mxu0 0
  %3740 = vmatprep.subr.bf16.mxu0 0
  %3741 = vmatpush1.bf16.msra.mxu0 0
  %3742 = vmatprep.subr.bf16.mxu0 0
  %3743 = vmatpush1.bf16.msra.mxu0 0
  %3744 = vmatprep.mubr.bf16.mxu0 0
  %3745 = vmatmul.mubr.bf16.gmra.mrb[0].mxu0 %v3710
  %v3746 = vpop.f32.mrb[0].mxu0
  %v3747 = vadd.f32 0.0, %v3746
  %v3748 = vpop.f32.mrb[0].mxu0
  %v3749 = vpop.f32.mrb[0].mxu0
  %v3750 = vadd.f32 0.0, %v3749
  %v3751 = vpop.f32.mrb[0].mxu0
  %3752 = vdwg.mxu0
  %3757 = vrot.lane.b32.xlu0 %v3468, 64
  %v3758 = vpop.permute.xlu0 %3757
  %3759 = vrot.lane.b32.xlu0 %v3469, 64
  %v3760 = vpop.permute.xlu0 %3759
  %3761 = vrot.lane.b32.xlu0 %v3470, 64
  %v3762 = vpop.permute.xlu0 %3761
  %3763 = vrot.lane.b32.xlu0 %v3471, 64
  %v3764 = vpop.permute.xlu0 %3763
  %v3770 = vsel %vm1388, %v3692, 0
  %3772 = vmatprep.subr.bf16.mxu0 0
  %3773 = vmatpush1.bf16.msra.mxu0 %v3758
  %3774 = vmatprep.subr.bf16.mxu0 0
  %3775 = vmatpush1.bf16.msra.mxu0 %v3760
  %3776 = vmatprep.subr.bf16.mxu0 0
  %3777 = vmatpush1.bf16.msra.mxu0 %v3762
  %3778 = vmatprep.subr.bf16.mxu0 0
  %3779 = vmatpush1.bf16.msra.mxu0 %v3764
  %3780 = vmatprep.subr.bf16.mxu0 0
  %3781 = vmatpush1.bf16.msra.mxu0 0
  %3782 = vmatprep.subr.bf16.mxu0 0
  %3783 = vmatpush1.bf16.msra.mxu0 0
  %3784 = vmatprep.subr.bf16.mxu0 0
  %3785 = vmatpush1.bf16.msra.mxu0 0
  %3786 = vmatprep.subr.bf16.mxu0 0
  %3787 = vmatpush1.bf16.msra.mxu0 0
  %3788 = vmatprep.subr.bf16.mxu0 0
  %3789 = vmatpush1.bf16.msra.mxu0 0
  %3790 = vmatprep.subr.bf16.mxu0 0
  %3791 = vmatpush1.bf16.msra.mxu0 0
  %3792 = vmatprep.subr.bf16.mxu0 0
  %3793 = vmatpush1.bf16.msra.mxu0 0
  %3794 = vmatprep.subr.bf16.mxu0 0
  %3795 = vmatpush1.bf16.msra.mxu0 0
  %3796 = vmatprep.subr.bf16.mxu0 0
  %3797 = vmatpush1.bf16.msra.mxu0 0
  %3798 = vmatprep.subr.bf16.mxu0 0
  %3799 = vmatpush1.bf16.msra.mxu0 0
  %3800 = vmatprep.subr.bf16.mxu0 0
  %3801 = vmatpush1.bf16.msra.mxu0 0
  %3802 = vmatprep.subr.bf16.mxu0 0
  %3803 = vmatpush1.bf16.msra.mxu0 0
  %3804 = vmatprep.mubr.bf16.mxu0 0
  %3805 = vmatmul.mubr.bf16.gmra.mrb[0].mxu0 %v3770
  %v3806 = vpop.f32.mrb[0].mxu0
  %v3807 = vadd.f32 0.0, %v3806
  %v3808 = vpop.f32.mrb[0].mxu0
  %v3809 = vpop.f32.mrb[0].mxu0
  %v3810 = vadd.f32 0.0, %v3809
  %v3811 = vpop.f32.mrb[0].mxu0
  %3812 = vdwg.mxu0
  %3813 = vmatprep.subr.bf16.mxu0 %v1750
  %3814 = vmatpush1.bf16.msra.mxu0 %v1749
  %3815 = vmatprep.subr.bf16.mxu0 %v1755
  %3816 = vmatpush1.bf16.msra.mxu0 %v1754
  %3817 = vmatprep.subr.bf16.mxu0 %v1760
  %3818 = vmatpush1.bf16.msra.mxu0 %v1759
  %3819 = vmatprep.subr.bf16.mxu0 %v1765
  %3820 = vmatpush1.bf16.msra.mxu0 %v1764
  %3821 = vmatprep.subr.bf16.mxu0 0
  %3822 = vmatpush1.bf16.msra.mxu0 0
  %3823 = vmatprep.subr.bf16.mxu0 0
  %3824 = vmatpush1.bf16.msra.mxu0 0
  %3825 = vmatprep.subr.bf16.mxu0 0
  %3826 = vmatpush1.bf16.msra.mxu0 0
  %3827 = vmatprep.subr.bf16.mxu0 0
  %3828 = vmatpush1.bf16.msra.mxu0 0
  %3829 = vmatprep.subr.bf16.mxu0 0
  %3830 = vmatpush1.bf16.msra.mxu0 0
  %3831 = vmatprep.subr.bf16.mxu0 0
  %3832 = vmatpush1.bf16.msra.mxu0 0
  %3833 = vmatprep.subr.bf16.mxu0 0
  %3834 = vmatpush1.bf16.msra.mxu0 0
  %3835 = vmatprep.subr.bf16.mxu0 0
  %3836 = vmatpush1.bf16.msra.mxu0 0
  %3837 = vmatprep.subr.bf16.mxu0 0
  %3838 = vmatpush1.bf16.msra.mxu0 0
  %3839 = vmatprep.subr.bf16.mxu0 0
  %3840 = vmatpush1.bf16.msra.mxu0 0
  %3841 = vmatprep.subr.bf16.mxu0 0
  %3842 = vmatpush1.bf16.msra.mxu0 0
  %3843 = vmatprep.subr.bf16.mxu0 0
  %3844 = vmatpush1.bf16.msra.mxu0 0
  %3845 = vmatprep.mubr.bf16.mxu0 0
  %3846 = vmatmul.mubr.bf16.gmra.mrb[0].mxu0 %v3710
  %v3847 = vpop.f32.mrb[0].mxu0
  %v3848 = vadd.f32 0.0, %v3847
  %v3849 = vpop.f32.mrb[0].mxu0
  %v3850 = vadd.f32 0.0, %v3849
  %v3851 = vpop.f32.mrb[0].mxu0
  %v3852 = vadd.f32 0.0, %v3851
  %v3853 = vpop.f32.mrb[0].mxu0
  %v3854 = vadd.f32 0.0, %v3853
  %3855 = vmatprep.mubr.bf16.mxu0 0
  %3856 = vmatmul.mubr.bf16.gmra.mrb[0].mxu0 %v3770
  %v3857 = vpop.f32.mrb[0].mxu0
  %v3858 = vadd.f32 0.0, %v3857
  %v3859 = vpop.f32.mrb[0].mxu0
  %v3860 = vadd.f32 0.0, %v3859
  %v3861 = vpop.f32.mrb[0].mxu0
  %v3862 = vadd.f32 0.0, %v3861
  %v3863 = vpop.f32.mrb[0].mxu0
  %v3864 = vadd.f32 0.0, %v3863
  %3865 = vdwg.mxu0
  %3866 = vmatprep.subr.bf16.mxu0 %v1752
  %3867 = vmatpush1.bf16.msra.mxu0 %v1751
  %3868 = vmatprep.subr.bf16.mxu0 %v1757
  %3869 = vmatpush1.bf16.msra.mxu0 %v1756
  %3870 = vmatprep.subr.bf16.mxu0 %v1762
  %3871 = vmatpush1.bf16.msra.mxu0 %v1761
  %3872 = vmatprep.subr.bf16.mxu0 %v1767
  %3873 = vmatpush1.bf16.msra.mxu0 %v1766
  %3874 = vmatprep.subr.bf16.mxu0 0
  %3875 = vmatpush1.bf16.msra.mxu0 0
  %3876 = vmatprep.subr.bf16.mxu0 0
  %3877 = vmatpush1.bf16.msra.mxu0 0
  %3878 = vmatprep.subr.bf16.mxu0 0
  %3879 = vmatpush1.bf16.msra.mxu0 0
  %3880 = vmatprep.subr.bf16.mxu0 0
  %3881 = vmatpush1.bf16.msra.mxu0 0
  %3882 = vmatprep.subr.bf16.mxu0 0
  %3883 = vmatpush1.bf16.msra.mxu0 0
  %3884 = vmatprep.subr.bf16.mxu0 0
  %3885 = vmatpush1.bf16.msra.mxu0 0
  %3886 = vmatprep.subr.bf16.mxu0 0
  %3887 = vmatpush1.bf16.msra.mxu0 0
  %3888 = vmatprep.subr.bf16.mxu0 0
  %3889 = vmatpush1.bf16.msra.mxu0 0
  %3890 = vmatprep.subr.bf16.mxu0 0
  %3891 = vmatpush1.bf16.msra.mxu0 0
  %3892 = vmatprep.subr.bf16.mxu0 0
  %3893 = vmatpush1.bf16.msra.mxu0 0
  %3894 = vmatprep.subr.bf16.mxu0 0
  %3895 = vmatpush1.bf16.msra.mxu0 0
  %3896 = vmatprep.subr.bf16.mxu0 0
  %3897 = vmatpush1.bf16.msra.mxu0 0
  %3898 = vmatprep.mubr.bf16.mxu0 0
  %3899 = vmatmul.mubr.bf16.gmra.mrb[0].mxu0 %v3710
  %v3900 = vpop.f32.mrb[0].mxu0
  %v3901 = vadd.f32 0.0, %v3900
  %v3902 = vpop.f32.mrb[0].mxu0
  %v3903 = vadd.f32 0.0, %v3902
  %v3904 = vpop.f32.mrb[0].mxu0
  %v3905 = vadd.f32 0.0, %v3904
  %v3906 = vpop.f32.mrb[0].mxu0
  %v3907 = vadd.f32 0.0, %v3906
  %3908 = vmatprep.mubr.bf16.mxu0 0
  %3909 = vmatmul.mubr.bf16.gmra.mrb[0].mxu0 %v3770
  %v3910 = vpop.f32.mrb[0].mxu0
  %v3911 = vadd.f32 0.0, %v3910
  %v3912 = vpop.f32.mrb[0].mxu0
  %v3913 = vadd.f32 0.0, %v3912
  %v3914 = vpop.f32.mrb[0].mxu0
  %v3915 = vadd.f32 0.0, %v3914
  %v3916 = vpop.f32.mrb[0].mxu0
  %v3917 = vadd.f32 0.0, %v3916
  %3918 = vdwg.mxu0
  %3919 = vmatprep.subr.bf16.mxu0 0
  %3920 = vmatpush1.bf16.msra.mxu0 %v1753
  %3921 = vmatprep.subr.bf16.mxu0 0
  %3922 = vmatpush1.bf16.msra.mxu0 %v1758
  %3923 = vmatprep.subr.bf16.mxu0 0
  %3924 = vmatpush1.bf16.msra.mxu0 %v1763
  %3925 = vmatprep.subr.bf16.mxu0 0
  %3926 = vmatpush1.bf16.msra.mxu0 %v1768
  %3927 = vmatprep.subr.bf16.mxu0 0
  %3928 = vmatpush1.bf16.msra.mxu0 0
  %3929 = vmatprep.subr.bf16.mxu0 0
  %3930 = vmatpush1.bf16.msra.mxu0 0
  %3931 = vmatprep.subr.bf16.mxu0 0
  %3932 = vmatpush1.bf16.msra.mxu0 0
  %3933 = vmatprep.subr.bf16.mxu0 0
  %3934 = vmatpush1.bf16.msra.mxu0 0
  %3935 = vmatprep.subr.bf16.mxu0 0
  %3936 = vmatpush1.bf16.msra.mxu0 0
  %3937 = vmatprep.subr.bf16.mxu0 0
  %3938 = vmatpush1.bf16.msra.mxu0 0
  %3939 = vmatprep.subr.bf16.mxu0 0
  %3940 = vmatpush1.bf16.msra.mxu0 0
  %3941 = vmatprep.subr.bf16.mxu0 0
  %3942 = vmatpush1.bf16.msra.mxu0 0
  %3943 = vmatprep.subr.bf16.mxu0 0
  %3944 = vmatpush1.bf16.msra.mxu0 0
  %3945 = vmatprep.subr.bf16.mxu0 0
  %3946 = vmatpush1.bf16.msra.mxu0 0
  %3947 = vmatprep.subr.bf16.mxu0 0
  %3948 = vmatpush1.bf16.msra.mxu0 0
  %3949 = vmatprep.subr.bf16.mxu0 0
  %3950 = vmatpush1.bf16.msra.mxu0 0
  %3951 = vmatprep.mubr.bf16.mxu0 0
  %3952 = vmatmul.mubr.bf16.gmra.mrb[0].mxu0 %v3710
  %v3953 = vpop.f32.mrb[0].mxu0
  %v3954 = vadd.f32 0.0, %v3953
  %v3955 = vpop.f32.mrb[0].mxu0
  %v3956 = vpop.f32.mrb[0].mxu0
  %v3957 = vadd.f32 0.0, %v3956
  %v3958 = vpop.f32.mrb[0].mxu0
  %3959 = vmatprep.mubr.bf16.mxu0 0
  %3960 = vmatmul.mubr.bf16.gmra.mrb[0].mxu0 %v3770
  %v3961 = vpop.f32.mrb[0].mxu0
  %v3962 = vadd.f32 0.0, %v3961
  %v3963 = vpop.f32.mrb[0].mxu0
  %v3964 = vpop.f32.mrb[0].mxu0
  %v3965 = vadd.f32 0.0, %v3964
  %v3966 = vpop.f32.mrb[0].mxu0
  %3967 = vdwg.mxu0
  %v3968 = vmul.f32 %v3848, %v74
  %v3969 = vmul.f32 %v3850, %v75
  %v3970 = vmul.f32 %v3901, %v76
  %v3971 = vmul.f32 %v3903, %v77
  %v3972 = vmul.f32 %v3954, %v78
  %v3973 = vmul.f32 %v3852, %v79
  %v3974 = vmul.f32 %v3854, %v80
  %v3975 = vmul.f32 %v3905, %v81
  %v3976 = vmul.f32 %v3907, %v82
  %v3977 = vmul.f32 %v3957, %v83
  %v3978 = vmul.f32 %v3858, %v84
  %v3979 = vmul.f32 %v3860, %v85
  %v3980 = vmul.f32 %v3911, %v86
  %v3981 = vmul.f32 %v3913, %v87
  %v3982 = vmul.f32 %v3962, %v88
  %v3983 = vmul.f32 %v3862, %v89
  %v3984 = vmul.f32 %v3864, %v90
  %v3985 = vmul.f32 %v3915, %v91
  %v3986 = vmul.f32 %v3917, %v92
  %v3987 = vmul.f32 %v3965, %v93
  %v3988 = vpack.c.bf16 %v3973, %v3968
  %v3989 = vpack.c.bf16 %v3974, %v3969
  %v3990 = vpack.c.bf16 %v3975, %v3970
  %v3991 = vpack.c.bf16 %v3976, %v3971
  %v3992 = vpack.c.bf16 %v3977, %v3972
  %v3993 = vpack.c.bf16 %v3983, %v3978
  %v3994 = vpack.c.bf16 %v3984, %v3979
  %v3995 = vpack.c.bf16 %v3985, %v3980
  %v3996 = vpack.c.bf16 %v3986, %v3981
  %v3997 = vpack.c.bf16 %v3987, %v3982
  %v4078 = vunpack.c.l.b16 %v2768
  %v4079 = vunpack.c.l.b16 %v2769
  %v4080 = vunpack.c.l.b16 %v2770
  %v4081 = vunpack.c.l.b16 %v2771
  %v4082 = vunpack.c.l.b16 %v2772
  %v4083 = vunpack.c.l.b16 %v2773
  %v4084 = vunpack.c.l.b16 %v2774
  %v4085 = vunpack.c.l.b16 %v2775
  %v4086 = vunpack.c.l.b16 %v2776
  %v4087 = vunpack.c.l.b16 %v2777
  %v4088 = vunpack.c.l.b16 %v2778
  %v4089 = vunpack.c.l.b16 %v2779
  %v4090 = vunpack.c.l.b16 %v2780
  %v4091 = vunpack.c.l.b16 %v2781
  %v4092 = vunpack.c.l.b16 %v2782
  %v4093 = vunpack.c.l.b16 %v2783
  %v4094 = vunpack.c.l.b16 %v2784
  %v4095 = vunpack.c.l.b16 %v2785
  %v4096 = vunpack.c.l.b16 %v2786
  %v4097 = vunpack.c.l.b16 %v2787
  %v4098 = vunpack.c.l.b16 %v2788
  %v4099 = vunpack.c.l.b16 %v2789
  %v4100 = vunpack.c.l.b16 %v2790
  %v4101 = vunpack.c.l.b16 %v2791
  %v4102 = vunpack.c.l.b16 %v2792
  %v4103 = vunpack.c.l.b16 %v2793
  %v4104 = vunpack.c.l.b16 %v2794
  %v4105 = vunpack.c.l.b16 %v2795
  %v4106 = vunpack.c.l.b16 %v2796
  %v4107 = vunpack.c.l.b16 %v2797
  %v4108 = vunpack.c.l.b16 %v2798
  %v4109 = vunpack.c.l.b16 %v2799
  %v4110 = vunpack.c.l.b16 %v2800
  %v4111 = vunpack.c.l.b16 %v2801
  %v4112 = vunpack.c.l.b16 %v2802
  %v4113 = vunpack.c.l.b16 %v2803
  %v4114 = vunpack.c.l.b16 %v2804
  %v4115 = vunpack.c.l.b16 %v2805
  %v4116 = vunpack.c.l.b16 %v2806
  %v4117 = vunpack.c.l.b16 %v2807
  %v4118 = vunpack.c.l.b16 %v2808
  %v4119 = vunpack.c.l.b16 %v2809
  %v4120 = vunpack.c.l.b16 %v2810
  %v4121 = vunpack.c.l.b16 %v2811
  %v4122 = vunpack.c.l.b16 %v2812
  %v4123 = vunpack.c.l.b16 %v2813
  %v4124 = vunpack.c.l.b16 %v2814
  %v4125 = vunpack.c.l.b16 %v2815
  %v4126 = vunpack.c.l.b16 %v2816
  %v4127 = vunpack.c.l.b16 %v2817
  %v4128 = vunpack.c.l.b16 %v2818
  %v4129 = vunpack.c.l.b16 %v2819
  %v4130 = vunpack.c.l.b16 %v2820
  %v4131 = vunpack.c.l.b16 %v2821
  %v4132 = vunpack.c.l.b16 %v2822
  %v4133 = vunpack.c.l.b16 %v2823
  %v4134 = vunpack.c.l.b16 %v2824
  %v4135 = vunpack.c.l.b16 %v2825
  %v4136 = vunpack.c.l.b16 %v2826
  %v4137 = vunpack.c.l.b16 %v2827
  %v4138 = vunpack.c.l.b16 %v2828
  %v4139 = vunpack.c.l.b16 %v2829
  %v4140 = vunpack.c.l.b16 %v2830
  %v4141 = vunpack.c.l.b16 %v2831
  %v4142 = vunpack.c.l.b16 %v2832
  %v4143 = vunpack.c.l.b16 %v2833
  %v4144 = vunpack.c.l.b16 %v2834
  %v4145 = vunpack.c.l.b16 %v2835
  %v4146 = vunpack.c.l.b16 %v2836
  %v4147 = vunpack.c.l.b16 %v2837
  %v4148 = vunpack.c.l.b16 %v2838
  %v4149 = vunpack.c.l.b16 %v2839
  %v4150 = vunpack.c.l.b16 %v2840
  %v4151 = vunpack.c.l.b16 %v2841
  %v4152 = vunpack.c.l.b16 %v2842
  %v4153 = vunpack.c.l.b16 %v2843
  %v4154 = vunpack.c.l.b16 %v2844
  %v4155 = vunpack.c.l.b16 %v2845
  %v4156 = vunpack.c.l.b16 %v2846
  %v4157 = vunpack.c.l.b16 %v2847
  %v4158 = vpack.c.b16 %v4079, %v4078
  %v4159 = vpack.c.b16 %v4081, %v4080
  %v4160 = vpack.c.b16 %v4083, %v4082
  %v4161 = vpack.c.b16 %v4085, %v4084
  %v4162 = vpack.c.b16 %v4087, %v4086
  %v4163 = vpack.c.b16 %v4089, %v4088
  %v4164 = vpack.c.b16 %v4091, %v4090
  %v4165 = vpack.c.b16 %v4093, %v4092
  %v4166 = vpack.c.b16 %v4095, %v4094
  %v4167 = vpack.c.b16 %v4097, %v4096
  %v4168 = vpack.c.b16 %v4099, %v4098
  %v4169 = vpack.c.b16 %v4101, %v4100
  %v4170 = vpack.c.b16 %v4103, %v4102
  %v4171 = vpack.c.b16 %v4105, %v4104
  %v4172 = vpack.c.b16 %v4107, %v4106
  %v4173 = vpack.c.b16 %v4109, %v4108
  %v4174 = vpack.c.b16 %v4111, %v4110
  %v4175 = vpack.c.b16 %v4113, %v4112
  %v4176 = vpack.c.b16 %v4115, %v4114
  %v4177 = vpack.c.b16 %v4117, %v4116
  %v4178 = vpack.c.b16 %v4119, %v4118
  %v4179 = vpack.c.b16 %v4121, %v4120
  %v4180 = vpack.c.b16 %v4123, %v4122
  %v4181 = vpack.c.b16 %v4125, %v4124
  %v4182 = vpack.c.b16 %v4127, %v4126
  %v4183 = vpack.c.b16 %v4129, %v4128
  %v4184 = vpack.c.b16 %v4131, %v4130
  %v4185 = vpack.c.b16 %v4133, %v4132
  %v4186 = vpack.c.b16 %v4135, %v4134
  %v4187 = vpack.c.b16 %v4137, %v4136
  %v4188 = vpack.c.b16 %v4139, %v4138
  %v4189 = vpack.c.b16 %v4141, %v4140
  %v4190 = vpack.c.b16 %v4143, %v4142
  %v4191 = vpack.c.b16 %v4145, %v4144
  %v4192 = vpack.c.b16 %v4147, %v4146
  %v4193 = vpack.c.b16 %v4149, %v4148
  %v4194 = vpack.c.b16 %v4151, %v4150
  %v4195 = vpack.c.b16 %v4153, %v4152
  %v4196 = vpack.c.b16 %v4155, %v4154
  %v4197 = vpack.c.b16 %v4157, %v4156
  %4238 = vmatprep.subr.bf16.mxu0 0
  %4239 = vmatpush1.bf16.msra.mxu0 %v4158
  %4240 = vmatprep.subr.bf16.mxu0 0
  %4241 = vmatpush1.bf16.msra.mxu0 %v4159
  %4242 = vmatprep.subr.bf16.mxu0 0
  %4243 = vmatpush1.bf16.msra.mxu0 %v4160
  %4244 = vmatprep.subr.bf16.mxu0 0
  %4245 = vmatpush1.bf16.msra.mxu0 %v4161
  %4246 = vmatprep.subr.bf16.mxu0 0
  %4247 = vmatpush1.bf16.msra.mxu0 %v4162
  %4248 = vmatprep.subr.bf16.mxu0 0
  %4249 = vmatpush1.bf16.msra.mxu0 %v4163
  %4250 = vmatprep.subr.bf16.mxu0 0
  %4251 = vmatpush1.bf16.msra.mxu0 %v4164
  %4252 = vmatprep.subr.bf16.mxu0 0
  %4253 = vmatpush1.bf16.msra.mxu0 %v4165
  %4254 = vmatprep.subr.bf16.mxu0 0
  %4255 = vmatpush1.bf16.msra.mxu0 %v4166
  %4256 = vmatprep.subr.bf16.mxu0 0
  %4257 = vmatpush1.bf16.msra.mxu0 %v4167
  %4258 = vmatprep.subr.bf16.mxu0 0
  %4259 = vmatpush1.bf16.msra.mxu0 %v4168
  %4260 = vmatprep.subr.bf16.mxu0 0
  %4261 = vmatpush1.bf16.msra.mxu0 %v4169
  %4262 = vmatprep.subr.bf16.mxu0 0
  %4263 = vmatpush1.bf16.msra.mxu0 %v4170
  %4264 = vmatprep.subr.bf16.mxu0 0
  %4265 = vmatpush1.bf16.msra.mxu0 %v4171
  %4266 = vmatprep.subr.bf16.mxu0 0
  %4267 = vmatpush1.bf16.msra.mxu0 %v4172
  %4268 = vmatprep.subr.bf16.mxu0 0
  %4269 = vmatpush1.bf16.msra.mxu0 %v4173
  %4270 = vmatprep.mubr.bf16.mxu0 %v3989
  %4271 = vmatmul.mubr.bf16.gmra.mrb[0].mxu0 %v3988
  %v4272 = vpop.f32.mrb[0].mxu0
  %v4273 = vadd.f32 0.0, %v4272
  %v4274 = vpop.f32.mrb[0].mxu0
  %v4275 = vpop.f32.mrb[0].mxu0
  %v4276 = vadd.f32 0.0, %v4275
  %v4277 = vpop.f32.mrb[0].mxu0
  %4278 = vmatprep.mubr.bf16.mxu0 %v3994
  %4279 = vmatmul.mubr.bf16.gmra.mrb[0].mxu0 %v3993
  %v4280 = vpop.f32.mrb[0].mxu0
  %v4281 = vadd.f32 0.0, %v4280
  %v4282 = vpop.f32.mrb[0].mxu0
  %v4283 = vpop.f32.mrb[0].mxu0
  %v4284 = vadd.f32 0.0, %v4283
  %v4285 = vpop.f32.mrb[0].mxu0
  %4286 = vdwg.mxu0
  %4287 = vmatprep.subr.bf16.mxu0 0
  %4288 = vmatpush1.bf16.msra.mxu0 %v4174
  %4289 = vmatprep.subr.bf16.mxu0 0
  %4290 = vmatpush1.bf16.msra.mxu0 %v4175
  %4291 = vmatprep.subr.bf16.mxu0 0
  %4292 = vmatpush1.bf16.msra.mxu0 %v4176
  %4293 = vmatprep.subr.bf16.mxu0 0
  %4294 = vmatpush1.bf16.msra.mxu0 %v4177
  %4295 = vmatprep.subr.bf16.mxu0 0
  %4296 = vmatpush1.bf16.msra.mxu0 %v4178
  %4297 = vmatprep.subr.bf16.mxu0 0
  %4298 = vmatpush1.bf16.msra.mxu0 %v4179
  %4299 = vmatprep.subr.bf16.mxu0 0
  %4300 = vmatpush1.bf16.msra.mxu0 %v4180
  %4301 = vmatprep.subr.bf16.mxu0 0
  %4302 = vmatpush1.bf16.msra.mxu0 %v4181
  %4303 = vmatprep.subr.bf16.mxu0 0
  %4304 = vmatpush1.bf16.msra.mxu0 %v4182
  %4305 = vmatprep.subr.bf16.mxu0 0
  %4306 = vmatpush1.bf16.msra.mxu0 %v4183
  %4307 = vmatprep.subr.bf16.mxu0 0
  %4308 = vmatpush1.bf16.msra.mxu0 %v4184
  %4309 = vmatprep.subr.bf16.mxu0 0
  %4310 = vmatpush1.bf16.msra.mxu0 %v4185
  %4311 = vmatprep.subr.bf16.mxu0 0
  %4312 = vmatpush1.bf16.msra.mxu0 %v4186
  %4313 = vmatprep.subr.bf16.mxu0 0
  %4314 = vmatpush1.bf16.msra.mxu0 %v4187
  %4315 = vmatprep.subr.bf16.mxu0 0
  %4316 = vmatpush1.bf16.msra.mxu0 %v4188
  %4317 = vmatprep.subr.bf16.mxu0 0
  %4318 = vmatpush1.bf16.msra.mxu0 %v4189
  %4319 = vmatprep.mubr.bf16.mxu0 %v3991
  %4320 = vmatmul.mubr.bf16.gmra.mrb[0].mxu0 %v3990
  %v4321 = vpop.f32.mrb[0].mxu0
  %v4322 = vadd.f32 %v4273, %v4321
  %v4323 = vpop.f32.mrb[0].mxu0
  %v4324 = vpop.f32.mrb[0].mxu0
  %v4325 = vadd.f32 %v4276, %v4324
  %v4326 = vpop.f32.mrb[0].mxu0
  %4327 = vmatprep.mubr.bf16.mxu0 %v3996
  %4328 = vmatmul.mubr.bf16.gmra.mrb[0].mxu0 %v3995
  %v4329 = vpop.f32.mrb[0].mxu0
  %v4330 = vadd.f32 %v4281, %v4329
  %v4331 = vpop.f32.mrb[0].mxu0
  %v4332 = vpop.f32.mrb[0].mxu0
  %v4333 = vadd.f32 %v4284, %v4332
  %v4334 = vpop.f32.mrb[0].mxu0
  %4335 = vdwg.mxu0
  %4336 = vmatprep.subr.bf16.mxu0 0
  %4337 = vmatpush1.bf16.msra.mxu0 %v4190
  %4338 = vmatprep.subr.bf16.mxu0 0
  %4339 = vmatpush1.bf16.msra.mxu0 %v4191
  %4340 = vmatprep.subr.bf16.mxu0 0
  %4341 = vmatpush1.bf16.msra.mxu0 %v4192
  %4342 = vmatprep.subr.bf16.mxu0 0
  %4343 = vmatpush1.bf16.msra.mxu0 %v4193
  %4344 = vmatprep.subr.bf16.mxu0 0
  %4345 = vmatpush1.bf16.msra.mxu0 %v4194
  %4346 = vmatprep.subr.bf16.mxu0 0
  %4347 = vmatpush1.bf16.msra.mxu0 %v4195
  %4348 = vmatprep.subr.bf16.mxu0 0
  %4349 = vmatpush1.bf16.msra.mxu0 %v4196
  %4350 = vmatprep.subr.bf16.mxu0 0
  %4351 = vmatpush1.bf16.msra.mxu0 %v4197
  %4352 = vmatprep.subr.bf16.mxu0 0
  %4353 = vmatpush1.bf16.msra.mxu0 0
  %4354 = vmatprep.subr.bf16.mxu0 0
  %4355 = vmatpush1.bf16.msra.mxu0 0
  %4356 = vmatprep.subr.bf16.mxu0 0
  %4357 = vmatpush1.bf16.msra.mxu0 0
  %4358 = vmatprep.subr.bf16.mxu0 0
  %4359 = vmatpush1.bf16.msra.mxu0 0
  %4360 = vmatprep.subr.bf16.mxu0 0
  %4361 = vmatpush1.bf16.msra.mxu0 0
  %4362 = vmatprep.subr.bf16.mxu0 0
  %4363 = vmatpush1.bf16.msra.mxu0 0
  %4364 = vmatprep.subr.bf16.mxu0 0
  %4365 = vmatpush1.bf16.msra.mxu0 0
  %4366 = vmatprep.subr.bf16.mxu0 0
  %4367 = vmatpush1.bf16.msra.mxu0 0
  %4368 = vmatprep.mubr.bf16.mxu0 0
  %4369 = vmatmul.mubr.bf16.gmra.mrb[0].mxu0 %v3992
  %v4370 = vpop.f32.mrb[0].mxu0
  %v4371 = vadd.f32 %v4322, %v4370
  %v4372 = vpop.f32.mrb[0].mxu0
  %v4373 = vpop.f32.mrb[0].mxu0
  %v4374 = vadd.f32 %v4325, %v4373
  %v4375 = vpop.f32.mrb[0].mxu0
  %4376 = vmatprep.mubr.bf16.mxu0 0
  %4377 = vmatmul.mubr.bf16.gmra.mrb[0].mxu0 %v3997
  %v4378 = vpop.f32.mrb[0].mxu0
  %v4379 = vadd.f32 %v4330, %v4378
  %v4380 = vpop.f32.mrb[0].mxu0
  %v4381 = vpop.f32.mrb[0].mxu0
  %v4382 = vadd.f32 %v4333, %v4381
  %v4383 = vpop.f32.mrb[0].mxu0
  %4384 = vdwg.mxu0
  %v4385 = vadd.f32 %v3747, %v4371
  %v4386 = vadd.f32 %v3750, %v4374
  %v4387 = vadd.f32 %v3807, %v4379
  %v4388 = vadd.f32 %v3810, %v4382
  %v4389 = vpack.c.bf16 %v4386, %v4385
  %v4390 = vpack.c.bf16 %v4388, %v4387
  %v4392 = vlaneseq
  %v4393 = vshrl.u32 %v4392, 7
  %v4394 = vsub.s32 0, %v4393
  %v4395 = vrot.slane %v2854, %v4394
  %v4401 = vunpack.c.l.b16 %v2849
  %v4402 = vunpack.c.l.b16 %v2850
  %v4403 = vunpack.c.l.b16 %v2851
  %v4404 = vunpack.c.l.b16 %v2852
  %v4405 = vpack.c.b16 %v4402, %v4401
  %v4406 = vpack.c.b16 %v4404, %v4403
  %v4410 = vsel %vm359, %v4389, 0
  %v4413 = vsel %vm359, %v4390, 0
  %4415 = vmatprep.subr.bf16.mxu0 0
  %4416 = vmatpush1.bf16.msra.mxu0 %v4405
  %4417 = vmatprep.subr.bf16.mxu0 0
  %4418 = vmatpush1.bf16.msra.mxu0 %v4406
  %4419 = vmatprep.subr.bf16.mxu0 0
  %4420 = vmatpush1.bf16.msra.mxu0 0
  %4421 = vmatprep.subr.bf16.mxu0 0
  %4422 = vmatpush1.bf16.msra.mxu0 0
  %4423 = vmatprep.subr.bf16.mxu0 0
  %4424 = vmatpush1.bf16.msra.mxu0 0
  %4425 = vmatprep.subr.bf16.mxu0 0
  %4426 = vmatpush1.bf16.msra.mxu0 0
  %4427 = vmatprep.subr.bf16.mxu0 0
  %4428 = vmatpush1.bf16.msra.mxu0 0
  %4429 = vmatprep.subr.bf16.mxu0 0
  %4430 = vmatpush1.bf16.msra.mxu0 0
  %4431 = vmatprep.subr.bf16.mxu0 0
  %4432 = vmatpush1.bf16.msra.mxu0 0
  %4433 = vmatprep.subr.bf16.mxu0 0
  %4434 = vmatpush1.bf16.msra.mxu0 0
  %4435 = vmatprep.subr.bf16.mxu0 0
  %4436 = vmatpush1.bf16.msra.mxu0 0
  %4437 = vmatprep.subr.bf16.mxu0 0
  %4438 = vmatpush1.bf16.msra.mxu0 0
  %4439 = vmatprep.subr.bf16.mxu0 0
  %4440 = vmatpush1.bf16.msra.mxu0 0
  %4441 = vmatprep.subr.bf16.mxu0 0
  %4442 = vmatpush1.bf16.msra.mxu0 0
  %4443 = vmatprep.subr.bf16.mxu0 0
  %4444 = vmatpush1.bf16.msra.mxu0 0
  %4445 = vmatprep.subr.bf16.mxu0 0
  %4446 = vmatpush1.bf16.msra.mxu0 0
  %4447 = vmatprep.mubr.bf16.mxu0 0
  %4448 = vmatmul.mubr.bf16.gmra.mrb[0].mxu0 %v4410
  %v4449 = vpop.f32.mrb[0].mxu0
  %v4450 = vadd.f32 %v4395, %v4449
  %v4451 = vpop.f32.mrb[0].mxu0
  %v4452 = vpop.f32.mrb[0].mxu0
  %v4453 = vadd.f32 %v4395, %v4452
  %v4454 = vpop.f32.mrb[0].mxu0
  %4455 = vmatprep.mubr.bf16.mxu0 0
  %4456 = vmatmul.mubr.bf16.gmra.mrb[0].mxu0 %v4413
  %v4457 = vpop.f32.mrb[0].mxu0
  %v4458 = vadd.f32 %v4395, %v4457
  %v4459 = vpop.f32.mrb[0].mxu0
  %v4460 = vpop.f32.mrb[0].mxu0
  %v4461 = vadd.f32 %v4395, %v4460
  %v4462 = vpop.f32.mrb[0].mxu0
  %4463 = vdwg.mxu0
  %v4464 = vadd.f32 %v4450, %v2747
  %v4465 = vadd.f32 %v4453, %v2748
  %v4466 = vadd.f32 %v4458, %v2749
  %v4467 = vadd.f32 %v4461, %v2750
  %v4468 = vsel %vm359, %v4464, 0.0
  %4469 = vadd.xlane.f32.xlu0 %v4468
  %v4470 = vpop.xlane.xlu0 %4469
  %v4471 = vsel %vm359, %v4465, 0.0
  %4472 = vadd.xlane.f32.xlu0 %v4471
  %v4473 = vpop.xlane.xlu0 %4472
  %v4474 = vsel %vm359, %v4466, 0.0
  %4475 = vadd.xlane.f32.xlu0 %v4474
  %v4476 = vpop.xlane.xlu0 %4475
  %v4477 = vsel %vm359, %v4467, 0.0
  %4478 = vadd.xlane.f32.xlu0 %v4477
  %v4479 = vpop.xlane.xlu0 %4478
  %v4480 = vmul.f32 %v4470, %v2456
  %v4481 = vmul.f32 %v4473, %v2456
  %v4482 = vmul.f32 %v4476, %v2456
  %v4483 = vmul.f32 %v4479, %v2456
  %v4484 = vsub.f32 %v4464, %v4480
  %v4485 = vsub.f32 %v4465, %v4481
  %v4486 = vsub.f32 %v4466, %v4482
  %v4487 = vsub.f32 %v4467, %v4483
  %v4488 = vmul.f32 %v4484, %v4484
  %v4489 = vmul.f32 %v4485, %v4485
  %v4490 = vmul.f32 %v4486, %v4486
  %v4491 = vmul.f32 %v4487, %v4487
  %v4492 = vsel %vm359, %v4488, 0.0
  %4493 = vadd.xlane.f32.xlu0 %v4492
  %v4494 = vpop.xlane.xlu0 %4493
  %v4495 = vsel %vm359, %v4489, 0.0
  %4496 = vadd.xlane.f32.xlu0 %v4495
  %v4497 = vpop.xlane.xlu0 %4496
  %v4498 = vsel %vm359, %v4490, 0.0
  %4499 = vadd.xlane.f32.xlu0 %v4498
  %v4500 = vpop.xlane.xlu0 %4499
  %v4501 = vsel %vm359, %v4491, 0.0
  %4502 = vadd.xlane.f32.xlu0 %v4501
  %v4503 = vpop.xlane.xlu0 %4502
  %v4504 = vmul.f32 %v4494, %v2456
  %v4505 = vmul.f32 %v4497, %v2456
  %v4506 = vmul.f32 %v4500, %v2456
  %v4507 = vmul.f32 %v4503, %v2456
  %v4508 = vadd.f32 %v4504, 1e-06
  %v4509 = vadd.f32 %v4505, 1e-06
  %v4510 = vadd.f32 %v4506, 1e-06
  %v4511 = vadd.f32 %v4507, 1e-06
  %v4512 = vrsqrt.pop %v4508
  %v4513 = vrsqrt.pop %v4509
  %v4514 = vrsqrt.pop %v4510
  %v4515 = vrsqrt.pop %v4511
  %v4516 = vmul.f32 %v4484, %v4512
  %v4517 = vmul.f32 %v4485, %v4513
  %v4518 = vmul.f32 %v4486, %v4514
  %v4519 = vmul.f32 %v4487, %v4515
  %v4520 = vlaneseq
  %v4521 = vshrl.u32 %v4520, 7
  %v4522 = vsub.s32 0, %v4521
  %v4523 = vrot.slane %v2856, %v4522
  %v4524 = vmul.f32 %v4516, %v4523
  %v4525 = vmul.f32 %v4517, %v4523
  %v4526 = vmul.f32 %v4518, %v4523
  %v4527 = vmul.f32 %v4519, %v4523
  %v4528 = vlaneseq
  %v4529 = vshrl.u32 %v4528, 7
  %v4530 = vsub.s32 1, %v4529
  %v4531 = vrot.slane %v2856, %v4530
  %v4532 = vadd.f32 %v4524, %v4531
  %v4533 = vadd.f32 %v4525, %v4531
  %v4534 = vadd.f32 %v4526, %v4531
  %v4535 = vadd.f32 %v4527, %v4531
  %v4536 = vsel %vm359, %v4532, 0.0
  %4537 = vadd.xlane.f32.xlu0 %v4536
  %v4538 = vpop.xlane.xlu0 %4537
  %v4539 = vsel %vm359, %v4533, 0.0
  %4540 = vadd.xlane.f32.xlu0 %v4539
  %v4541 = vpop.xlane.xlu0 %4540
  %v4542 = vsel %vm359, %v4534, 0.0
  %4543 = vadd.xlane.f32.xlu0 %v4542
  %v4544 = vpop.xlane.xlu0 %4543
  %v4545 = vsel %vm359, %v4535, 0.0
  %4546 = vadd.xlane.f32.xlu0 %v4545
  %v4547 = vpop.xlane.xlu0 %4546
  %v4548 = vmul.f32 %v4538, %v2456
  %v4549 = vmul.f32 %v4541, %v2456
  %v4550 = vmul.f32 %v4544, %v2456
  %v4551 = vmul.f32 %v4547, %v2456
  %v4552 = vsub.f32 %v4532, %v4548
  %v4553 = vsub.f32 %v4533, %v4549
  %v4554 = vsub.f32 %v4534, %v4550
  %v4555 = vsub.f32 %v4535, %v4551
  %v4556 = vmul.f32 %v4552, %v4552
  %v4557 = vmul.f32 %v4553, %v4553
  %v4558 = vmul.f32 %v4554, %v4554
  %v4559 = vmul.f32 %v4555, %v4555
  %v4560 = vsel %vm359, %v4556, 0.0
  %4561 = vadd.xlane.f32.xlu0 %v4560
  %v4562 = vpop.xlane.xlu0 %4561
  %v4563 = vsel %vm359, %v4557, 0.0
  %4564 = vadd.xlane.f32.xlu0 %v4563
  %v4565 = vpop.xlane.xlu0 %4564
  %v4566 = vsel %vm359, %v4558, 0.0
  %4567 = vadd.xlane.f32.xlu0 %v4566
  %v4568 = vpop.xlane.xlu0 %4567
  %v4569 = vsel %vm359, %v4559, 0.0
  %4570 = vadd.xlane.f32.xlu0 %v4569
  %v4571 = vpop.xlane.xlu0 %4570
  %v4572 = vmul.f32 %v4562, %v2456
  %v4573 = vmul.f32 %v4565, %v2456
  %v4574 = vmul.f32 %v4568, %v2456
  %v4575 = vmul.f32 %v4571, %v2456
  %v4576 = vadd.f32 %v4572, 1e-06
  %v4577 = vadd.f32 %v4573, 1e-06
  %v4578 = vadd.f32 %v4574, 1e-06
  %v4579 = vadd.f32 %v4575, 1e-06
  %v4580 = vrsqrt.pop %v4576
  %v4581 = vrsqrt.pop %v4577
  %v4582 = vrsqrt.pop %v4578
  %v4583 = vrsqrt.pop %v4579
  %v4584 = vmul.f32 %v4552, %v4580
  %v4585 = vmul.f32 %v4553, %v4581
  %v4586 = vmul.f32 %v4554, %v4582
  %v4587 = vmul.f32 %v4555, %v4583
  %v4588 = vlaneseq
  %v4589 = vshrl.u32 %v4588, 7
  %v4590 = vsub.s32 2, %v4589
  %v4591 = vrot.slane %v2856, %v4590
  %v4592 = vmul.f32 %v4584, %v4591
  %v4593 = vmul.f32 %v4585, %v4591
  %v4594 = vmul.f32 %v4586, %v4591
  %v4595 = vmul.f32 %v4587, %v4591
  %v4596 = vlaneseq
  %v4597 = vshrl.u32 %v4596, 7
  %v4598 = vsub.s32 3, %v4597
  %v4599 = vrot.slane %v2856, %v4598
  %v4600 = vadd.f32 %v4592, %v4599
  %v4601 = vadd.f32 %v4593, %v4599
  %v4602 = vadd.f32 %v4594, %v4599
  %v4603 = vadd.f32 %v4595, %v4599
  %v4604 = vpack.c.bf16 %v4601, %v4600
  %v4605 = vpack.c.bf16 %v4603, %v4602
  %v4607 = vlaneseq
  %v4608 = vshrl.u32 %v4607, 7
  %v4609 = vsub.s32 0, %v4608
  %v4610 = vrot.slane %v2863, %v4609
  %v4616 = vunpack.c.l.b16 %v2858
  %v4617 = vunpack.c.l.b16 %v2859
  %v4618 = vunpack.c.l.b16 %v2860
  %v4619 = vunpack.c.l.b16 %v2861
  %v4620 = vpack.c.b16 %v4617, %v4616
  %v4621 = vpack.c.b16 %v4619, %v4618
  %v4625 = vsel %vm359, %v4604, 0
  %v4628 = vsel %vm359, %v4605, 0
  %4630 = vmatprep.subr.bf16.mxu0 0
  %4631 = vmatpush1.bf16.msra.mxu0 %v4620
  %4632 = vmatprep.subr.bf16.mxu0 0
  %4633 = vmatpush1.bf16.msra.mxu0 %v4621
  %4634 = vmatprep.subr.bf16.mxu0 0
  %4635 = vmatpush1.bf16.msra.mxu0 0
  %4636 = vmatprep.subr.bf16.mxu0 0
  %4637 = vmatpush1.bf16.msra.mxu0 0
  %4638 = vmatprep.subr.bf16.mxu0 0
  %4639 = vmatpush1.bf16.msra.mxu0 0
  %4640 = vmatprep.subr.bf16.mxu0 0
  %4641 = vmatpush1.bf16.msra.mxu0 0
  %4642 = vmatprep.subr.bf16.mxu0 0
  %4643 = vmatpush1.bf16.msra.mxu0 0
  %4644 = vmatprep.subr.bf16.mxu0 0
  %4645 = vmatpush1.bf16.msra.mxu0 0
  %4646 = vmatprep.subr.bf16.mxu0 0
  %4647 = vmatpush1.bf16.msra.mxu0 0
  %4648 = vmatprep.subr.bf16.mxu0 0
  %4649 = vmatpush1.bf16.msra.mxu0 0
  %4650 = vmatprep.subr.bf16.mxu0 0
  %4651 = vmatpush1.bf16.msra.mxu0 0
  %4652 = vmatprep.subr.bf16.mxu0 0
  %4653 = vmatpush1.bf16.msra.mxu0 0
  %4654 = vmatprep.subr.bf16.mxu0 0
  %4655 = vmatpush1.bf16.msra.mxu0 0
  %4656 = vmatprep.subr.bf16.mxu0 0
  %4657 = vmatpush1.bf16.msra.mxu0 0
  %4658 = vmatprep.subr.bf16.mxu0 0
  %4659 = vmatpush1.bf16.msra.mxu0 0
  %4660 = vmatprep.subr.bf16.mxu0 0
  %4661 = vmatpush1.bf16.msra.mxu0 0
  %4662 = vmatprep.mubr.bf16.mxu0 0
  %4663 = vmatmul.mubr.bf16.gmra.mrb[0].mxu0 %v4625
  %v4664 = vpop.f32.mrb[0].mxu0
  %v4665 = vadd.f32 %v4610, %v4664
  %v4666 = vpop.f32.mrb[0].mxu0
  %v4667 = vpop.f32.mrb[0].mxu0
  %v4668 = vadd.f32 %v4610, %v4667
  %v4669 = vpop.f32.mrb[0].mxu0
  %4670 = vmatprep.mubr.bf16.mxu0 0
  %4671 = vmatmul.mubr.bf16.gmra.mrb[0].mxu0 %v4628
  %v4672 = vpop.f32.mrb[0].mxu0
  %v4673 = vadd.f32 %v4610, %v4672
  %v4674 = vpop.f32.mrb[0].mxu0
  %v4675 = vpop.f32.mrb[0].mxu0
  %v4676 = vadd.f32 %v4610, %v4675
  %v4677 = vpop.f32.mrb[0].mxu0
  %4678 = vdwg.mxu0
  %v4679 = vmax.f32 %v4665, 0.0
  %v4680 = vmax.f32 %v4668, 0.0
  %v4681 = vmax.f32 %v4673, 0.0
  %v4682 = vmax.f32 %v4676, 0.0
  %v4683 = vpack.c.bf16 %v4680, %v4679
  %v4684 = vpack.c.bf16 %v4682, %v4681
  %v4686 = vlaneseq
  %v4687 = vshrl.u32 %v4686, 7
  %v4688 = vsub.s32 0, %v4687
  %v4689 = vrot.slane %v2874, %v4688
  %v4699 = vunpack.c.l.b16 %v2865
  %v4700 = vunpack.c.l.b16 %v2866
  %v4701 = vunpack.c.l.b16 %v2867
  %v4702 = vunpack.c.l.b16 %v2868
  %v4703 = vunpack.c.l.b16 %v2869
  %v4704 = vunpack.c.l.b16 %v2870
  %v4705 = vunpack.c.l.b16 %v2871
  %v4706 = vunpack.c.l.b16 %v2872
  %v4707 = vpack.c.b16 %v4700, %v4699
  %v4708 = vpack.c.b16 %v4702, %v4701
  %v4709 = vpack.c.b16 %v4704, %v4703
  %v4710 = vpack.c.b16 %v4706, %v4705
  %v4716 = vsel %vm1388, %v4683, 0
  %v4719 = vsel %vm1388, %v4684, 0
  %4721 = vmatprep.subr.bf16.mxu0 0
  %4722 = vmatpush1.bf16.msra.mxu0 %v4707
  %4723 = vmatprep.subr.bf16.mxu0 0
  %4724 = vmatpush1.bf16.msra.mxu0 %v4708
  %4725 = vmatprep.subr.bf16.mxu0 0
  %4726 = vmatpush1.bf16.msra.mxu0 %v4709
  %4727 = vmatprep.subr.bf16.mxu0 0
  %4728 = vmatpush1.bf16.msra.mxu0 %v4710
  %4729 = vmatprep.subr.bf16.mxu0 0
  %4730 = vmatpush1.bf16.msra.mxu0 0
  %4731 = vmatprep.subr.bf16.mxu0 0
  %4732 = vmatpush1.bf16.msra.mxu0 0
  %4733 = vmatprep.subr.bf16.mxu0 0
  %4734 = vmatpush1.bf16.msra.mxu0 0
  %4735 = vmatprep.subr.bf16.mxu0 0
  %4736 = vmatpush1.bf16.msra.mxu0 0
  %4737 = vmatprep.subr.bf16.mxu0 0
  %4738 = vmatpush1.bf16.msra.mxu0 0
  %4739 = vmatprep.subr.bf16.mxu0 0
  %4740 = vmatpush1.bf16.msra.mxu0 0
  %4741 = vmatprep.subr.bf16.mxu0 0
  %4742 = vmatpush1.bf16.msra.mxu0 0
  %4743 = vmatprep.subr.bf16.mxu0 0
  %4744 = vmatpush1.bf16.msra.mxu0 0
  %4745 = vmatprep.subr.bf16.mxu0 0
  %4746 = vmatpush1.bf16.msra.mxu0 0
  %4747 = vmatprep.subr.bf16.mxu0 0
  %4748 = vmatpush1.bf16.msra.mxu0 0
  %4749 = vmatprep.subr.bf16.mxu0 0
  %4750 = vmatpush1.bf16.msra.mxu0 0
  %4751 = vmatprep.subr.bf16.mxu0 0
  %4752 = vmatpush1.bf16.msra.mxu0 0
  %4753 = vmatprep.mubr.bf16.mxu0 0
  %4754 = vmatmul.mubr.bf16.gmra.mrb[0].mxu0 %v4716
  %v4755 = vpop.f32.mrb[0].mxu0
  %v4756 = vadd.f32 %v4689, %v4755
  %v4757 = vpop.f32.mrb[0].mxu0
  %v4758 = vpop.f32.mrb[0].mxu0
  %v4759 = vadd.f32 %v4689, %v4758
  %v4760 = vpop.f32.mrb[0].mxu0
  %4761 = vmatprep.mubr.bf16.mxu0 0
  %4762 = vmatmul.mubr.bf16.gmra.mrb[0].mxu0 %v4719
  %v4763 = vpop.f32.mrb[0].mxu0
  %v4764 = vadd.f32 %v4689, %v4763
  %v4765 = vpop.f32.mrb[0].mxu0
  %v4766 = vpop.f32.mrb[0].mxu0
  %v4767 = vadd.f32 %v4689, %v4766
  %v4768 = vpop.f32.mrb[0].mxu0
  %4769 = vdwg.mxu0
  %v4770 = vadd.f32 %v4756, %v4532
  %v4771 = vadd.f32 %v4759, %v4533
  %v4772 = vadd.f32 %v4764, %v4534
  %v4773 = vadd.f32 %v4767, %v4535
  %s4774 = scalar_lea.vmem %s20, 32
  %4775 = vst.msk [vmem:[%s4774] sm:$0xff] %vm359, %v4770
  %4776 = vst.msk [vmem:[%s4774 + $0x8] sm:$0xff] %vm359, %v4771
  %4777 = vst.msk [vmem:[%s4774 + $0x10] sm:$0xff] %vm359, %v4772
  %4778 = vst.msk [vmem:[%s4774 + $0x18] sm:$0xff] %vm359, %v4773
  // Predicated region
  $region82: #{gnn_encoder_forward.1} parent=0 // pred_check
    _
  $region83: #{gnn_encoder_forward.1} parent=0 // pred_check_branch
    %4780 = sbr.rel (0) target = $region85
  $region84: #{gnn_encoder_forward.1} parent=0 // pred_region
    _
  $region85: #{gnn_encoder_forward.1} parent=0 // pred_fallthru
    _
  // Predicated region
  $region86: #{gnn_encoder_forward.1} parent=0 // pred_check
    _
  $region87: #{gnn_encoder_forward.1} parent=0 // pred_check_branch
    %4782 = sbr.rel (0) target = $region89
  $region88: #{gnn_encoder_forward.1} parent=0 // pred_region
    _
  $region89: #{gnn_encoder_forward.1} parent=0 // pred_fallthru
    _

</llo_original>
